<compile_context>
chip_gen: v6e
topology: v6e:2x2x1
jax: 0.10.0
libtpu: 0.0.40
codegen_flags: <defaults>
</compile_context>

<pallas_src>
import functools

import jax
import jax.numpy as jnp
from jax import lax
from jax.experimental import pallas as pl
from jax.experimental.pallas import tpu as pltpu

# ---- small synthetic BERT config ----
VOCAB = 128
HIDDEN = 32
HEADS = 4
HEAD_DIM = HIDDEN // HEADS
INTER = 64
LAYERS = 2
MAX_POS = 16
LN_EPS = 1e-12
NEG_INF = -1e9

# ---------------------------------------------------------------------------
# Packed-parameter layout (static, shared by init_params() and the kernels).
# ---------------------------------------------------------------------------
VEC_ROW = {"emb_ln_g": 0, "emb_ln_b": 1}
for _l in range(LAYERS):
    _b = 2 + _l * 8
    VEC_ROW.update({
        f"bqkv{_l}": _b, f"bo{_l}": _b + 1,
        f"ln1_g{_l}": _b + 2, f"ln1_b{_l}": _b + 3,
        f"b1{_l}": _b + 4, f"b2{_l}": _b + 5,
        f"ln2_g{_l}": _b + 6, f"ln2_b{_l}": _b + 7,
    })
VEC_ROW["cls_b"] = 2 + LAYERS * 8
N_VEC_ROWS = 2 + LAYERS * 8 + 1

LAYER_W_ROWS = 3 * HIDDEN + INTER                  # wqkv(32) + wo(32) + w1(32) + w2(64)
W_OFF = {"wqkv": 0, "wo": HIDDEN, "w1": 2 * HIDDEN, "w2": 3 * HIDDEN}
CLS_W_ROW = LAYERS * LAYER_W_ROWS
N_W_ROWS = CLS_W_ROW + HIDDEN


# ------------------------- in-kernel building blocks -------------------------

def _vec(vecs_ref, name, width):
    r = VEC_ROW[name]
    return vecs_ref[r:r + 1, 0:width]              # [1, width] f32


def _wmat(w_ref, layer, name, n_rows, n_cols):
    r = layer * LAYER_W_ROWS + W_OFF[name]
    return w_ref[r:r + n_rows, 0:n_cols]           # [n_rows, n_cols] bf16


def _layernorm(x, g, b):
    mu = jnp.mean(x, axis=-1, keepdims=True)
    var = jnp.mean(jnp.square(x - mu), axis=-1, keepdims=True)
    return (x - mu) * lax.rsqrt(var + LN_EPS) * g + b


def _dot(x_f32, w_bf16):
    """bf16-operand MXU matmul with f32 accumulation."""
    return jnp.dot(x_f32.astype(jnp.bfloat16), w_bf16, preferred_element_type=jnp.float32)


def _attention(qkv, neg_bias, seq):
    """Head-batched self-attention for one batch element.

    qkv      : [S, 3*HIDDEN] f32 (Q | K | V column blocks, head-major inside each block)
    neg_bias : [1, 1, S] additive key-mask bias, or None
    returns  : [S, HIDDEN] f32 context with heads re-merged (no concatenates).
    """
    # One 2-D transpose puts (head, dim) on the sublane axis; the row slices and the
    # [HIDDEN, S] -> [HEADS, HEAD_DIM, S] reshapes below are tile-aligned and free.
    qkvT = jnp.swapaxes(qkv, 0, 1)                                   # [3H, S]
    qT = qkvT[0:HIDDEN].reshape(HEADS, HEAD_DIM, seq)                # [H, Dh, S]
    kT = qkvT[HIDDEN:2 * HIDDEN].reshape(HEADS, HEAD_DIM, seq)
    vT = qkvT[2 * HIDDEN:3 * HIDDEN].reshape(HEADS, HEAD_DIM, seq)
    q = jnp.swapaxes(qT, 1, 2)                                       # [H, S, Dh]

    # Scores: single head-batched MXU stream (contract Dh), bf16 operands, f32 acc.
    s = lax.dot_general(q.astype(jnp.bfloat16), kT.astype(jnp.bfloat16),
                        (((2,), (1,)), ((0,), (0,))),
                        preferred_element_type=jnp.float32)          # [H, S, S]
    s = s * (1.0 / float(HEAD_DIM) ** 0.5)
    if neg_bias is not None:
        s = s + neg_bias                                             # broadcast over heads/queries
    s = s - jnp.max(s, axis=-1, keepdims=True)
    p = jnp.exp(s)
    p = p * pl.reciprocal(jnp.sum(p, axis=-1, keepdims=True), approx=True)

    # Context: second head-batched MXU stream (contract keys).
    ctx = lax.dot_general(p.astype(jnp.bfloat16), vT.astype(jnp.bfloat16),
                          (((2,), (2,)), ((0,), (0,))),
                          preferred_element_type=jnp.float32)        # [H, S, Dh]
    # Merge heads: [H,S,Dh] -> [H,Dh,S] -> [HIDDEN,S] (free) -> [S,HIDDEN].
    ctxT = jnp.swapaxes(ctx, 1, 2).reshape(HIDDEN, seq)
    return jnp.swapaxes(ctxT, 0, 1)


def _encoder_logits(emb, vecs_ref, w_ref, neg_bias, seq):
    """Embedding-LN, all encoder layers, classify head for one batch element."""
    h = _layernorm(emb, _vec(vecs_ref, "emb_ln_g", HIDDEN), _vec(vecs_ref, "emb_ln_b", HIDDEN))
    for l in range(LAYERS):
        # TODO(synk): switch to lax.fori_loop over dynamic layer slices once LAYERS grows.
        qkv = _dot(h, _wmat(w_ref, l, "wqkv", HIDDEN, 3 * HIDDEN)) + _vec(vecs_ref, f"bqkv{l}", 3 * HIDDEN)
        ctx = _attention(qkv, neg_bias, seq)
        attn = _dot(ctx, _wmat(w_ref, l, "wo", HIDDEN, HIDDEN)) + _vec(vecs_ref, f"bo{l}", HIDDEN)
        h1 = _layernorm(attn + h, _vec(vecs_ref, f"ln1_g{l}", HIDDEN), _vec(vecs_ref, f"ln1_b{l}", HIDDEN))
        ff = _dot(h1, _wmat(w_ref, l, "w1", HIDDEN, INTER)) + _vec(vecs_ref, f"b1{l}", INTER)
        # TODO(synk): HF BERT uses exact erf-GELU; tanh approximation kept for Mosaic-safe lowering.
        ff = jax.nn.gelu(ff, approximate=True)
        ff = _dot(ff, _wmat(w_ref, l, "w2", INTER, HIDDEN)) + _vec(vecs_ref, f"b2{l}", HIDDEN)
        h = _layernorm(ff + h1, _vec(vecs_ref, f"ln2_g{l}", HIDDEN), _vec(vecs_ref, f"ln2_b{l}", HIDDEN))
    return _dot(h, w_ref[CLS_W_ROW:CLS_W_ROW + HIDDEN, 0:VOCAB]) + _vec(vecs_ref, "cls_b", VOCAB)


# ------------------------- fused kernels (one grid step = one batch element) -------------------------

def _infer_kernel(emb_ref, vecs_ref, w_ref, probs_ref, *, seq):
    # Inference branch: bert(x) has no mask -> additive bias is identically 0, so it is dropped.
    logits = _encoder_logits(emb_ref[0].astype(jnp.float32), vecs_ref, w_ref, None, seq)
    z = logits - jnp.max(logits, axis=-1, keepdims=True)
    e = jnp.exp(z)
    probs = e * pl.reciprocal(jnp.sum(e, axis=-1, keepdims=True), approx=True)
    probs_ref[...] = probs.reshape(1, seq, VOCAB).astype(probs_ref.dtype)


def _train_kernel(*refs, seq, use_mask):
    if use_mask:
        emb_ref, mask_ref, labels_ref, vecs_ref, w_ref, sum_ref, cnt_ref = refs
        neg_bias = (1.0 - mask_ref[...]) * NEG_INF          # [1, 1, S], masks keys
    else:
        emb_ref, labels_ref, vecs_ref, w_ref, sum_ref, cnt_ref = refs
        neg_bias = None

    logits = _encoder_logits(emb_ref[0].astype(jnp.float32), vecs_ref, w_ref, neg_bias, seq)
    labels = labels_ref[0]                                  # [S, 1] int32
    m = jnp.max(logits, axis=-1, keepdims=True)
    lse = jnp.log(jnp.sum(jnp.exp(logits - m), axis=-1, keepdims=True)) + m
    col = lax.broadcasted_iota(jnp.int32, logits.shape, 1)
    picked = jnp.sum(jnp.where(col == labels, logits, 0.0), axis=-1, keepdims=True)
    valid = (labels != -1).astype(jnp.float32)

    @pl.when(pl.program_id(0) == 0)
    def _():
        sum_ref[...] = jnp.zeros_like(sum_ref)
        cnt_ref[...] = jnp.zeros_like(cnt_ref)

    sum_ref[...] += jnp.sum((lse - picked) * valid)
    cnt_ref[...] += jnp.sum(valid)


# ------------------------- wrapper (plain JAX glue) -------------------------

def qa_model_forward(params, x, y=None, mask=None):
    """Mirrors QAModel.forward: masked-LM mean loss if y is given, else softmax probs."""
    B, S = x.shape
    # Token-id embedding gather stays in XLA; kernel input is bf16 to halve its HBM stream.
    # TODO(synk): at production sizes move the gather in-kernel (prefetched ids + row DMA).
    emb = (params["word_emb"][x]
           + params["pos_emb"][:S][None, :, :]
           + params["type_emb"][0][None, None, :]).astype(jnp.bfloat16)        # [B, S, H]

    emb_spec = pl.BlockSpec((1, S, HIDDEN), lambda b: (b, 0, 0))
    vec_spec = pl.BlockSpec((N_VEC_ROWS, 128), lambda b: (0, 0))   # resident across grid
    w_spec = pl.BlockSpec((N_W_ROWS, 128), lambda b: (0, 0))       # resident across grid
    vecs, wslab = params["vec_slab"], params["w_slab"]
    cparams = lambda sem: pltpu.CompilerParams(dimension_semantics=(sem,),
                                               vmem_limit_bytes=32 * 1024 * 1024)

    if y is not None:
        use_mask = mask is not None
        labels = y.reshape(B, S, 1).astype(jnp.int32)
        inputs, in_specs = [emb], [emb_spec]
        if use_mask:
            # TODO(synk): only [B, S] padding masks are supported (not full [B, S, S] masks).
            inputs.append(mask.reshape(B, 1, S).astype(jnp.float32))
            in_specs.append(pl.BlockSpec((1, 1, S), lambda b: (b, 0, 0)))
        inputs += [labels, vecs, wslab]
        in_specs += [pl.BlockSpec((1, S, 1), lambda b: (b, 0, 0)), vec_spec, w_spec]

        loss_sum, count = pl.pallas_call(
            functools.partial(_train_kernel, seq=S, use_mask=use_mask),
            grid=(B,),
            in_specs=in_specs,
            out_specs=(pl.BlockSpec((1, 1), lambda b: (0, 0)),
                       pl.BlockSpec((1, 1), lambda b: (0, 0))),
            out_shape=(jax.ShapeDtypeStruct((1, 1), jnp.float32),
                       jax.ShapeDtypeStruct((1, 1), jnp.float32)),
            compiler_params=cparams("arbitrary"),   # loss accumulates across batch blocks
        )(*inputs)
        # NOTE: if every label is -1 this returns 0.0 (PyTorch CrossEntropyLoss returns NaN).
        return loss_sum[0, 0] / jnp.maximum(count[0, 0], 1.0)

    probs = pl.pallas_call(
        functools.partial(_infer_kernel, seq=S),
        grid=(B,),
        in_specs=[emb_spec, vec_spec, w_spec],
        out_specs=pl.BlockSpec((1, S, VOCAB), lambda b: (b, 0, 0)),
        out_shape=jax.ShapeDtypeStruct((B, S, VOCAB), jnp.float32),
        compiler_params=cparams("parallel"),        # batch blocks independent (v7x two TCs)
    )(emb, vecs, wslab)
    return probs


# ------------------------- synthetic parameter init -------------------------

def init_params(key):
    ks = iter(jax.random.split(key, 8 + 6 * LAYERS))

    def nrm(shape, scale=0.02):
        return jax.random.normal(next(ks), shape, jnp.float32) * scale

    # vec slab: all LayerNorm gammas/betas and biases, one row each (gammas=1, rest=0).
    vec = jnp.zeros((N_VEC_ROWS, 128), jnp.float32)
    gamma_rows = (["emb_ln_g"]
                  + [f"ln1_g{l}" for l in range(LAYERS)]
                  + [f"ln2_g{l}" for l in range(LAYERS)])
    for name in gamma_rows:
        vec = vec.at[VEC_ROW[name], :HIDDEN].set(1.0)

    # weight slab: every matmul weight stacked along rows, stored bf16.
    w = jnp.zeros((N_W_ROWS, 128), jnp.float32)
    for l in range(LAYERS):
        r = l * LAYER_W_ROWS
        w = w.at[r + W_OFF["wqkv"]: r + W_OFF["wqkv"] + HIDDEN, :3 * HIDDEN].set(nrm((HIDDEN, 3 * HIDDEN)))
        w = w.at[r + W_OFF["wo"]:   r + W_OFF["wo"] + HIDDEN, :HIDDEN].set(nrm((HIDDEN, HIDDEN)))
        w = w.at[r + W_OFF["w1"]:   r + W_OFF["w1"] + HIDDEN, :INTER].set(nrm((HIDDEN, INTER)))
        w = w.at[r + W_OFF["w2"]:   r + W_OFF["w2"] + INTER, :HIDDEN].set(nrm((INTER, HIDDEN)))
    w = w.at[CLS_W_ROW:CLS_W_ROW + HIDDEN, :VOCAB].set(nrm((HIDDEN, VOCAB)))

    return {
        "word_emb": nrm((VOCAB, HIDDEN)),
        "pos_emb": nrm((MAX_POS, HIDDEN)),
        "type_emb": nrm((2, HIDDEN)),
        "vec_slab": vec,
        "w_slab": w.astype(jnp.bfloat16),
    }


if __name__ == "__main__":
    key = jax.random.PRNGKey(0)
    pkey, xkey, ykey = jax.random.split(key, 3)
    params = init_params(pkey)

    B, S = 2, 8
    x = jax.random.randint(xkey, (B, S), 0, VOCAB, dtype=jnp.int32)
    y = jax.random.randint(ykey, (B, S), 0, VOCAB, dtype=jnp.int32)
    y = y.at[:, :2].set(-1)                 # some ignore_index=-1 positions
    mask = jnp.ones((B, S), jnp.int32)      # attention padding mask

    probs = qa_model_forward(params, x)                 # inference branch
    loss = qa_model_forward(params, x, y=y, mask=mask)  # training branch
    jax.block_until_ready((probs, loss))

    assert probs.shape == (B, S, VOCAB)
    assert bool(jnp.all(jnp.isfinite(probs))) and bool(jnp.isfinite(loss))
    print("KERNEL_OK")
</pallas_src>

<mosaic_0001>
module attributes {stable_mosaic.version = 11 : i64} {
  func.func @_infer_kernel(%arg0: i32, %arg1: memref<1x8x32xbf16, #tpu.memory_space<vmem>>, %arg2: memref<19x128xf32, #tpu.memory_space<vmem>>, %arg3: memref<352x128xbf16, #tpu.memory_space<vmem>>, %arg4: memref<1x8x128xf32, #tpu.memory_space<vmem>>) attributes {dimension_semantics = [#tpu.dimension_semantics<parallel>], iteration_bounds = array<i64: 2>, scalar_prefetch = 0 : i64, scratch_operands = 0 : i64, tpu.core_type = #tpu.core_type<tc>, window_params = [{transform_indices = @transform_0, window_bounds = array<i64: 1, 8, 32>}, {pipeline_mode = #tpu.pipeline_mode<synchronous>, transform_indices = @transform_1, window_bounds = array<i64: 19, 128>}, {pipeline_mode = #tpu.pipeline_mode<synchronous>, transform_indices = @transform_2, window_bounds = array<i64: 352, 128>}, {transform_indices = @transform_3, window_bounds = array<i64: 1, 8, 128>}]} {
    %c0 = arith.constant 0 : index
    %c0_0 = arith.constant 0 : index
    %c0_1 = arith.constant 0 : index
    %0 = vector.load %arg1[%c0, %c0_0, %c0_1] : memref<1x8x32xbf16, #tpu.memory_space<vmem>>, vector<1x8x32xbf16>
    %1 = vector.shape_cast %0 : vector<1x8x32xbf16> to vector<8x32xbf16>
    %2 = arith.extf %1 : vector<8x32xbf16> to vector<8x32xf32>
    %c0_2 = arith.constant 0 : index
    %c0_3 = arith.constant 0 : index
    %3 = vector.load %arg2[%c0_2, %c0_3] : memref<19x128xf32, #tpu.memory_space<vmem>>, vector<1x32xf32>
    %c1 = arith.constant 1 : index
    %c0_4 = arith.constant 0 : index
    %4 = vector.load %arg2[%c1, %c0_4] : memref<19x128xf32, #tpu.memory_space<vmem>>, vector<1x32xf32>
    %cst = arith.constant dense<0.000000e+00> : vector<8xf32>
    %5 = vector.multi_reduction <add>, %2, %cst [1] : vector<8x32xf32> to vector<8xf32>
    %6 = vector.shape_cast %5 : vector<8xf32> to vector<8x1xf32>
    %cst_5 = arith.constant 3.200000e+01 : f32
    %7 = vector.broadcast %cst_5 : f32 to vector<8x1xf32>
    %8 = arith.divf %6, %7 : vector<8x1xf32>
    %9 = vector.broadcast %8 : vector<8x1xf32> to vector<8x32xf32>
    %10 = arith.subf %2, %9 : vector<8x32xf32>
    %11 = arith.mulf %10, %10 : vector<8x32xf32>
    %cst_6 = arith.constant dense<0.000000e+00> : vector<8xf32>
    %12 = vector.multi_reduction <add>, %11, %cst_6 [1] : vector<8x32xf32> to vector<8xf32>
    %13 = vector.shape_cast %12 : vector<8xf32> to vector<8x1xf32>
    %cst_7 = arith.constant 3.200000e+01 : f32
    %14 = vector.broadcast %cst_7 : f32 to vector<8x1xf32>
    %15 = arith.divf %13, %14 : vector<8x1xf32>
    %16 = vector.broadcast %8 : vector<8x1xf32> to vector<8x32xf32>
    %17 = arith.subf %2, %16 : vector<8x32xf32>
    %cst_8 = arith.constant 9.99999996E-13 : f32
    %18 = vector.broadcast %cst_8 : f32 to vector<8x1xf32>
    %19 = arith.addf %15, %18 : vector<8x1xf32>
    %20 = math.rsqrt %19 : vector<8x1xf32>
    %21 = vector.broadcast %20 : vector<8x1xf32> to vector<8x32xf32>
    %22 = arith.mulf %17, %21 : vector<8x32xf32>
    %23 = vector.broadcast %3 : vector<1x32xf32> to vector<8x32xf32>
    %24 = arith.mulf %22, %23 : vector<8x32xf32>
    %25 = vector.broadcast %4 : vector<1x32xf32> to vector<8x32xf32>
    %26 = arith.addf %24, %25 : vector<8x32xf32>
    %c0_9 = arith.constant 0 : index
    %c0_10 = arith.constant 0 : index
    %27 = vector.load %arg3[%c0_9, %c0_10] : memref<352x128xbf16, #tpu.memory_space<vmem>>, vector<32x96xbf16>
    %28 = arith.truncf %26 : vector<8x32xf32> to vector<8x32xbf16>
    %cst_11 = arith.constant dense<0.000000e+00> : vector<8x96xf32>
    %29 = tpu.matmul %28, %27, %cst_11 {dimension_numbers = #tpu.dot_dimension_numbers<[1], [0], [0], [1], [0, 0, 1, 1], [], []>} : vector<8x32xbf16>, vector<32x96xbf16>, vector<8x96xf32> -> vector<8x96xf32>
    %c2 = arith.constant 2 : index
    %c0_12 = arith.constant 0 : index
    %30 = vector.load %arg2[%c2, %c0_12] : memref<19x128xf32, #tpu.memory_space<vmem>>, vector<1x96xf32>
    %31 = vector.broadcast %30 : vector<1x96xf32> to vector<8x96xf32>
    %32 = arith.addf %29, %31 : vector<8x96xf32>
    %33 = tpu.transpose %32, [1, 0] : vector<8x96xf32> -> vector<96x8xf32>
    %34 = vector.extract_strided_slice %33 {offsets = [0, 0], sizes = [32, 8], strides = [1, 1]} : vector<96x8xf32> to vector<32x8xf32>
    %35 = vector.shape_cast %34 : vector<32x8xf32> to vector<4x8x8xf32>
    %36 = vector.extract_strided_slice %33 {offsets = [32, 0], sizes = [32, 8], strides = [1, 1]} : vector<96x8xf32> to vector<32x8xf32>
    %37 = vector.shape_cast %36 : vector<32x8xf32> to vector<4x8x8xf32>
    %38 = vector.extract_strided_slice %33 {offsets = [64, 0], sizes = [32, 8], strides = [1, 1]} : vector<96x8xf32> to vector<32x8xf32>
    %39 = vector.shape_cast %38 : vector<32x8xf32> to vector<4x8x8xf32>
    %40 = tpu.transpose %35, [0, 2, 1] : vector<4x8x8xf32> -> vector<4x8x8xf32>
    %41 = arith.truncf %40 : vector<4x8x8xf32> to vector<4x8x8xbf16>
    %42 = arith.truncf %37 : vector<4x8x8xf32> to vector<4x8x8xbf16>
    %cst_13 = arith.constant dense<0.000000e+00> : vector<4x8x8xf32>
    %43 = tpu.matmul %41, %42, %cst_13 {dimension_numbers = #tpu.dot_dimension_numbers<[2], [1], [1], [2], [0, 0, 0, 1, 1, 2], [0], [0]>} : vector<4x8x8xbf16>, vector<4x8x8xbf16>, vector<4x8x8xf32> -> vector<4x8x8xf32>
    %cst_14 = arith.constant 0.353553385 : f32
    %44 = vector.broadcast %cst_14 : f32 to vector<4x8x8xf32>
    %45 = arith.mulf %43, %44 : vector<4x8x8xf32>
    %cst_15 = arith.constant dense<0xFF800000> : vector<4x8xf32>
    %46 = vector.multi_reduction <maximumf>, %45, %cst_15 [2] : vector<4x8x8xf32> to vector<4x8xf32>
    %47 = vector.shape_cast %46 : vector<4x8xf32> to vector<4x8x1xf32>
    %48 = vector.broadcast %47 : vector<4x8x1xf32> to vector<4x8x8xf32>
    %49 = arith.subf %45, %48 : vector<4x8x8xf32>
    %50 = math.exp %49 : vector<4x8x8xf32>
    %cst_16 = arith.constant dense<0.000000e+00> : vector<4x8xf32>
    %51 = vector.multi_reduction <add>, %50, %cst_16 [2] : vector<4x8x8xf32> to vector<4x8xf32>
    %52 = vector.shape_cast %51 : vector<4x8xf32> to vector<4x8x1xf32>
    %53 = tpu.reciprocal %52 {approx = true} : vector<4x8x1xf32> -> vector<4x8x1xf32>
    %54 = vector.broadcast %53 : vector<4x8x1xf32> to vector<4x8x8xf32>
    %55 = arith.mulf %50, %54 : vector<4x8x8xf32>
    %56 = arith.truncf %55 : vector<4x8x8xf32> to vector<4x8x8xbf16>
    %57 = arith.truncf %39 : vector<4x8x8xf32> to vector<4x8x8xbf16>
    %cst_17 = arith.constant dense<0.000000e+00> : vector<4x8x8xf32>
    %58 = tpu.matmul %56, %57, %cst_17 {dimension_numbers = #tpu.dot_dimension_numbers<[2], [2], [1], [1], [0, 0, 0, 1, 1, 1], [0], [0]>} : vector<4x8x8xbf16>, vector<4x8x8xbf16>, vector<4x8x8xf32> -> vector<4x8x8xf32>
    %59 = tpu.transpose %58, [0, 2, 1] : vector<4x8x8xf32> -> vector<4x8x8xf32>
    %60 = vector.shape_cast %59 : vector<4x8x8xf32> to vector<32x8xf32>
    %61 = tpu.transpose %60, [1, 0] : vector<32x8xf32> -> vector<8x32xf32>
    %c32 = arith.constant 32 : index
    %c0_18 = arith.constant 0 : index
    %62 = vector.load %arg3[%c32, %c0_18] : memref<352x128xbf16, #tpu.memory_space<vmem>>, vector<32x32xbf16>
    %63 = arith.truncf %61 : vector<8x32xf32> to vector<8x32xbf16>
    %cst_19 = arith.constant dense<0.000000e+00> : vector<8x32xf32>
    %64 = tpu.matmul %63, %62, %cst_19 {dimension_numbers = #tpu.dot_dimension_numbers<[1], [0], [0], [1], [0, 0, 1, 1], [], []>} : vector<8x32xbf16>, vector<32x32xbf16>, vector<8x32xf32> -> vector<8x32xf32>
    %c3 = arith.constant 3 : index
    %c0_20 = arith.constant 0 : index
    %65 = vector.load %arg2[%c3, %c0_20] : memref<19x128xf32, #tpu.memory_space<vmem>>, vector<1x32xf32>
    %66 = vector.broadcast %65 : vector<1x32xf32> to vector<8x32xf32>
    %67 = arith.addf %64, %66 : vector<8x32xf32>
    %68 = arith.addf %67, %26 : vector<8x32xf32>
    %c4 = arith.constant 4 : index
    %c0_21 = arith.constant 0 : index
    %69 = vector.load %arg2[%c4, %c0_21] : memref<19x128xf32, #tpu.memory_space<vmem>>, vector<1x32xf32>
    %c5 = arith.constant 5 : index
    %c0_22 = arith.constant 0 : index
    %70 = vector.load %arg2[%c5, %c0_22] : memref<19x128xf32, #tpu.memory_space<vmem>>, vector<1x32xf32>
    %cst_23 = arith.constant dense<0.000000e+00> : vector<8xf32>
    %71 = vector.multi_reduction <add>, %68, %cst_23 [1] : vector<8x32xf32> to vector<8xf32>
    %72 = vector.shape_cast %71 : vector<8xf32> to vector<8x1xf32>
    %cst_24 = arith.constant 3.200000e+01 : f32
    %73 = vector.broadcast %cst_24 : f32 to vector<8x1xf32>
    %74 = arith.divf %72, %73 : vector<8x1xf32>
    %75 = vector.broadcast %74 : vector<8x1xf32> to vector<8x32xf32>
    %76 = arith.subf %68, %75 : vector<8x32xf32>
    %77 = arith.mulf %76, %76 : vector<8x32xf32>
    %cst_25 = arith.constant dense<0.000000e+00> : vector<8xf32>
    %78 = vector.multi_reduction <add>, %77, %cst_25 [1] : vector<8x32xf32> to vector<8xf32>
    %79 = vector.shape_cast %78 : vector<8xf32> to vector<8x1xf32>
    %cst_26 = arith.constant 3.200000e+01 : f32
    %80 = vector.broadcast %cst_26 : f32 to vector<8x1xf32>
    %81 = arith.divf %79, %80 : vector<8x1xf32>
    %82 = vector.broadcast %74 : vector<8x1xf32> to vector<8x32xf32>
    %83 = arith.subf %68, %82 : vector<8x32xf32>
    %cst_27 = arith.constant 9.99999996E-13 : f32
    %84 = vector.broadcast %cst_27 : f32 to vector<8x1xf32>
    %85 = arith.addf %81, %84 : vector<8x1xf32>
    %86 = math.rsqrt %85 : vector<8x1xf32>
    %87 = vector.broadcast %86 : vector<8x1xf32> to vector<8x32xf32>
    %88 = arith.mulf %83, %87 : vector<8x32xf32>
    %89 = vector.broadcast %69 : vector<1x32xf32> to vector<8x32xf32>
    %90 = arith.mulf %88, %89 : vector<8x32xf32>
    %91 = vector.broadcast %70 : vector<1x32xf32> to vector<8x32xf32>
    %92 = arith.addf %90, %91 : vector<8x32xf32>
    %c64 = arith.constant 64 : index
    %c0_28 = arith.constant 0 : index
    %93 = vector.load %arg3[%c64, %c0_28] : memref<352x128xbf16, #tpu.memory_space<vmem>>, vector<32x64xbf16>
    %94 = arith.truncf %92 : vector<8x32xf32> to vector<8x32xbf16>
    %cst_29 = arith.constant dense<0.000000e+00> : vector<8x64xf32>
    %95 = tpu.matmul %94, %93, %cst_29 {dimension_numbers = #tpu.dot_dimension_numbers<[1], [0], [0], [1], [0, 0, 1, 1], [], []>} : vector<8x32xbf16>, vector<32x64xbf16>, vector<8x64xf32> -> vector<8x64xf32>
    %c6 = arith.constant 6 : index
    %c0_30 = arith.constant 0 : index
    %96 = vector.load %arg2[%c6, %c0_30] : memref<19x128xf32, #tpu.memory_space<vmem>>, vector<1x64xf32>
    %97 = vector.broadcast %96 : vector<1x64xf32> to vector<8x64xf32>
    %98 = arith.addf %95, %97 : vector<8x64xf32>
    %99 = arith.mulf %98, %98 : vector<8x64xf32>
    %100 = arith.mulf %98, %99 : vector<8x64xf32>
    %cst_31 = arith.constant 4.471500e-02 : f32
    %101 = vector.broadcast %cst_31 : f32 to vector<8x64xf32>
    %102 = arith.mulf %101, %100 : vector<8x64xf32>
    %103 = arith.addf %98, %102 : vector<8x64xf32>
    %cst_32 = arith.constant 0.797884583 : f32
    %104 = vector.broadcast %cst_32 : f32 to vector<8x64xf32>
    %105 = arith.mulf %104, %103 : vector<8x64xf32>
    %106 = math.tanh %105 : vector<8x64xf32>
    %cst_33 = arith.constant 1.000000e+00 : f32
    %107 = vector.broadcast %cst_33 : f32 to vector<8x64xf32>
    %108 = arith.addf %107, %106 : vector<8x64xf32>
    %cst_34 = arith.constant 5.000000e-01 : f32
    %109 = vector.broadcast %cst_34 : f32 to vector<8x64xf32>
    %110 = arith.mulf %109, %108 : vector<8x64xf32>
    %111 = arith.mulf %98, %110 : vector<8x64xf32>
    %c96 = arith.constant 96 : index
    %c0_35 = arith.constant 0 : index
    %112 = vector.load %arg3[%c96, %c0_35] : memref<352x128xbf16, #tpu.memory_space<vmem>>, vector<64x32xbf16>
    %113 = arith.truncf %111 : vector<8x64xf32> to vector<8x64xbf16>
    %cst_36 = arith.constant dense<0.000000e+00> : vector<8x32xf32>
    %114 = tpu.matmul %113, %112, %cst_36 {dimension_numbers = #tpu.dot_dimension_numbers<[1], [0], [0], [1], [0, 0, 1, 1], [], []>} : vector<8x64xbf16>, vector<64x32xbf16>, vector<8x32xf32> -> vector<8x32xf32>
    %c7 = arith.constant 7 : index
    %c0_37 = arith.constant 0 : index
    %115 = vector.load %arg2[%c7, %c0_37] : memref<19x128xf32, #tpu.memory_space<vmem>>, vector<1x32xf32>
    %116 = vector.broadcast %115 : vector<1x32xf32> to vector<8x32xf32>
    %117 = arith.addf %114, %116 : vector<8x32xf32>
    %118 = arith.addf %117, %92 : vector<8x32xf32>
    %c8 = arith.constant 8 : index
    %c0_38 = arith.constant 0 : index
    %119 = vector.load %arg2[%c8, %c0_38] : memref<19x128xf32, #tpu.memory_space<vmem>>, vector<1x32xf32>
    %c9 = arith.constant 9 : index
    %c0_39 = arith.constant 0 : index
    %120 = vector.load %arg2[%c9, %c0_39] : memref<19x128xf32, #tpu.memory_space<vmem>>, vector<1x32xf32>
    %cst_40 = arith.constant dense<0.000000e+00> : vector<8xf32>
    %121 = vector.multi_reduction <add>, %118, %cst_40 [1] : vector<8x32xf32> to vector<8xf32>
    %122 = vector.shape_cast %121 : vector<8xf32> to vector<8x1xf32>
    %cst_41 = arith.constant 3.200000e+01 : f32
    %123 = vector.broadcast %cst_41 : f32 to vector<8x1xf32>
    %124 = arith.divf %122, %123 : vector<8x1xf32>
    %125 = vector.broadcast %124 : vector<8x1xf32> to vector<8x32xf32>
    %126 = arith.subf %118, %125 : vector<8x32xf32>
    %127 = arith.mulf %126, %126 : vector<8x32xf32>
    %cst_42 = arith.constant dense<0.000000e+00> : vector<8xf32>
    %128 = vector.multi_reduction <add>, %127, %cst_42 [1] : vector<8x32xf32> to vector<8xf32>
    %129 = vector.shape_cast %128 : vector<8xf32> to vector<8x1xf32>
    %cst_43 = arith.constant 3.200000e+01 : f32
    %130 = vector.broadcast %cst_43 : f32 to vector<8x1xf32>
    %131 = arith.divf %129, %130 : vector<8x1xf32>
    %132 = vector.broadcast %124 : vector<8x1xf32> to vector<8x32xf32>
    %133 = arith.subf %118, %132 : vector<8x32xf32>
    %cst_44 = arith.constant 9.99999996E-13 : f32
    %134 = vector.broadcast %cst_44 : f32 to vector<8x1xf32>
    %135 = arith.addf %131, %134 : vector<8x1xf32>
    %136 = math.rsqrt %135 : vector<8x1xf32>
    %137 = vector.broadcast %136 : vector<8x1xf32> to vector<8x32xf32>
    %138 = arith.mulf %133, %137 : vector<8x32xf32>
    %139 = vector.broadcast %119 : vector<1x32xf32> to vector<8x32xf32>
    %140 = arith.mulf %138, %139 : vector<8x32xf32>
    %141 = vector.broadcast %120 : vector<1x32xf32> to vector<8x32xf32>
    %142 = arith.addf %140, %141 : vector<8x32xf32>
    %c160 = arith.constant 160 : index
    %c0_45 = arith.constant 0 : index
    %143 = vector.load %arg3[%c160, %c0_45] : memref<352x128xbf16, #tpu.memory_space<vmem>>, vector<32x96xbf16>
    %144 = arith.truncf %142 : vector<8x32xf32> to vector<8x32xbf16>
    %cst_46 = arith.constant dense<0.000000e+00> : vector<8x96xf32>
    %145 = tpu.matmul %144, %143, %cst_46 {dimension_numbers = #tpu.dot_dimension_numbers<[1], [0], [0], [1], [0, 0, 1, 1], [], []>} : vector<8x32xbf16>, vector<32x96xbf16>, vector<8x96xf32> -> vector<8x96xf32>
    %c10 = arith.constant 10 : index
    %c0_47 = arith.constant 0 : index
    %146 = vector.load %arg2[%c10, %c0_47] : memref<19x128xf32, #tpu.memory_space<vmem>>, vector<1x96xf32>
    %147 = vector.broadcast %146 : vector<1x96xf32> to vector<8x96xf32>
    %148 = arith.addf %145, %147 : vector<8x96xf32>
    %149 = tpu.transpose %148, [1, 0] : vector<8x96xf32> -> vector<96x8xf32>
    %150 = vector.extract_strided_slice %149 {offsets = [0, 0], sizes = [32, 8], strides = [1, 1]} : vector<96x8xf32> to vector<32x8xf32>
    %151 = vector.shape_cast %150 : vector<32x8xf32> to vector<4x8x8xf32>
    %152 = vector.extract_strided_slice %149 {offsets = [32, 0], sizes = [32, 8], strides = [1, 1]} : vector<96x8xf32> to vector<32x8xf32>
    %153 = vector.shape_cast %152 : vector<32x8xf32> to vector<4x8x8xf32>
    %154 = vector.extract_strided_slice %149 {offsets = [64, 0], sizes = [32, 8], strides = [1, 1]} : vector<96x8xf32> to vector<32x8xf32>
    %155 = vector.shape_cast %154 : vector<32x8xf32> to vector<4x8x8xf32>
    %156 = tpu.transpose %151, [0, 2, 1] : vector<4x8x8xf32> -> vector<4x8x8xf32>
    %157 = arith.truncf %156 : vector<4x8x8xf32> to vector<4x8x8xbf16>
    %158 = arith.truncf %153 : vector<4x8x8xf32> to vector<4x8x8xbf16>
    %cst_48 = arith.constant dense<0.000000e+00> : vector<4x8x8xf32>
    %159 = tpu.matmul %157, %158, %cst_48 {dimension_numbers = #tpu.dot_dimension_numbers<[2], [1], [1], [2], [0, 0, 0, 1, 1, 2], [0], [0]>} : vector<4x8x8xbf16>, vector<4x8x8xbf16>, vector<4x8x8xf32> -> vector<4x8x8xf32>
    %cst_49 = arith.constant 0.353553385 : f32
    %160 = vector.broadcast %cst_49 : f32 to vector<4x8x8xf32>
    %161 = arith.mulf %159, %160 : vector<4x8x8xf32>
    %cst_50 = arith.constant dense<0xFF800000> : vector<4x8xf32>
    %162 = vector.multi_reduction <maximumf>, %161, %cst_50 [2] : vector<4x8x8xf32> to vector<4x8xf32>
    %163 = vector.shape_cast %162 : vector<4x8xf32> to vector<4x8x1xf32>
    %164 = vector.broadcast %163 : vector<4x8x1xf32> to vector<4x8x8xf32>
    %165 = arith.subf %161, %164 : vector<4x8x8xf32>
    %166 = math.exp %165 : vector<4x8x8xf32>
    %cst_51 = arith.constant dense<0.000000e+00> : vector<4x8xf32>
    %167 = vector.multi_reduction <add>, %166, %cst_51 [2] : vector<4x8x8xf32> to vector<4x8xf32>
    %168 = vector.shape_cast %167 : vector<4x8xf32> to vector<4x8x1xf32>
    %169 = tpu.reciprocal %168 {approx = true} : vector<4x8x1xf32> -> vector<4x8x1xf32>
    %170 = vector.broadcast %169 : vector<4x8x1xf32> to vector<4x8x8xf32>
    %171 = arith.mulf %166, %170 : vector<4x8x8xf32>
    %172 = arith.truncf %171 : vector<4x8x8xf32> to vector<4x8x8xbf16>
    %173 = arith.truncf %155 : vector<4x8x8xf32> to vector<4x8x8xbf16>
    %cst_52 = arith.constant dense<0.000000e+00> : vector<4x8x8xf32>
    %174 = tpu.matmul %172, %173, %cst_52 {dimension_numbers = #tpu.dot_dimension_numbers<[2], [2], [1], [1], [0, 0, 0, 1, 1, 1], [0], [0]>} : vector<4x8x8xbf16>, vector<4x8x8xbf16>, vector<4x8x8xf32> -> vector<4x8x8xf32>
    %175 = tpu.transpose %174, [0, 2, 1] : vector<4x8x8xf32> -> vector<4x8x8xf32>
    %176 = vector.shape_cast %175 : vector<4x8x8xf32> to vector<32x8xf32>
    %177 = tpu.transpose %176, [1, 0] : vector<32x8xf32> -> vector<8x32xf32>
    %c192 = arith.constant 192 : index
    %c0_53 = arith.constant 0 : index
    %178 = vector.load %arg3[%c192, %c0_53] : memref<352x128xbf16, #tpu.memory_space<vmem>>, vector<32x32xbf16>
    %179 = arith.truncf %177 : vector<8x32xf32> to vector<8x32xbf16>
    %cst_54 = arith.constant dense<0.000000e+00> : vector<8x32xf32>
    %180 = tpu.matmul %179, %178, %cst_54 {dimension_numbers = #tpu.dot_dimension_numbers<[1], [0], [0], [1], [0, 0, 1, 1], [], []>} : vector<8x32xbf16>, vector<32x32xbf16>, vector<8x32xf32> -> vector<8x32xf32>
    %c11 = arith.constant 11 : index
    %c0_55 = arith.constant 0 : index
    %181 = vector.load %arg2[%c11, %c0_55] : memref<19x128xf32, #tpu.memory_space<vmem>>, vector<1x32xf32>
    %182 = vector.broadcast %181 : vector<1x32xf32> to vector<8x32xf32>
    %183 = arith.addf %180, %182 : vector<8x32xf32>
    %184 = arith.addf %183, %142 : vector<8x32xf32>
    %c12 = arith.constant 12 : index
    %c0_56 = arith.constant 0 : index
    %185 = vector.load %arg2[%c12, %c0_56] : memref<19x128xf32, #tpu.memory_space<vmem>>, vector<1x32xf32>
    %c13 = arith.constant 13 : index
    %c0_57 = arith.constant 0 : index
    %186 = vector.load %arg2[%c13, %c0_57] : memref<19x128xf32, #tpu.memory_space<vmem>>, vector<1x32xf32>
    %cst_58 = arith.constant dense<0.000000e+00> : vector<8xf32>
    %187 = vector.multi_reduction <add>, %184, %cst_58 [1] : vector<8x32xf32> to vector<8xf32>
    %188 = vector.shape_cast %187 : vector<8xf32> to vector<8x1xf32>
    %cst_59 = arith.constant 3.200000e+01 : f32
    %189 = vector.broadcast %cst_59 : f32 to vector<8x1xf32>
    %190 = arith.divf %188, %189 : vector<8x1xf32>
    %191 = vector.broadcast %190 : vector<8x1xf32> to vector<8x32xf32>
    %192 = arith.subf %184, %191 : vector<8x32xf32>
    %193 = arith.mulf %192, %192 : vector<8x32xf32>
    %cst_60 = arith.constant dense<0.000000e+00> : vector<8xf32>
    %194 = vector.multi_reduction <add>, %193, %cst_60 [1] : vector<8x32xf32> to vector<8xf32>
    %195 = vector.shape_cast %194 : vector<8xf32> to vector<8x1xf32>
    %cst_61 = arith.constant 3.200000e+01 : f32
    %196 = vector.broadcast %cst_61 : f32 to vector<8x1xf32>
    %197 = arith.divf %195, %196 : vector<8x1xf32>
    %198 = vector.broadcast %190 : vector<8x1xf32> to vector<8x32xf32>
    %199 = arith.subf %184, %198 : vector<8x32xf32>
    %cst_62 = arith.constant 9.99999996E-13 : f32
    %200 = vector.broadcast %cst_62 : f32 to vector<8x1xf32>
    %201 = arith.addf %197, %200 : vector<8x1xf32>
    %202 = math.rsqrt %201 : vector<8x1xf32>
    %203 = vector.broadcast %202 : vector<8x1xf32> to vector<8x32xf32>
    %204 = arith.mulf %199, %203 : vector<8x32xf32>
    %205 = vector.broadcast %185 : vector<1x32xf32> to vector<8x32xf32>
    %206 = arith.mulf %204, %205 : vector<8x32xf32>
    %207 = vector.broadcast %186 : vector<1x32xf32> to vector<8x32xf32>
    %208 = arith.addf %206, %207 : vector<8x32xf32>
    %c224 = arith.constant 224 : index
    %c0_63 = arith.constant 0 : index
    %209 = vector.load %arg3[%c224, %c0_63] : memref<352x128xbf16, #tpu.memory_space<vmem>>, vector<32x64xbf16>
    %210 = arith.truncf %208 : vector<8x32xf32> to vector<8x32xbf16>
    %cst_64 = arith.constant dense<0.000000e+00> : vector<8x64xf32>
    %211 = tpu.matmul %210, %209, %cst_64 {dimension_numbers = #tpu.dot_dimension_numbers<[1], [0], [0], [1], [0, 0, 1, 1], [], []>} : vector<8x32xbf16>, vector<32x64xbf16>, vector<8x64xf32> -> vector<8x64xf32>
    %c14 = arith.constant 14 : index
    %c0_65 = arith.constant 0 : index
    %212 = vector.load %arg2[%c14, %c0_65] : memref<19x128xf32, #tpu.memory_space<vmem>>, vector<1x64xf32>
    %213 = vector.broadcast %212 : vector<1x64xf32> to vector<8x64xf32>
    %214 = arith.addf %211, %213 : vector<8x64xf32>
    %215 = arith.mulf %214, %214 : vector<8x64xf32>
    %216 = arith.mulf %214, %215 : vector<8x64xf32>
    %cst_66 = arith.constant 4.471500e-02 : f32
    %217 = vector.broadcast %cst_66 : f32 to vector<8x64xf32>
    %218 = arith.mulf %217, %216 : vector<8x64xf32>
    %219 = arith.addf %214, %218 : vector<8x64xf32>
    %cst_67 = arith.constant 0.797884583 : f32
    %220 = vector.broadcast %cst_67 : f32 to vector<8x64xf32>
    %221 = arith.mulf %220, %219 : vector<8x64xf32>
    %222 = math.tanh %221 : vector<8x64xf32>
    %cst_68 = arith.constant 1.000000e+00 : f32
    %223 = vector.broadcast %cst_68 : f32 to vector<8x64xf32>
    %224 = arith.addf %223, %222 : vector<8x64xf32>
    %cst_69 = arith.constant 5.000000e-01 : f32
    %225 = vector.broadcast %cst_69 : f32 to vector<8x64xf32>
    %226 = arith.mulf %225, %224 : vector<8x64xf32>
    %227 = arith.mulf %214, %226 : vector<8x64xf32>
    %c256 = arith.constant 256 : index
    %c0_70 = arith.constant 0 : index
    %228 = vector.load %arg3[%c256, %c0_70] : memref<352x128xbf16, #tpu.memory_space<vmem>>, vector<64x32xbf16>
    %229 = arith.truncf %227 : vector<8x64xf32> to vector<8x64xbf16>
    %cst_71 = arith.constant dense<0.000000e+00> : vector<8x32xf32>
    %230 = tpu.matmul %229, %228, %cst_71 {dimension_numbers = #tpu.dot_dimension_numbers<[1], [0], [0], [1], [0, 0, 1, 1], [], []>} : vector<8x64xbf16>, vector<64x32xbf16>, vector<8x32xf32> -> vector<8x32xf32>
    %c15 = arith.constant 15 : index
    %c0_72 = arith.constant 0 : index
    %231 = vector.load %arg2[%c15, %c0_72] : memref<19x128xf32, #tpu.memory_space<vmem>>, vector<1x32xf32>
    %232 = vector.broadcast %231 : vector<1x32xf32> to vector<8x32xf32>
    %233 = arith.addf %230, %232 : vector<8x32xf32>
    %234 = arith.addf %233, %208 : vector<8x32xf32>
    %c16 = arith.constant 16 : index
    %c0_73 = arith.constant 0 : index
    %235 = vector.load %arg2[%c16, %c0_73] : memref<19x128xf32, #tpu.memory_space<vmem>>, vector<1x32xf32>
    %c17 = arith.constant 17 : index
    %c0_74 = arith.constant 0 : index
    %236 = vector.load %arg2[%c17, %c0_74] : memref<19x128xf32, #tpu.memory_space<vmem>>, vector<1x32xf32>
    %cst_75 = arith.constant dense<0.000000e+00> : vector<8xf32>
    %237 = vector.multi_reduction <add>, %234, %cst_75 [1] : vector<8x32xf32> to vector<8xf32>
    %238 = vector.shape_cast %237 : vector<8xf32> to vector<8x1xf32>
    %cst_76 = arith.constant 3.200000e+01 : f32
    %239 = vector.broadcast %cst_76 : f32 to vector<8x1xf32>
    %240 = arith.divf %238, %239 : vector<8x1xf32>
    %241 = vector.broadcast %240 : vector<8x1xf32> to vector<8x32xf32>
    %242 = arith.subf %234, %241 : vector<8x32xf32>
    %243 = arith.mulf %242, %242 : vector<8x32xf32>
    %cst_77 = arith.constant dense<0.000000e+00> : vector<8xf32>
    %244 = vector.multi_reduction <add>, %243, %cst_77 [1] : vector<8x32xf32> to vector<8xf32>
    %245 = vector.shape_cast %244 : vector<8xf32> to vector<8x1xf32>
    %cst_78 = arith.constant 3.200000e+01 : f32
    %246 = vector.broadcast %cst_78 : f32 to vector<8x1xf32>
    %247 = arith.divf %245, %246 : vector<8x1xf32>
    %248 = vector.broadcast %240 : vector<8x1xf32> to vector<8x32xf32>
    %249 = arith.subf %234, %248 : vector<8x32xf32>
    %cst_79 = arith.constant 9.99999996E-13 : f32
    %250 = vector.broadcast %cst_79 : f32 to vector<8x1xf32>
    %251 = arith.addf %247, %250 : vector<8x1xf32>
    %252 = math.rsqrt %251 : vector<8x1xf32>
    %253 = vector.broadcast %252 : vector<8x1xf32> to vector<8x32xf32>
    %254 = arith.mulf %249, %253 : vector<8x32xf32>
    %255 = vector.broadcast %235 : vector<1x32xf32> to vector<8x32xf32>
    %256 = arith.mulf %254, %255 : vector<8x32xf32>
    %257 = vector.broadcast %236 : vector<1x32xf32> to vector<8x32xf32>
    %258 = arith.addf %256, %257 : vector<8x32xf32>
    %c320 = arith.constant 320 : index
    %c0_80 = arith.constant 0 : index
    %259 = vector.load %arg3[%c320, %c0_80] : memref<352x128xbf16, #tpu.memory_space<vmem>>, vector<32x128xbf16>
    %260 = arith.truncf %258 : vector<8x32xf32> to vector<8x32xbf16>
    %cst_81 = arith.constant dense<0.000000e+00> : vector<8x128xf32>
    %261 = tpu.matmul %260, %259, %cst_81 {dimension_numbers = #tpu.dot_dimension_numbers<[1], [0], [0], [1], [0, 0, 1, 1], [], []>} : vector<8x32xbf16>, vector<32x128xbf16>, vector<8x128xf32> -> vector<8x128xf32>
    %c18 = arith.constant 18 : index
    %c0_82 = arith.constant 0 : index
    %262 = vector.load %arg2[%c18, %c0_82] : memref<19x128xf32, #tpu.memory_space<vmem>>, vector<1x128xf32>
    %263 = vector.broadcast %262 : vector<1x128xf32> to vector<8x128xf32>
    %264 = arith.addf %261, %263 : vector<8x128xf32>
    %cst_83 = arith.constant dense<0xFF800000> : vector<8xf32>
    %265 = vector.multi_reduction <maximumf>, %264, %cst_83 [1] : vector<8x128xf32> to vector<8xf32>
    %266 = vector.shape_cast %265 : vector<8xf32> to vector<8x1xf32>
    %267 = vector.broadcast %266 : vector<8x1xf32> to vector<8x128xf32>
    %268 = arith.subf %264, %267 : vector<8x128xf32>
    %269 = math.exp %268 : vector<8x128xf32>
    %cst_84 = arith.constant dense<0.000000e+00> : vector<8xf32>
    %270 = vector.multi_reduction <add>, %269, %cst_84 [1] : vector<8x128xf32> to vector<8xf32>
    %271 = vector.shape_cast %270 : vector<8xf32> to vector<8x1xf32>
    %272 = tpu.reciprocal %271 {approx = true} : vector<8x1xf32> -> vector<8x1xf32>
    %273 = vector.broadcast %272 : vector<8x1xf32> to vector<8x128xf32>
    %274 = arith.mulf %269, %273 : vector<8x128xf32>
    %275 = vector.shape_cast %274 : vector<8x128xf32> to vector<1x8x128xf32>
    %c0_85 = arith.constant 0 : index
    %c0_86 = arith.constant 0 : index
    %c0_87 = arith.constant 0 : index
    %276 = vector.load %arg4[%c0_85, %c0_86, %c0_87] : memref<1x8x128xf32, #tpu.memory_space<vmem>>, vector<1x8x128xf32>
    tpu.vector_store %arg4[%c0_85, %c0_86, %c0_87], %275 {strides = array<i32>} : memref<1x8x128xf32, #tpu.memory_space<vmem>>, vector<1x8x128xf32>,
    return
  }
  func.func @transform_0(%arg0: i32) -> (i32, i32, i32) {
    %c0_i32 = arith.constant 0 : i32
    %c0_i32_0 = arith.constant 0 : i32
    %c0_i32_1 = arith.constant 0 : i32
    return %arg0, %c0_i32, %c0_i32_0 : i32, i32, i32
  }
  func.func @transform_1(%arg0: i32) -> (i32, i32) {
    %c0_i32 = arith.constant 0 : i32
    %c0_i32_0 = arith.constant 0 : i32
    %c0_i32_1 = arith.constant 0 : i32
    return %c0_i32, %c0_i32_0 : i32, i32
  }
  func.func @transform_2(%arg0: i32) -> (i32, i32) {
    %c0_i32 = arith.constant 0 : i32
    %c0_i32_0 = arith.constant 0 : i32
    %c0_i32_1 = arith.constant 0 : i32
    return %c0_i32, %c0_i32_0 : i32, i32
  }
  func.func @transform_3(%arg0: i32) -> (i32, i32, i32) {
    %c0_i32 = arith.constant 0 : i32
    %c0_i32_0 = arith.constant 0 : i32
    %c0_i32_1 = arith.constant 0 : i32
    return %arg0, %c0_i32, %c0_i32_0 : i32, i32, i32
  }
}

</mosaic_0001>

<llo_original>
// kernel: tpu_custom_call.1
$region0: #{tpu_custom_call.1}
  #allocation0 [shape = 'u32[]', space=smem, size = 0x4, offset = 0x4, fixed_abs, tag = 'smem constant byte address 0x4 - core index']
  #allocation1 [shape = 'u32[144,128]{1,0:T(1,128)}', space=vmem, size = 0x12000, scoped, tag = 'internal scratch']
  %s0 = inlined_call_operand.hbm [shape: bf16[2,8,32], index: 0, kind: input, shape index: {}]
  %s1 = inlined_call_operand.hbm [shape: f32[19,128], index: 1, kind: input, shape index: {}]
  %s2 = inlined_call_operand.hbm [shape: bf16[352,128], index: 2, kind: input, shape index: {}]
  %s3 = inlined_call_operand.hbm [shape: f32[2,8,128], index: 3, kind: output, shape index: {}]
  %s4 = sld [smem:[#allocation0]]
  $region57: #{tpu_custom_call.1} parent=0
    _
  %s6 = ssub.s32 1, %s4
  %s7 = scalar_select 0, %s6, %s4
  $region1: #{tpu_custom_call.1} parent=0
    #allocation2 [shape = 'u8[4096]{0}', space=vmem, size = 0x1000, scoped, tag = 'input window, operand 0']
    #allocation3 [shape = 's32[2]{0}', space=sflag, size = 0x8, scoped, tag = 'scoped memory for tpu_custom_call.1']
    #allocation4 [shape = 's32[2]{0}', space=sflag, size = 0x8, scoped, tag = 'scoped memory for tpu_custom_call.1']
    #allocation5 [shape = 'u8[12288]{0}', space=vmem, size = 0x3000, scoped, tag = 'input window, operand 1, single buffered']
    #allocation6 [shape = 's32[1]{0}', space=sflag, size = 0x4, scoped, tag = 'scoped memory for tpu_custom_call.1']
    #allocation7 [shape = 'u8[90112]{0}', space=vmem, size = 0x16000, scoped, tag = 'input window, operand 2, single buffered']
    #allocation8 [shape = 'u8[8192]{0}', space=vmem, size = 0x2000, scoped, tag = 'output window, operand 0']
    %8 = vsyncpa [#allocation3], 0
    %s9 = scalar_lea.sflag [#allocation3], 1
    %10 = vsyncpa %s9, 0
    %11 = vsyncpa [#allocation6], 0
    %12 = vsyncpa [#allocation4], 0
    %s13 = scalar_lea.sflag [#allocation4], 1
    %14 = vsyncpa %s13, 0
    loop: start=0, step=1, limit=4
    $region2: #{tpu_custom_call.1} parent=1 // loop_pre_header
      _
    $region3: #{tpu_custom_call.1} parent=1 // loop_header
      %s16 = sphi 0, %s20
      %p17 = scmp.ge.s32.totalorder %s16, 4
      %s26 = sphi 0, %s28
      %s29 = sphi 0, %s26
      %s30 = sphi 0, %s29
      %s46 = sphi 0, %s30
      %s50 = sphi 0, %s50
      %s52 = sphi 0, %s50
      %s53 = sphi 0, %s52
      %s67 = sphi 0, %s53
      %s71 = sphi 0, %s71
      %s73 = sphi 0, %s71
      %s74 = sphi 0, %s73
      %s88 = sphi 0, %s74
      %s94 = sphi 0, %s96
      %s97 = sphi 0, %s94
      %s98 = sphi 0, %s97
      %s114 = sphi 0, %s98
    $region4: #{tpu_custom_call.1} parent=1 // loop_header_branch
      %19 = sbr.rel (%p17) target = $region8
    $region5: #{tpu_custom_call.1} parent=1 // loop_body
      %s21 = ssub.s32 %s16, 1
      %s22 = ssub.s32 %s16, 2
      %s23 = sadd.s32 %s16, 1
      %s24 = ssub.s32 %s16, %s23
      %p25 = scmp.eq.s32.totalorder %s24, 0
      %s27 = sadd.s32 %s26, 1
      %s28 = scalar_select %p25, %s26, %s27
      %p31 = pneg %p25
      %p32 = scmp.eq.s32.totalorder %s16, 1
      %p33 = por %p31, %p32
      %p34 = scmp.ne.s32.totalorder %s26, %s29
      %p35 = scmp.eq.s32.totalorder %s16, 0
      %p36 = por %p34, %p35
      %p37 = scmp.ne.s32.totalorder %s26, %s29
      %p38 = scmp.eq.s32.totalorder %s21, 1
      %p39 = por %p37, %p38
      %p40 = scmp.ne.s32.totalorder %s29, %s30
      %p41 = scmp.eq.s32.totalorder %s21, 0
      %p42 = por %p40, %p41
      %p43 = scmp.ne.s32.totalorder %s29, %s30
      %p44 = scmp.eq.s32.totalorder %s22, 1
      %p45 = por %p43, %p44
      %p47 = scmp.ne.s32.totalorder %s30, %s46
      %p48 = scmp.eq.s32.totalorder %s22, 0
      %p49 = por %p47, %p48
      %s51 = sadd.s32 %s50, 1
      %p54 = scmp.eq.s32.totalorder %s16, 1
      %p55 = scmp.ne.s32.totalorder %s50, %s52
      %p56 = scmp.eq.s32.totalorder %s16, 0
      %p57 = por %p55, %p56
      %p58 = scmp.ne.s32.totalorder %s50, %s52
      %p59 = scmp.eq.s32.totalorder %s21, 1
      %p60 = por %p58, %p59
      %p61 = scmp.ne.s32.totalorder %s52, %s53
      %p62 = scmp.eq.s32.totalorder %s21, 0
      %p63 = por %p61, %p62
      %p64 = scmp.ne.s32.totalorder %s52, %s53
      %p65 = scmp.eq.s32.totalorder %s22, 1
      %p66 = por %p64, %p65
      %p68 = scmp.ne.s32.totalorder %s53, %s67
      %p69 = scmp.eq.s32.totalorder %s22, 0
      %p70 = por %p68, %p69
      %s72 = sadd.s32 %s71, 1
      %p75 = scmp.eq.s32.totalorder %s16, 1
      %p76 = scmp.ne.s32.totalorder %s71, %s73
      %p77 = scmp.eq.s32.totalorder %s16, 0
      %p78 = por %p76, %p77
      %p79 = scmp.ne.s32.totalorder %s71, %s73
      %p80 = scmp.eq.s32.totalorder %s21, 1
      %p81 = por %p79, %p80
      %p82 = scmp.ne.s32.totalorder %s73, %s74
      %p83 = scmp.eq.s32.totalorder %s21, 0
      %p84 = por %p82, %p83
      %p85 = scmp.ne.s32.totalorder %s73, %s74
      %p86 = scmp.eq.s32.totalorder %s22, 1
      %p87 = por %p85, %p86
      %p89 = scmp.ne.s32.totalorder %s74, %s88
      %p90 = scmp.eq.s32.totalorder %s22, 0
      %p91 = por %p89, %p90
      %s92 = ssub.s32 %s16, %s23
      %p93 = scmp.eq.s32.totalorder %s92, 0
      %s95 = sadd.s32 %s94, 1
      %s96 = scalar_select %p93, %s94, %s95
      %p99 = pneg %p93
      %p100 = scmp.eq.s32.totalorder %s16, 1
      %p101 = por %p99, %p100
      %p102 = scmp.ne.s32.totalorder %s94, %s97
      %p103 = scmp.eq.s32.totalorder %s16, 0
      %p104 = por %p102, %p103
      %p105 = scmp.ne.s32.totalorder %s94, %s97
      %p106 = scmp.eq.s32.totalorder %s21, 1
      %p107 = por %p105, %p106
      %p108 = scmp.ne.s32.totalorder %s97, %s98
      %p109 = scmp.eq.s32.totalorder %s21, 0
      %p110 = por %p108, %p109
      %p111 = scmp.ne.s32.totalorder %s97, %s98
      %p112 = scmp.eq.s32.totalorder %s22, 1
      %p113 = por %p111, %p112
      %p115 = scmp.ne.s32.totalorder %s98, %s114
      %p116 = scmp.eq.s32.totalorder %s22, 0
      %p117 = por %p115, %p116
      %p118 = scmp.le.s32.totalorder 1, %s16
      %p119 = scmp.lt.s32.totalorder %s16, 3
      %p120 = pnand %p118, %p119
      %p121 = pneg %p120
      // Predicated region
      $region9: #{tpu_custom_call.1} parent=5 // pred_check
        _
      $region10: #{tpu_custom_call.1} parent=5 // pred_check_branch
        %123 = sbr.rel (%p120) target = $region12
      $region11: #{tpu_custom_call.1} parent=5 // pred_region
        %s124 = ssub.s32 %s16, 1
        // Predicated region
        $region13: #{tpu_custom_call.1} parent=11 // pred_check
          %p125 = pneg %p63
        $region14: #{tpu_custom_call.1} parent=11 // pred_check_branch
          %127 = sbr.rel (%p125) target = $region16
        $region15: #{tpu_custom_call.1} parent=11 // pred_region
          %s129 = ssub.s32 384, 384
          %130 = vsyncadd [#allocation6], %s129
          %s131 = sshll.u32 [#allocation5], 4
          %s132 = int_to_ptr.vmem [resolvable:$true] %s131
          %137 = dma.hbm_to_vmem [thread:$0]  %s1, 384, %s132, [#allocation6], 128, 128, 8
        $region16: #{tpu_custom_call.1} parent=11 // pred_fallthru
          _
        // Predicated region
        $region17: #{tpu_custom_call.1} parent=11 // pred_check
          %p138 = pneg %p84
        $region18: #{tpu_custom_call.1} parent=11 // pred_check_branch
          %140 = sbr.rel (%p138) target = $region20
        $region19: #{tpu_custom_call.1} parent=11 // pred_region
          %s142 = ssub.s32 2816, 2816
          %143 = vsyncadd [#allocation6], %s142
          %s144 = sshll.u32 [#allocation7], 4
          %s145 = int_to_ptr.vmem [resolvable:$true] %s144
          %150 = dma.hbm_to_vmem [thread:$0]  %s2, 2816, %s145, [#allocation6], 64, 64, 4
        $region20: #{tpu_custom_call.1} parent=11 // pred_fallthru
          _
      $region12: #{tpu_custom_call.1} parent=5 // pred_fallthru
        _
      %p151 = scmp.lt.s32.totalorder %s16, 2
      // Predicated region
      $region21: #{tpu_custom_call.1} parent=5 // pred_check
        %p152 = pneg %p151
      $region22: #{tpu_custom_call.1} parent=5 // pred_check_branch
        %154 = sbr.rel (%p152) target = $region24
      $region23: #{tpu_custom_call.1} parent=5 // pred_region
        // Predicated region
        $region25: #{tpu_custom_call.1} parent=23 // pred_check
          %p155 = pneg %p36
        $region26: #{tpu_custom_call.1} parent=23 // pred_check_branch
          %157 = sbr.rel (%p155) target = $region28
        $region27: #{tpu_custom_call.1} parent=23 // pred_region
          %s158 = sand.u32 %s26, 1
          %s159 = scalar_lea.sflag [#allocation3], %s158
          %s160 = sand.u32 %s26, 1
          %s161 = smul.addr %s160, 4
          %s162 = scalar_lea.vmem [#allocation2], %s161
          %s164 = ssub.s32 64, 64
          %165 = vsyncadd %s159, %s164
          %s166 = smul.addr %s16, 64
          %s167 = scalar_lea.hbm %s0, %s166
          %s169 = sshll.u32 %s162, 4
          %s170 = int_to_ptr.vmem [resolvable:$true] %s169
          %172 = dma.hbm_to_vmem [thread:$0]  %s167, 64, %s170, %s159
        $region28: #{tpu_custom_call.1} parent=23 // pred_fallthru
          _
      $region24: #{tpu_custom_call.1} parent=5 // pred_fallthru
        _
      %p173 = scmp.le.s32.totalorder 1, %s16
      %p174 = scmp.lt.s32.totalorder %s16, 3
      %p175 = pnand %p173, %p174
      %p176 = pneg %p175
      // Predicated region
      $region29: #{tpu_custom_call.1} parent=5 // pred_check
        _
      $region30: #{tpu_custom_call.1} parent=5 // pred_check_branch
        %178 = sbr.rel (%p175) target = $region32
      $region31: #{tpu_custom_call.1} parent=5 // pred_region
        %s179 = ssub.s32 %s16, 1
        %s180 = sand.u32 %s29, 1
        %s181 = scalar_lea.sflag [#allocation3], %s180
        %s182 = sand.u32 %s29, 1
        %s183 = smul.addr %s182, 4
        %s184 = scalar_lea.vmem [#allocation2], %s183
        // Predicated region
        $region33: #{tpu_custom_call.1} parent=31 // pred_check
          %p185 = pneg %p42
        $region34: #{tpu_custom_call.1} parent=31 // pred_check_branch
          %187 = sbr.rel (%p185) target = $region36
        $region35: #{tpu_custom_call.1} parent=31 // pred_region
          %188 = dma.done %s181, 64
        $region36: #{tpu_custom_call.1} parent=31 // pred_fallthru
          _
        // Predicated region
        $region37: #{tpu_custom_call.1} parent=31 // pred_check
          %p189 = pneg %p63
        $region38: #{tpu_custom_call.1} parent=31 // pred_check_branch
          %191 = sbr.rel (%p189) target = $region40
        $region39: #{tpu_custom_call.1} parent=31 // pred_region
          %192 = dma.done [#allocation6], 384
        $region40: #{tpu_custom_call.1} parent=31 // pred_fallthru
          _
        // Predicated region
        $region41: #{tpu_custom_call.1} parent=31 // pred_check
          %p193 = pneg %p84
        $region42: #{tpu_custom_call.1} parent=31 // pred_check_branch
          %195 = sbr.rel (%p193) target = $region44
        $region43: #{tpu_custom_call.1} parent=31 // pred_region
          %196 = dma.done [#allocation6], 2816
        $region44: #{tpu_custom_call.1} parent=31 // pred_fallthru
          _
        %s197 = sand.u32 %s29, 1
        %s198 = scalar_lea.sflag [#allocation3], %s197
        %s199 = sand.u32 %s29, 1
        %s200 = smul.addr %s199, 4
        %s201 = scalar_lea.vmem [#allocation2], %s200
        %p202 = pneg %p42
        %p203 = pneg %p39
        %p204 = pneg %p63
        %p205 = pneg %p60
        %p206 = pneg %p84
        %p207 = pneg %p81
        %p208 = pneg %p110
        %p209 = pneg %p107
        %s210 = sand.u32 %s97, 1
        %s211 = scalar_lea.sflag [#allocation4], %s210
        %s212 = sand.u32 %s97, 1
        %s213 = smul.addr %s212, 8
        %s214 = scalar_lea.vmem [#allocation8], %s213
        %v216 = vld [vmem:[%s184] sm:$0xf]
        %v217 = vunpack.c.l.bf16 %v216
        %v218 = vld [vmem:[#allocation5] sm:$0x1]
        %v219 = vld [vmem:[#allocation5 + $0x1] sm:$0x1]
        %vm220 = vcmask 261120
        %v221 = vsel %vm220, %v217, 0.0
        %222 = vadd.xlane.f32.xlu0 %v221
        %v223 = vpop.xlane.xlu0 %222
        %v224 = vrcp.pop 32.0
        %v225 = vmul.f32 %v223, %v224
        %v226 = vsub.f32 %v217, %v225
        %v227 = vmul.f32 %v226, %v226
        %v228 = vsel %vm220, %v227, 0.0
        %229 = vadd.xlane.f32.xlu0 %v228
        %v230 = vpop.xlane.xlu0 %229
        %v231 = vmul.f32 %v230, %v224
        %v232 = vadd.f32 %v231, 1e-12
        %v233 = vrsqrt.pop %v232
        %v234 = vmul.f32 %v226, %v233
        %v235 = vlaneseq
        %v236 = vshrl.u32 %v235, 7
        %v237 = vsub.s32 0, %v236
        %v238 = vrot.slane %v218, %v237
        %v239 = vmul.f32 %v234, %v238
        %v240 = vlaneseq
        %v241 = vshrl.u32 %v240, 7
        %v242 = vsub.s32 0, %v241
        %v243 = vrot.slane %v219, %v242
        %v244 = vadd.f32 %v239, %v243
        %v245 = vld [vmem:[#allocation7] sm:$0xf]
        %v246 = vld [vmem:[#allocation7 + $0x4] sm:$0xf]
        %v247 = vld [vmem:[#allocation7 + $0x8] sm:$0xf]
        %v248 = vld [vmem:[#allocation7 + $0xc] sm:$0xf]
        %v249 = vpack.c.bf16 %v244, %v244
        %v250 = vld [vmem:[#allocation5 + $0x2] sm:$0x1]
        %v251 = vlaneseq
        %v252 = vshrl.u32 %v251, 7
        %v253 = vsub.s32 0, %v252
        %v254 = vrot.slane %v250, %v253
        %v259 = vunpack.c.l.b16 %v245
        %v260 = vunpack.c.l.b16 %v246
        %v261 = vunpack.c.l.b16 %v247
        %v262 = vunpack.c.l.b16 %v248
        %v263 = vpack.c.b16 %v260, %v259
        %v264 = vpack.c.b16 %v262, %v261
        %v268 = vsel %vm220, %v249, 0
        %270 = vmatprep.subr.bf16.mxu0 0
        %271 = vmatpush1.bf16.msra.mxu0 0
        %272 = vmatprep.subr.bf16.mxu0 0
        %273 = vmatpush1.bf16.msra.mxu0 0
        %274 = vmatprep.subr.bf16.mxu0 0
        %275 = vmatpush1.bf16.msra.mxu0 0
        %276 = vmatprep.subr.bf16.mxu0 0
        %277 = vmatpush1.bf16.msra.mxu0 0
        %278 = vmatprep.subr.bf16.mxu0 0
        %279 = vmatpush1.bf16.msra.mxu0 0
        %280 = vmatprep.subr.bf16.mxu0 0
        %281 = vmatpush1.bf16.msra.mxu0 0
        %282 = vmatprep.subr.bf16.mxu0 0
        %283 = vmatpush1.bf16.msra.mxu0 %v264
        %284 = vmatprep.subr.bf16.mxu0 0
        %285 = vmatpush1.bf16.msra.mxu0 %v263
        %286 = vmatprep.subr.bf16.mxu0 0
        %287 = vmatpush2.bf16.msra.mxu0 0
        %288 = vmatprep.subr.bf16.mxu0 0
        %289 = vmatpush2.bf16.msra.mxu0 0
        %290 = vmatprep.subr.bf16.mxu0 0
        %291 = vmatpush2.bf16.msra.mxu0 0
        %292 = vmatprep.subr.bf16.mxu0 0
        %293 = vmatpush2.bf16.msra.mxu0 0
        %294 = vmatprep.subr.bf16.mxu0 0
        %295 = vmatpush2.bf16.msra.mxu0 0
        %296 = vmatprep.subr.bf16.mxu0 0
        %297 = vmatpush2.bf16.msra.mxu0 0
        %298 = vmatprep.subr.bf16.mxu0 0
        %299 = vmatpush2.bf16.msra.mxu0 0
        %300 = vmatprep.subr.bf16.mxu0 0
        %301 = vmatpush2.bf16.msra.mxu0 0
        %302 = vmatprep.mubr.bf16.mxu0 0
        %303 = vmatmul.mubr.bf16.gmra.mxu0 %v268
        %v304 = vpop.f32.mrf.mxu0
        %v305 = vadd.f32 %v254, %v304
        %v306 = vpop.f32.mrf.mxu0
        %v307 = vpop.f32.mrf.mxu0
        %v308 = vpop.f32.mrf.mxu0
        %309 = vdwg.mxu0
        %310 = vxpose.xlu0.b32.start [1/16] %v305, 128
        %311 = vxpose.xlu0.b32.cont [2/16] 0.0, 128
        %312 = vxpose.xlu0.b32.cont [3/16] 0.0, 128
        %313 = vxpose.xlu0.b32.cont [4/16] 0.0, 128
        %314 = vxpose.xlu0.b32.cont [5/16] 0.0, 128
        %315 = vxpose.xlu0.b32.cont [6/16] 0.0, 128
        %316 = vxpose.xlu0.b32.cont [7/16] 0.0, 128
        %317 = vxpose.xlu0.b32.cont [8/16] 0.0, 128
        %318 = vxpose.xlu0.b32.cont [9/16] 0.0, 128
        %319 = vxpose.xlu0.b32.cont [10/16] 0.0, 128
        %320 = vxpose.xlu0.b32.cont [11/16] 0.0, 128
        %321 = vxpose.xlu0.b32.cont [12/16] 0.0, 128
        %322 = vxpose.xlu0.b32.cont [13/16] 0.0, 128
        %323 = vxpose.xlu0.b32.cont [14/16] 0.0, 128
        %324 = vxpose.xlu0.b32.cont [15/16] 0.0, 128
        %325 = vxpose.xlu0.b32.end [16/16] 0.0, 128
        %v326 = vpop.trf.xlu0
        %v327 = vpop.trf.xlu0
        %v328 = vpop.trf.xlu0
        %v329 = vpop.trf.xlu0
        %v330 = vpop.trf.xlu0
        %v331 = vpop.trf.xlu0
        %v332 = vpop.trf.xlu0
        %v333 = vpop.trf.xlu0
        %v334 = vpop.trf.xlu0
        %v335 = vpop.trf.xlu0
        %v336 = vpop.trf.xlu0
        %v337 = vpop.trf.xlu0
        %v338 = vpop.trf.xlu0
        %v339 = vpop.trf.xlu0
        %v340 = vpop.trf.xlu0
        %v341 = vpop.trf.xlu0
        %342 = vxpose.xlu0.b32.start [1/16] %v326, 128
        %343 = vxpose.xlu0.b32.cont [2/16] 0.0, 128
        %344 = vxpose.xlu0.b32.cont [3/16] 0.0, 128
        %345 = vxpose.xlu0.b32.cont [4/16] 0.0, 128
        %346 = vxpose.xlu0.b32.cont [5/16] 0.0, 128
        %347 = vxpose.xlu0.b32.cont [6/16] 0.0, 128
        %348 = vxpose.xlu0.b32.cont [7/16] 0.0, 128
        %349 = vxpose.xlu0.b32.cont [8/16] 0.0, 128
        %350 = vxpose.xlu0.b32.cont [9/16] 0.0, 128
        %351 = vxpose.xlu0.b32.cont [10/16] 0.0, 128
        %352 = vxpose.xlu0.b32.cont [11/16] 0.0, 128
        %353 = vxpose.xlu0.b32.cont [12/16] 0.0, 128
        %354 = vxpose.xlu0.b32.cont [13/16] 0.0, 128
        %355 = vxpose.xlu0.b32.cont [14/16] 0.0, 128
        %356 = vxpose.xlu0.b32.cont [15/16] 0.0, 128
        %357 = vxpose.xlu0.b32.end [16/16] 0.0, 128
        %v358 = vpop.trf.xlu0
        %v359 = vpop.trf.xlu0
        %v360 = vpop.trf.xlu0
        %v361 = vpop.trf.xlu0
        %v362 = vpop.trf.xlu0
        %v363 = vpop.trf.xlu0
        %v364 = vpop.trf.xlu0
        %v365 = vpop.trf.xlu0
        %v366 = vpop.trf.xlu0
        %v367 = vpop.trf.xlu0
        %v368 = vpop.trf.xlu0
        %v369 = vpop.trf.xlu0
        %v370 = vpop.trf.xlu0
        %v371 = vpop.trf.xlu0
        %v372 = vpop.trf.xlu0
        %v373 = vpop.trf.xlu0
        %374 = vxpose.xlu0.b32.start [1/16] %v327, 128
        %375 = vxpose.xlu0.b32.cont [2/16] 0.0, 128
        %376 = vxpose.xlu0.b32.cont [3/16] 0.0, 128
        %377 = vxpose.xlu0.b32.cont [4/16] 0.0, 128
        %378 = vxpose.xlu0.b32.cont [5/16] 0.0, 128
        %379 = vxpose.xlu0.b32.cont [6/16] 0.0, 128
        %380 = vxpose.xlu0.b32.cont [7/16] 0.0, 128
        %381 = vxpose.xlu0.b32.cont [8/16] 0.0, 128
        %382 = vxpose.xlu0.b32.cont [9/16] 0.0, 128
        %383 = vxpose.xlu0.b32.cont [10/16] 0.0, 128
        %384 = vxpose.xlu0.b32.cont [11/16] 0.0, 128
        %385 = vxpose.xlu0.b32.cont [12/16] 0.0, 128
        %386 = vxpose.xlu0.b32.cont [13/16] 0.0, 128
        %387 = vxpose.xlu0.b32.cont [14/16] 0.0, 128
        %388 = vxpose.xlu0.b32.cont [15/16] 0.0, 128
        %389 = vxpose.xlu0.b32.end [16/16] 0.0, 128
        %v390 = vpop.trf.xlu0
        %v391 = vpop.trf.xlu0
        %v392 = vpop.trf.xlu0
        %v393 = vpop.trf.xlu0
        %v394 = vpop.trf.xlu0
        %v395 = vpop.trf.xlu0
        %v396 = vpop.trf.xlu0
        %v397 = vpop.trf.xlu0
        %v398 = vpop.trf.xlu0
        %v399 = vpop.trf.xlu0
        %v400 = vpop.trf.xlu0
        %v401 = vpop.trf.xlu0
        %v402 = vpop.trf.xlu0
        %v403 = vpop.trf.xlu0
        %v404 = vpop.trf.xlu0
        %v405 = vpop.trf.xlu0
        %406 = vxpose.xlu0.b32.start [1/16] %v328, 128
        %407 = vxpose.xlu0.b32.cont [2/16] 0.0, 128
        %408 = vxpose.xlu0.b32.cont [3/16] 0.0, 128
        %409 = vxpose.xlu0.b32.cont [4/16] 0.0, 128
        %410 = vxpose.xlu0.b32.cont [5/16] 0.0, 128
        %411 = vxpose.xlu0.b32.cont [6/16] 0.0, 128
        %412 = vxpose.xlu0.b32.cont [7/16] 0.0, 128
        %413 = vxpose.xlu0.b32.cont [8/16] 0.0, 128
        %414 = vxpose.xlu0.b32.cont [9/16] 0.0, 128
        %415 = vxpose.xlu0.b32.cont [10/16] 0.0, 128
        %416 = vxpose.xlu0.b32.cont [11/16] 0.0, 128
        %417 = vxpose.xlu0.b32.cont [12/16] 0.0, 128
        %418 = vxpose.xlu0.b32.cont [13/16] 0.0, 128
        %419 = vxpose.xlu0.b32.cont [14/16] 0.0, 128
        %420 = vxpose.xlu0.b32.cont [15/16] 0.0, 128
        %421 = vxpose.xlu0.b32.end [16/16] 0.0, 128
        %v422 = vpop.trf.xlu0
        %v423 = vpop.trf.xlu0
        %v424 = vpop.trf.xlu0
        %v425 = vpop.trf.xlu0
        %v426 = vpop.trf.xlu0
        %v427 = vpop.trf.xlu0
        %v428 = vpop.trf.xlu0
        %v429 = vpop.trf.xlu0
        %v430 = vpop.trf.xlu0
        %v431 = vpop.trf.xlu0
        %v432 = vpop.trf.xlu0
        %v433 = vpop.trf.xlu0
        %v434 = vpop.trf.xlu0
        %v435 = vpop.trf.xlu0
        %v436 = vpop.trf.xlu0
        %v437 = vpop.trf.xlu0
        %438 = vxpose.xlu0.b32.start [1/16] %v329, 128
        %439 = vxpose.xlu0.b32.cont [2/16] 0.0, 128
        %440 = vxpose.xlu0.b32.cont [3/16] 0.0, 128
        %441 = vxpose.xlu0.b32.cont [4/16] 0.0, 128
        %442 = vxpose.xlu0.b32.cont [5/16] 0.0, 128
        %443 = vxpose.xlu0.b32.cont [6/16] 0.0, 128
        %444 = vxpose.xlu0.b32.cont [7/16] 0.0, 128
        %445 = vxpose.xlu0.b32.cont [8/16] 0.0, 128
        %446 = vxpose.xlu0.b32.cont [9/16] 0.0, 128
        %447 = vxpose.xlu0.b32.cont [10/16] 0.0, 128
        %448 = vxpose.xlu0.b32.cont [11/16] 0.0, 128
        %449 = vxpose.xlu0.b32.cont [12/16] 0.0, 128
        %450 = vxpose.xlu0.b32.cont [13/16] 0.0, 128
        %451 = vxpose.xlu0.b32.cont [14/16] 0.0, 128
        %452 = vxpose.xlu0.b32.cont [15/16] 0.0, 128
        %453 = vxpose.xlu0.b32.end [16/16] 0.0, 128
        %v454 = vpop.trf.xlu0
        %v455 = vpop.trf.xlu0
        %v456 = vpop.trf.xlu0
        %v457 = vpop.trf.xlu0
        %v458 = vpop.trf.xlu0
        %v459 = vpop.trf.xlu0
        %v460 = vpop.trf.xlu0
        %v461 = vpop.trf.xlu0
        %v462 = vpop.trf.xlu0
        %v463 = vpop.trf.xlu0
        %v464 = vpop.trf.xlu0
        %v465 = vpop.trf.xlu0
        %v466 = vpop.trf.xlu0
        %v467 = vpop.trf.xlu0
        %v468 = vpop.trf.xlu0
        %v469 = vpop.trf.xlu0
        %v470 = vpack.c.bf16 %v358, %v358
        %v471 = vpack.c.bf16 %v390, %v390
        %v472 = vpack.c.bf16 %v422, %v422
        %v473 = vpack.c.bf16 %v454, %v454
        %v474 = vpack.c.bf16 %v330, %v330
        %v475 = vpack.c.bf16 %v331, %v331
        %v476 = vpack.c.bf16 %v332, %v332
        %v477 = vpack.c.bf16 %v333, %v333
        %vm478 = vcmask 64512
        %v480 = vsel %vm478, %v470, 0
        %vm482 = vcmask 1043456
        %v484 = vsel %vm482, %v474, 0
        %486 = vmatprep.subr.bf16.mxu0 0
        %487 = vmatpush1.bf16.msra.mxu0 0
        %488 = vmatprep.subr.bf16.mxu0 0
        %489 = vmatpush1.bf16.msra.mxu0 0
        %490 = vmatprep.subr.bf16.mxu0 0
        %491 = vmatpush1.bf16.msra.mxu0 0
        %492 = vmatprep.subr.bf16.mxu0 0
        %493 = vmatpush1.bf16.msra.mxu0 0
        %494 = vmatprep.subr.bf16.mxu0 0
        %495 = vmatpush1.bf16.msra.mxu0 0
        %496 = vmatprep.subr.bf16.mxu0 0
        %497 = vmatpush1.bf16.msra.mxu0 0
        %498 = vmatprep.subr.bf16.mxu0 0
        %499 = vmatpush1.bf16.msra.mxu0 0
        %500 = vmatprep.subr.bf16.mxu0 0
        %501 = vmatpush1.bf16.msra.mxu0 %v484
        %502 = vmatprep.subr.bf16.mxu0 0
        %503 = vmatpush2.bf16.msra.mxu0 0
        %504 = vmatprep.subr.bf16.mxu0 0
        %505 = vmatpush2.bf16.msra.mxu0 0
        %506 = vmatprep.subr.bf16.mxu0 0
        %507 = vmatpush2.bf16.msra.mxu0 0
        %508 = vmatprep.subr.bf16.mxu0 0
        %509 = vmatpush2.bf16.msra.mxu0 0
        %510 = vmatprep.subr.bf16.mxu0 0
        %511 = vmatpush2.bf16.msra.mxu0 0
        %512 = vmatprep.subr.bf16.mxu0 0
        %513 = vmatpush2.bf16.msra.mxu0 0
        %514 = vmatprep.subr.bf16.mxu0 0
        %515 = vmatpush2.bf16.msra.mxu0 0
        %516 = vmatprep.subr.bf16.mxu0 0
        %517 = vmatpush2.bf16.msra.mxu0 0
        %518 = vmatprep.mubr.bf16.mxu0 0
        %519 = vmatmul.mubr.bf16.gmra.mxu0 %v480
        %v520 = vpop.f32.mrf.mxu0
        %v521 = vadd.f32 0.0, %v520
        %v522 = vpop.f32.mrf.mxu0
        %v523 = vpop.f32.mrf.mxu0
        %v524 = vpop.f32.mrf.mxu0
        %525 = vdwg.mxu0
        %v527 = vsel %vm478, %v471, 0
        %v530 = vsel %vm482, %v475, 0
        %532 = vmatprep.subr.bf16.mxu0 0
        %533 = vmatpush1.bf16.msra.mxu0 0
        %534 = vmatprep.subr.bf16.mxu0 0
        %535 = vmatpush1.bf16.msra.mxu0 0
        %536 = vmatprep.subr.bf16.mxu0 0
        %537 = vmatpush1.bf16.msra.mxu0 0
        %538 = vmatprep.subr.bf16.mxu0 0
        %539 = vmatpush1.bf16.msra.mxu0 0
        %540 = vmatprep.subr.bf16.mxu0 0
        %541 = vmatpush1.bf16.msra.mxu0 0
        %542 = vmatprep.subr.bf16.mxu0 0
        %543 = vmatpush1.bf16.msra.mxu0 0
        %544 = vmatprep.subr.bf16.mxu0 0
        %545 = vmatpush1.bf16.msra.mxu0 0
        %546 = vmatprep.subr.bf16.mxu0 0
        %547 = vmatpush1.bf16.msra.mxu0 %v530
        %548 = vmatprep.subr.bf16.mxu0 0
        %549 = vmatpush2.bf16.msra.mxu0 0
        %550 = vmatprep.subr.bf16.mxu0 0
        %551 = vmatpush2.bf16.msra.mxu0 0
        %552 = vmatprep.subr.bf16.mxu0 0
        %553 = vmatpush2.bf16.msra.mxu0 0
        %554 = vmatprep.subr.bf16.mxu0 0
        %555 = vmatpush2.bf16.msra.mxu0 0
        %556 = vmatprep.subr.bf16.mxu0 0
        %557 = vmatpush2.bf16.msra.mxu0 0
        %558 = vmatprep.subr.bf16.mxu0 0
        %559 = vmatpush2.bf16.msra.mxu0 0
        %560 = vmatprep.subr.bf16.mxu0 0
        %561 = vmatpush2.bf16.msra.mxu0 0
        %562 = vmatprep.subr.bf16.mxu0 0
        %563 = vmatpush2.bf16.msra.mxu0 0
        %564 = vmatprep.mubr.bf16.mxu0 0
        %565 = vmatmul.mubr.bf16.gmra.mxu0 %v527
        %v566 = vpop.f32.mrf.mxu0
        %v567 = vadd.f32 0.0, %v566
        %v568 = vpop.f32.mrf.mxu0
        %v569 = vpop.f32.mrf.mxu0
        %v570 = vpop.f32.mrf.mxu0
        %571 = vdwg.mxu0
        %v573 = vsel %vm478, %v472, 0
        %v576 = vsel %vm482, %v476, 0
        %578 = vmatprep.subr.bf16.mxu0 0
        %579 = vmatpush1.bf16.msra.mxu0 0
        %580 = vmatprep.subr.bf16.mxu0 0
        %581 = vmatpush1.bf16.msra.mxu0 0
        %582 = vmatprep.subr.bf16.mxu0 0
        %583 = vmatpush1.bf16.msra.mxu0 0
        %584 = vmatprep.subr.bf16.mxu0 0
        %585 = vmatpush1.bf16.msra.mxu0 0
        %586 = vmatprep.subr.bf16.mxu0 0
        %587 = vmatpush1.bf16.msra.mxu0 0
        %588 = vmatprep.subr.bf16.mxu0 0
        %589 = vmatpush1.bf16.msra.mxu0 0
        %590 = vmatprep.subr.bf16.mxu0 0
        %591 = vmatpush1.bf16.msra.mxu0 0
        %592 = vmatprep.subr.bf16.mxu0 0
        %593 = vmatpush1.bf16.msra.mxu0 %v576
        %594 = vmatprep.subr.bf16.mxu0 0
        %595 = vmatpush2.bf16.msra.mxu0 0
        %596 = vmatprep.subr.bf16.mxu0 0
        %597 = vmatpush2.bf16.msra.mxu0 0
        %598 = vmatprep.subr.bf16.mxu0 0
        %599 = vmatpush2.bf16.msra.mxu0 0
        %600 = vmatprep.subr.bf16.mxu0 0
        %601 = vmatpush2.bf16.msra.mxu0 0
        %602 = vmatprep.subr.bf16.mxu0 0
        %603 = vmatpush2.bf16.msra.mxu0 0
        %604 = vmatprep.subr.bf16.mxu0 0
        %605 = vmatpush2.bf16.msra.mxu0 0
        %606 = vmatprep.subr.bf16.mxu0 0
        %607 = vmatpush2.bf16.msra.mxu0 0
        %608 = vmatprep.subr.bf16.mxu0 0
        %609 = vmatpush2.bf16.msra.mxu0 0
        %610 = vmatprep.mubr.bf16.mxu0 0
        %611 = vmatmul.mubr.bf16.gmra.mxu0 %v573
        %v612 = vpop.f32.mrf.mxu0
        %v613 = vadd.f32 0.0, %v612
        %v614 = vpop.f32.mrf.mxu0
        %v615 = vpop.f32.mrf.mxu0
        %v616 = vpop.f32.mrf.mxu0
        %617 = vdwg.mxu0
        %v619 = vsel %vm478, %v473, 0
        %v622 = vsel %vm482, %v477, 0
        %624 = vmatprep.subr.bf16.mxu0 0
        %625 = vmatpush1.bf16.msra.mxu0 0
        %626 = vmatprep.subr.bf16.mxu0 0
        %627 = vmatpush1.bf16.msra.mxu0 0
        %628 = vmatprep.subr.bf16.mxu0 0
        %629 = vmatpush1.bf16.msra.mxu0 0
        %630 = vmatprep.subr.bf16.mxu0 0
        %631 = vmatpush1.bf16.msra.mxu0 0
        %632 = vmatprep.subr.bf16.mxu0 0
        %633 = vmatpush1.bf16.msra.mxu0 0
        %634 = vmatprep.subr.bf16.mxu0 0
        %635 = vmatpush1.bf16.msra.mxu0 0
        %636 = vmatprep.subr.bf16.mxu0 0
        %637 = vmatpush1.bf16.msra.mxu0 0
        %638 = vmatprep.subr.bf16.mxu0 0
        %639 = vmatpush1.bf16.msra.mxu0 %v622
        %640 = vmatprep.subr.bf16.mxu0 0
        %641 = vmatpush2.bf16.msra.mxu0 0
        %642 = vmatprep.subr.bf16.mxu0 0
        %643 = vmatpush2.bf16.msra.mxu0 0
        %644 = vmatprep.subr.bf16.mxu0 0
        %645 = vmatpush2.bf16.msra.mxu0 0
        %646 = vmatprep.subr.bf16.mxu0 0
        %647 = vmatpush2.bf16.msra.mxu0 0
        %648 = vmatprep.subr.bf16.mxu0 0
        %649 = vmatpush2.bf16.msra.mxu0 0
        %650 = vmatprep.subr.bf16.mxu0 0
        %651 = vmatpush2.bf16.msra.mxu0 0
        %652 = vmatprep.subr.bf16.mxu0 0
        %653 = vmatpush2.bf16.msra.mxu0 0
        %654 = vmatprep.subr.bf16.mxu0 0
        %655 = vmatpush2.bf16.msra.mxu0 0
        %656 = vmatprep.mubr.bf16.mxu0 0
        %657 = vmatmul.mubr.bf16.gmra.mxu0 %v619
        %v658 = vpop.f32.mrf.mxu0
        %v659 = vadd.f32 0.0, %v658
        %v660 = vpop.f32.mrf.mxu0
        %v661 = vpop.f32.mrf.mxu0
        %v662 = vpop.f32.mrf.mxu0
        %663 = vdwg.mxu0
        %v664 = vmul.f32 %v521, 0.35355338
        %v665 = vmul.f32 %v567, 0.35355338
        %v666 = vmul.f32 %v613, 0.35355338
        %v667 = vmul.f32 %v659, 0.35355338
        %v668 = vsel %vm478, %v664, -inf
        %669 = vmax.xlane.f32.xlu0 %v668
        %v670 = vpop.xlane.xlu0 %669
        %v671 = vsel %vm478, %v665, -inf
        %672 = vmax.xlane.f32.xlu0 %v671
        %v673 = vpop.xlane.xlu0 %672
        %v674 = vsel %vm478, %v666, -inf
        %675 = vmax.xlane.f32.xlu0 %v674
        %v676 = vpop.xlane.xlu0 %675
        %v677 = vsel %vm478, %v667, -inf
        %678 = vmax.xlane.f32.xlu0 %v677
        %v679 = vpop.xlane.xlu0 %678
        %v680 = vsub.f32 %v664, %v670
        %v681 = vsub.f32 %v665, %v673
        %v682 = vsub.f32 %v666, %v676
        %v683 = vsub.f32 %v667, %v679
        %v684 = vmul.f32 %v680, 1.442695
        %v685 = vpow.pop %v684
        %v686 = vmul.f32 %v681, 1.442695
        %v687 = vpow.pop %v686
        %v688 = vmul.f32 %v682, 1.442695
        %v689 = vpow.pop %v688
        %v690 = vmul.f32 %v683, 1.442695
        %v691 = vpow.pop %v690
        %v692 = vsel %vm478, %v685, 0.0
        %693 = vadd.xlane.f32.xlu0 %v692
        %v694 = vpop.xlane.xlu0 %693
        %v695 = vsel %vm478, %v687, 0.0
        %696 = vadd.xlane.f32.xlu0 %v695
        %v697 = vpop.xlane.xlu0 %696
        %v698 = vsel %vm478, %v689, 0.0
        %699 = vadd.xlane.f32.xlu0 %v698
        %v700 = vpop.xlane.xlu0 %699
        %v701 = vsel %vm478, %v691, 0.0
        %702 = vadd.xlane.f32.xlu0 %v701
        %v703 = vpop.xlane.xlu0 %702
        %v704 = vrcp.pop %v694
        %v705 = vrcp.pop %v697
        %v706 = vrcp.pop %v700
        %v707 = vrcp.pop %v703
        %v708 = vmul.f32 %v685, %v704
        %v709 = vmul.f32 %v687, %v705
        %v710 = vmul.f32 %v689, %v706
        %v711 = vmul.f32 %v691, %v707
        %v712 = vpack.c.bf16 %v708, %v708
        %v713 = vpack.c.bf16 %v709, %v709
        %v714 = vpack.c.bf16 %v710, %v710
        %v715 = vpack.c.bf16 %v711, %v711
        %v716 = vpack.c.bf16 %v334, %v334
        %v717 = vpack.c.bf16 %v335, %v335
        %v718 = vpack.c.bf16 %v336, %v336
        %v719 = vpack.c.bf16 %v337, %v337
        %v721 = vsel %vm478, %v712, 0
        %v724 = vsel %vm478, %v716, 0
        %726 = vmatprep.subr.bf16.mxu0 0
        %727 = vmatpush1.bf16.xpose.msra.mxu0 0
        %728 = vmatprep.subr.bf16.mxu0 0
        %729 = vmatpush1.bf16.xpose.msra.mxu0 0
        %730 = vmatprep.subr.bf16.mxu0 0
        %731 = vmatpush1.bf16.xpose.msra.mxu0 0
        %732 = vmatprep.subr.bf16.mxu0 0
        %733 = vmatpush1.bf16.xpose.msra.mxu0 0
        %734 = vmatprep.subr.bf16.mxu0 0
        %735 = vmatpush1.bf16.xpose.msra.mxu0 0
        %736 = vmatprep.subr.bf16.mxu0 0
        %737 = vmatpush1.bf16.xpose.msra.mxu0 0
        %738 = vmatprep.subr.bf16.mxu0 0
        %739 = vmatpush1.bf16.xpose.msra.mxu0 0
        %740 = vmatprep.subr.bf16.mxu0 0
        %741 = vmatpush1.bf16.xpose.msra.mxu0 %v724
        %742 = vmatprep.subr.bf16.mxu0 0
        %743 = vmatpush2.bf16.xpose.msra.mxu0 0
        %744 = vmatprep.subr.bf16.mxu0 0
        %745 = vmatpush2.bf16.xpose.msra.mxu0 0
        %746 = vmatprep.subr.bf16.mxu0 0
        %747 = vmatpush2.bf16.xpose.msra.mxu0 0
        %748 = vmatprep.subr.bf16.mxu0 0
        %749 = vmatpush2.bf16.xpose.msra.mxu0 0
        %750 = vmatprep.subr.bf16.mxu0 0
        %751 = vmatpush2.bf16.xpose.msra.mxu0 0
        %752 = vmatprep.subr.bf16.mxu0 0
        %753 = vmatpush2.bf16.xpose.msra.mxu0 0
        %754 = vmatprep.subr.bf16.mxu0 0
        %755 = vmatpush2.bf16.xpose.msra.mxu0 0
        %756 = vmatprep.subr.bf16.mxu0 0
        %757 = vmatpush2.bf16.xpose.msra.mxu0 0
        %758 = vmatprep.mubr.bf16.mxu0 0
        %759 = vmatmul.mubr.bf16.gmra.mxu0 %v721
        %v760 = vpop.f32.mrf.mxu0
        %v761 = vadd.f32 0.0, %v760
        %v762 = vpop.f32.mrf.mxu0
        %v763 = vpop.f32.mrf.mxu0
        %v764 = vpop.f32.mrf.mxu0
        %765 = vdwg.mxu0
        %v767 = vsel %vm478, %v713, 0
        %v770 = vsel %vm478, %v717, 0
        %772 = vmatprep.subr.bf16.mxu0 0
        %773 = vmatpush1.bf16.xpose.msra.mxu0 0
        %774 = vmatprep.subr.bf16.mxu0 0
        %775 = vmatpush1.bf16.xpose.msra.mxu0 0
        %776 = vmatprep.subr.bf16.mxu0 0
        %777 = vmatpush1.bf16.xpose.msra.mxu0 0
        %778 = vmatprep.subr.bf16.mxu0 0
        %779 = vmatpush1.bf16.xpose.msra.mxu0 0
        %780 = vmatprep.subr.bf16.mxu0 0
        %781 = vmatpush1.bf16.xpose.msra.mxu0 0
        %782 = vmatprep.subr.bf16.mxu0 0
        %783 = vmatpush1.bf16.xpose.msra.mxu0 0
        %784 = vmatprep.subr.bf16.mxu0 0
        %785 = vmatpush1.bf16.xpose.msra.mxu0 0
        %786 = vmatprep.subr.bf16.mxu0 0
        %787 = vmatpush1.bf16.xpose.msra.mxu0 %v770
        %788 = vmatprep.subr.bf16.mxu0 0
        %789 = vmatpush2.bf16.xpose.msra.mxu0 0
        %790 = vmatprep.subr.bf16.mxu0 0
        %791 = vmatpush2.bf16.xpose.msra.mxu0 0
        %792 = vmatprep.subr.bf16.mxu0 0
        %793 = vmatpush2.bf16.xpose.msra.mxu0 0
        %794 = vmatprep.subr.bf16.mxu0 0
        %795 = vmatpush2.bf16.xpose.msra.mxu0 0
        %796 = vmatprep.subr.bf16.mxu0 0
        %797 = vmatpush2.bf16.xpose.msra.mxu0 0
        %798 = vmatprep.subr.bf16.mxu0 0
        %799 = vmatpush2.bf16.xpose.msra.mxu0 0
        %800 = vmatprep.subr.bf16.mxu0 0
        %801 = vmatpush2.bf16.xpose.msra.mxu0 0
        %802 = vmatprep.subr.bf16.mxu0 0
        %803 = vmatpush2.bf16.xpose.msra.mxu0 0
        %804 = vmatprep.mubr.bf16.mxu0 0
        %805 = vmatmul.mubr.bf16.gmra.mxu0 %v767
        %v806 = vpop.f32.mrf.mxu0
        %v807 = vadd.f32 0.0, %v806
        %v808 = vpop.f32.mrf.mxu0
        %v809 = vpop.f32.mrf.mxu0
        %v810 = vpop.f32.mrf.mxu0
        %811 = vdwg.mxu0
        %v813 = vsel %vm478, %v714, 0
        %v816 = vsel %vm478, %v718, 0
        %818 = vmatprep.subr.bf16.mxu0 0
        %819 = vmatpush1.bf16.xpose.msra.mxu0 0
        %820 = vmatprep.subr.bf16.mxu0 0
        %821 = vmatpush1.bf16.xpose.msra.mxu0 0
        %822 = vmatprep.subr.bf16.mxu0 0
        %823 = vmatpush1.bf16.xpose.msra.mxu0 0
        %824 = vmatprep.subr.bf16.mxu0 0
        %825 = vmatpush1.bf16.xpose.msra.mxu0 0
        %826 = vmatprep.subr.bf16.mxu0 0
        %827 = vmatpush1.bf16.xpose.msra.mxu0 0
        %828 = vmatprep.subr.bf16.mxu0 0
        %829 = vmatpush1.bf16.xpose.msra.mxu0 0
        %830 = vmatprep.subr.bf16.mxu0 0
        %831 = vmatpush1.bf16.xpose.msra.mxu0 0
        %832 = vmatprep.subr.bf16.mxu0 0
        %833 = vmatpush1.bf16.xpose.msra.mxu0 %v816
        %834 = vmatprep.subr.bf16.mxu0 0
        %835 = vmatpush2.bf16.xpose.msra.mxu0 0
        %836 = vmatprep.subr.bf16.mxu0 0
        %837 = vmatpush2.bf16.xpose.msra.mxu0 0
        %838 = vmatprep.subr.bf16.mxu0 0
        %839 = vmatpush2.bf16.xpose.msra.mxu0 0
        %840 = vmatprep.subr.bf16.mxu0 0
        %841 = vmatpush2.bf16.xpose.msra.mxu0 0
        %842 = vmatprep.subr.bf16.mxu0 0
        %843 = vmatpush2.bf16.xpose.msra.mxu0 0
        %844 = vmatprep.subr.bf16.mxu0 0
        %845 = vmatpush2.bf16.xpose.msra.mxu0 0
        %846 = vmatprep.subr.bf16.mxu0 0
        %847 = vmatpush2.bf16.xpose.msra.mxu0 0
        %848 = vmatprep.subr.bf16.mxu0 0
        %849 = vmatpush2.bf16.xpose.msra.mxu0 0
        %850 = vmatprep.mubr.bf16.mxu0 0
        %851 = vmatmul.mubr.bf16.gmra.mxu0 %v813
        %v852 = vpop.f32.mrf.mxu0
        %v853 = vadd.f32 0.0, %v852
        %v854 = vpop.f32.mrf.mxu0
        %v855 = vpop.f32.mrf.mxu0
        %v856 = vpop.f32.mrf.mxu0
        %857 = vdwg.mxu0
        %v859 = vsel %vm478, %v715, 0
        %v862 = vsel %vm478, %v719, 0
        %864 = vmatprep.subr.bf16.mxu0 0
        %865 = vmatpush1.bf16.xpose.msra.mxu0 0
        %866 = vmatprep.subr.bf16.mxu0 0
        %867 = vmatpush1.bf16.xpose.msra.mxu0 0
        %868 = vmatprep.subr.bf16.mxu0 0
        %869 = vmatpush1.bf16.xpose.msra.mxu0 0
        %870 = vmatprep.subr.bf16.mxu0 0
        %871 = vmatpush1.bf16.xpose.msra.mxu0 0
        %872 = vmatprep.subr.bf16.mxu0 0
        %873 = vmatpush1.bf16.xpose.msra.mxu0 0
        %874 = vmatprep.subr.bf16.mxu0 0
        %875 = vmatpush1.bf16.xpose.msra.mxu0 0
        %876 = vmatprep.subr.bf16.mxu0 0
        %877 = vmatpush1.bf16.xpose.msra.mxu0 0
        %878 = vmatprep.subr.bf16.mxu0 0
        %879 = vmatpush1.bf16.xpose.msra.mxu0 %v862
        %880 = vmatprep.subr.bf16.mxu0 0
        %881 = vmatpush2.bf16.xpose.msra.mxu0 0
        %882 = vmatprep.subr.bf16.mxu0 0
        %883 = vmatpush2.bf16.xpose.msra.mxu0 0
        %884 = vmatprep.subr.bf16.mxu0 0
        %885 = vmatpush2.bf16.xpose.msra.mxu0 0
        %886 = vmatprep.subr.bf16.mxu0 0
        %887 = vmatpush2.bf16.xpose.msra.mxu0 0
        %888 = vmatprep.subr.bf16.mxu0 0
        %889 = vmatpush2.bf16.xpose.msra.mxu0 0
        %890 = vmatprep.subr.bf16.mxu0 0
        %891 = vmatpush2.bf16.xpose.msra.mxu0 0
        %892 = vmatprep.subr.bf16.mxu0 0
        %893 = vmatpush2.bf16.xpose.msra.mxu0 0
        %894 = vmatprep.subr.bf16.mxu0 0
        %895 = vmatpush2.bf16.xpose.msra.mxu0 0
        %896 = vmatprep.mubr.bf16.mxu0 0
        %897 = vmatmul.mubr.bf16.gmra.mxu0 %v859
        %v898 = vpop.f32.mrf.mxu0
        %v899 = vadd.f32 0.0, %v898
        %v900 = vpop.f32.mrf.mxu0
        %v901 = vpop.f32.mrf.mxu0
        %v902 = vpop.f32.mrf.mxu0
        %903 = vdwg.mxu0
        %904 = vxpose.xlu0.b32.start [1/16] %v761, 128
        %905 = vxpose.xlu0.b32.cont [2/16] 0.0, 128
        %906 = vxpose.xlu0.b32.cont [3/16] 0.0, 128
        %907 = vxpose.xlu0.b32.cont [4/16] 0.0, 128
        %908 = vxpose.xlu0.b32.cont [5/16] 0.0, 128
        %909 = vxpose.xlu0.b32.cont [6/16] 0.0, 128
        %910 = vxpose.xlu0.b32.cont [7/16] 0.0, 128
        %911 = vxpose.xlu0.b32.cont [8/16] 0.0, 128
        %912 = vxpose.xlu0.b32.cont [9/16] 0.0, 128
        %913 = vxpose.xlu0.b32.cont [10/16] 0.0, 128
        %914 = vxpose.xlu0.b32.cont [11/16] 0.0, 128
        %915 = vxpose.xlu0.b32.cont [12/16] 0.0, 128
        %916 = vxpose.xlu0.b32.cont [13/16] 0.0, 128
        %917 = vxpose.xlu0.b32.cont [14/16] 0.0, 128
        %918 = vxpose.xlu0.b32.cont [15/16] 0.0, 128
        %919 = vxpose.xlu0.b32.end [16/16] 0.0, 128
        %v920 = vpop.trf.xlu0
        %v921 = vpop.trf.xlu0
        %v922 = vpop.trf.xlu0
        %v923 = vpop.trf.xlu0
        %v924 = vpop.trf.xlu0
        %v925 = vpop.trf.xlu0
        %v926 = vpop.trf.xlu0
        %v927 = vpop.trf.xlu0
        %v928 = vpop.trf.xlu0
        %v929 = vpop.trf.xlu0
        %v930 = vpop.trf.xlu0
        %v931 = vpop.trf.xlu0
        %v932 = vpop.trf.xlu0
        %v933 = vpop.trf.xlu0
        %v934 = vpop.trf.xlu0
        %v935 = vpop.trf.xlu0
        %936 = vxpose.xlu0.b32.start [1/16] %v807, 128
        %937 = vxpose.xlu0.b32.cont [2/16] 0.0, 128
        %938 = vxpose.xlu0.b32.cont [3/16] 0.0, 128
        %939 = vxpose.xlu0.b32.cont [4/16] 0.0, 128
        %940 = vxpose.xlu0.b32.cont [5/16] 0.0, 128
        %941 = vxpose.xlu0.b32.cont [6/16] 0.0, 128
        %942 = vxpose.xlu0.b32.cont [7/16] 0.0, 128
        %943 = vxpose.xlu0.b32.cont [8/16] 0.0, 128
        %944 = vxpose.xlu0.b32.cont [9/16] 0.0, 128
        %945 = vxpose.xlu0.b32.cont [10/16] 0.0, 128
        %946 = vxpose.xlu0.b32.cont [11/16] 0.0, 128
        %947 = vxpose.xlu0.b32.cont [12/16] 0.0, 128
        %948 = vxpose.xlu0.b32.cont [13/16] 0.0, 128
        %949 = vxpose.xlu0.b32.cont [14/16] 0.0, 128
        %950 = vxpose.xlu0.b32.cont [15/16] 0.0, 128
        %951 = vxpose.xlu0.b32.end [16/16] 0.0, 128
        %v952 = vpop.trf.xlu0
        %v953 = vpop.trf.xlu0
        %v954 = vpop.trf.xlu0
        %v955 = vpop.trf.xlu0
        %v956 = vpop.trf.xlu0
        %v957 = vpop.trf.xlu0
        %v958 = vpop.trf.xlu0
        %v959 = vpop.trf.xlu0
        %v960 = vpop.trf.xlu0
        %v961 = vpop.trf.xlu0
        %v962 = vpop.trf.xlu0
        %v963 = vpop.trf.xlu0
        %v964 = vpop.trf.xlu0
        %v965 = vpop.trf.xlu0
        %v966 = vpop.trf.xlu0
        %v967 = vpop.trf.xlu0
        %968 = vxpose.xlu0.b32.start [1/16] %v853, 128
        %969 = vxpose.xlu0.b32.cont [2/16] 0.0, 128
        %970 = vxpose.xlu0.b32.cont [3/16] 0.0, 128
        %971 = vxpose.xlu0.b32.cont [4/16] 0.0, 128
        %972 = vxpose.xlu0.b32.cont [5/16] 0.0, 128
        %973 = vxpose.xlu0.b32.cont [6/16] 0.0, 128
        %974 = vxpose.xlu0.b32.cont [7/16] 0.0, 128
        %975 = vxpose.xlu0.b32.cont [8/16] 0.0, 128
        %976 = vxpose.xlu0.b32.cont [9/16] 0.0, 128
        %977 = vxpose.xlu0.b32.cont [10/16] 0.0, 128
        %978 = vxpose.xlu0.b32.cont [11/16] 0.0, 128
        %979 = vxpose.xlu0.b32.cont [12/16] 0.0, 128
        %980 = vxpose.xlu0.b32.cont [13/16] 0.0, 128
        %981 = vxpose.xlu0.b32.cont [14/16] 0.0, 128
        %982 = vxpose.xlu0.b32.cont [15/16] 0.0, 128
        %983 = vxpose.xlu0.b32.end [16/16] 0.0, 128
        %v984 = vpop.trf.xlu0
        %v985 = vpop.trf.xlu0
        %v986 = vpop.trf.xlu0
        %v987 = vpop.trf.xlu0
        %v988 = vpop.trf.xlu0
        %v989 = vpop.trf.xlu0
        %v990 = vpop.trf.xlu0
        %v991 = vpop.trf.xlu0
        %v992 = vpop.trf.xlu0
        %v993 = vpop.trf.xlu0
        %v994 = vpop.trf.xlu0
        %v995 = vpop.trf.xlu0
        %v996 = vpop.trf.xlu0
        %v997 = vpop.trf.xlu0
        %v998 = vpop.trf.xlu0
        %v999 = vpop.trf.xlu0
        %1000 = vxpose.xlu0.b32.start [1/16] %v899, 128
        %1001 = vxpose.xlu0.b32.cont [2/16] 0.0, 128
        %1002 = vxpose.xlu0.b32.cont [3/16] 0.0, 128
        %1003 = vxpose.xlu0.b32.cont [4/16] 0.0, 128
        %1004 = vxpose.xlu0.b32.cont [5/16] 0.0, 128
        %1005 = vxpose.xlu0.b32.cont [6/16] 0.0, 128
        %1006 = vxpose.xlu0.b32.cont [7/16] 0.0, 128
        %1007 = vxpose.xlu0.b32.cont [8/16] 0.0, 128
        %1008 = vxpose.xlu0.b32.cont [9/16] 0.0, 128
        %1009 = vxpose.xlu0.b32.cont [10/16] 0.0, 128
        %1010 = vxpose.xlu0.b32.cont [11/16] 0.0, 128
        %1011 = vxpose.xlu0.b32.cont [12/16] 0.0, 128
        %1012 = vxpose.xlu0.b32.cont [13/16] 0.0, 128
        %1013 = vxpose.xlu0.b32.cont [14/16] 0.0, 128
        %1014 = vxpose.xlu0.b32.cont [15/16] 0.0, 128
        %1015 = vxpose.xlu0.b32.end [16/16] 0.0, 128
        %v1016 = vpop.trf.xlu0
        %v1017 = vpop.trf.xlu0
        %v1018 = vpop.trf.xlu0
        %v1019 = vpop.trf.xlu0
        %v1020 = vpop.trf.xlu0
        %v1021 = vpop.trf.xlu0
        %v1022 = vpop.trf.xlu0
        %v1023 = vpop.trf.xlu0
        %v1024 = vpop.trf.xlu0
        %v1025 = vpop.trf.xlu0
        %v1026 = vpop.trf.xlu0
        %v1027 = vpop.trf.xlu0
        %v1028 = vpop.trf.xlu0
        %v1029 = vpop.trf.xlu0
        %v1030 = vpop.trf.xlu0
        %v1031 = vpop.trf.xlu0
        %1032 = vxpose.xlu0.b32.start [1/16] %v920, 128
        %1033 = vxpose.xlu0.b32.cont [2/16] %v952, 128
        %1034 = vxpose.xlu0.b32.cont [3/16] %v984, 128
        %1035 = vxpose.xlu0.b32.cont [4/16] %v1016, 128
        %1036 = vxpose.xlu0.b32.cont [5/16] 0.0, 128
        %1037 = vxpose.xlu0.b32.cont [6/16] 0.0, 128
        %1038 = vxpose.xlu0.b32.cont [7/16] 0.0, 128
        %1039 = vxpose.xlu0.b32.cont [8/16] 0.0, 128
        %1040 = vxpose.xlu0.b32.cont [9/16] 0.0, 128
        %1041 = vxpose.xlu0.b32.cont [10/16] 0.0, 128
        %1042 = vxpose.xlu0.b32.cont [11/16] 0.0, 128
        %1043 = vxpose.xlu0.b32.cont [12/16] 0.0, 128
        %1044 = vxpose.xlu0.b32.cont [13/16] 0.0, 128
        %1045 = vxpose.xlu0.b32.cont [14/16] 0.0, 128
        %1046 = vxpose.xlu0.b32.cont [15/16] 0.0, 128
        %1047 = vxpose.xlu0.b32.end [16/16] 0.0, 128
        %v1048 = vpop.trf.xlu0
        %v1049 = vpop.trf.xlu0
        %v1050 = vpop.trf.xlu0
        %v1051 = vpop.trf.xlu0
        %v1052 = vpop.trf.xlu0
        %v1053 = vpop.trf.xlu0
        %v1054 = vpop.trf.xlu0
        %v1055 = vpop.trf.xlu0
        %v1056 = vpop.trf.xlu0
        %v1057 = vpop.trf.xlu0
        %v1058 = vpop.trf.xlu0
        %v1059 = vpop.trf.xlu0
        %v1060 = vpop.trf.xlu0
        %v1061 = vpop.trf.xlu0
        %v1062 = vpop.trf.xlu0
        %v1063 = vpop.trf.xlu0
        %v1064 = vld [vmem:[#allocation7 + $0x10] sm:$0xf]
        %v1065 = vld [vmem:[#allocation7 + $0x14] sm:$0xf]
        %v1066 = vld [vmem:[#allocation7 + $0x18] sm:$0xf]
        %v1067 = vld [vmem:[#allocation7 + $0x1c] sm:$0xf]
        %v1068 = vpack.c.bf16 %v1048, %v1048
        %v1069 = vld [vmem:[#allocation5 + $0x3] sm:$0x1]
        %v1070 = vlaneseq
        %v1071 = vshrl.u32 %v1070, 7
        %v1072 = vsub.s32 0, %v1071
        %v1073 = vrot.slane %v1069, %v1072
        %v1078 = vunpack.c.l.b16 %v1064
        %v1079 = vunpack.c.l.b16 %v1065
        %v1080 = vunpack.c.l.b16 %v1066
        %v1081 = vunpack.c.l.b16 %v1067
        %v1082 = vpack.c.b16 %v1079, %v1078
        %v1083 = vpack.c.b16 %v1081, %v1080
        %v1087 = vsel %vm220, %v1068, 0
        %1089 = vmatprep.subr.bf16.mxu0 0
        %1090 = vmatpush1.bf16.msra.mxu0 0
        %1091 = vmatprep.subr.bf16.mxu0 0
        %1092 = vmatpush1.bf16.msra.mxu0 0
        %1093 = vmatprep.subr.bf16.mxu0 0
        %1094 = vmatpush1.bf16.msra.mxu0 0
        %1095 = vmatprep.subr.bf16.mxu0 0
        %1096 = vmatpush1.bf16.msra.mxu0 0
        %1097 = vmatprep.subr.bf16.mxu0 0
        %1098 = vmatpush1.bf16.msra.mxu0 0
        %1099 = vmatprep.subr.bf16.mxu0 0
        %1100 = vmatpush1.bf16.msra.mxu0 0
        %1101 = vmatprep.subr.bf16.mxu0 0
        %1102 = vmatpush1.bf16.msra.mxu0 %v1083
        %1103 = vmatprep.subr.bf16.mxu0 0
        %1104 = vmatpush1.bf16.msra.mxu0 %v1082
        %1105 = vmatprep.subr.bf16.mxu0 0
        %1106 = vmatpush2.bf16.msra.mxu0 0
        %1107 = vmatprep.subr.bf16.mxu0 0
        %1108 = vmatpush2.bf16.msra.mxu0 0
        %1109 = vmatprep.subr.bf16.mxu0 0
        %1110 = vmatpush2.bf16.msra.mxu0 0
        %1111 = vmatprep.subr.bf16.mxu0 0
        %1112 = vmatpush2.bf16.msra.mxu0 0
        %1113 = vmatprep.subr.bf16.mxu0 0
        %1114 = vmatpush2.bf16.msra.mxu0 0
        %1115 = vmatprep.subr.bf16.mxu0 0
        %1116 = vmatpush2.bf16.msra.mxu0 0
        %1117 = vmatprep.subr.bf16.mxu0 0
        %1118 = vmatpush2.bf16.msra.mxu0 0
        %1119 = vmatprep.subr.bf16.mxu0 0
        %1120 = vmatpush2.bf16.msra.mxu0 0
        %1121 = vmatprep.mubr.bf16.mxu0 0
        %1122 = vmatmul.mubr.bf16.gmra.mxu0 %v1087
        %v1123 = vpop.f32.mrf.mxu0
        %v1124 = vadd.f32 %v1073, %v1123
        %v1125 = vpop.f32.mrf.mxu0
        %v1126 = vpop.f32.mrf.mxu0
        %v1127 = vpop.f32.mrf.mxu0
        %1128 = vdwg.mxu0
        %v1129 = vadd.f32 %v1124, %v244
        %v1130 = vld [vmem:[#allocation5 + $0x4] sm:$0x1]
        %v1131 = vld [vmem:[#allocation5 + $0x5] sm:$0x1]
        %v1132 = vsel %vm220, %v1129, 0.0
        %1133 = vadd.xlane.f32.xlu0 %v1132
        %v1134 = vpop.xlane.xlu0 %1133
        %v1135 = vmul.f32 %v1134, %v224
        %v1136 = vsub.f32 %v1129, %v1135
        %v1137 = vmul.f32 %v1136, %v1136
        %v1138 = vsel %vm220, %v1137, 0.0
        %1139 = vadd.xlane.f32.xlu0 %v1138
        %v1140 = vpop.xlane.xlu0 %1139
        %v1141 = vmul.f32 %v1140, %v224
        %v1142 = vadd.f32 %v1141, 1e-12
        %v1143 = vrsqrt.pop %v1142
        %v1144 = vmul.f32 %v1136, %v1143
        %v1145 = vlaneseq
        %v1146 = vshrl.u32 %v1145, 7
        %v1147 = vsub.s32 0, %v1146
        %v1148 = vrot.slane %v1130, %v1147
        %v1149 = vmul.f32 %v1144, %v1148
        %v1150 = vlaneseq
        %v1151 = vshrl.u32 %v1150, 7
        %v1152 = vsub.s32 0, %v1151
        %v1153 = vrot.slane %v1131, %v1152
        %v1154 = vadd.f32 %v1149, %v1153
        %v1155 = vld [vmem:[#allocation7 + $0x20] sm:$0xf]
        %v1156 = vld [vmem:[#allocation7 + $0x24] sm:$0xf]
        %v1157 = vld [vmem:[#allocation7 + $0x28] sm:$0xf]
        %v1158 = vld [vmem:[#allocation7 + $0x2c] sm:$0xf]
        %v1159 = vpack.c.bf16 %v1154, %v1154
        %v1160 = vld [vmem:[#allocation5 + $0x6] sm:$0x1]
        %v1161 = vlaneseq
        %v1162 = vshrl.u32 %v1161, 7
        %v1163 = vsub.s32 0, %v1162
        %v1164 = vrot.slane %v1160, %v1163
        %v1169 = vunpack.c.l.b16 %v1155
        %v1170 = vunpack.c.l.b16 %v1156
        %v1171 = vunpack.c.l.b16 %v1157
        %v1172 = vunpack.c.l.b16 %v1158
        %v1173 = vpack.c.b16 %v1170, %v1169
        %v1174 = vpack.c.b16 %v1172, %v1171
        %v1178 = vsel %vm220, %v1159, 0
        %1180 = vmatprep.subr.bf16.mxu0 0
        %1181 = vmatpush1.bf16.msra.mxu0 0
        %1182 = vmatprep.subr.bf16.mxu0 0
        %1183 = vmatpush1.bf16.msra.mxu0 0
        %1184 = vmatprep.subr.bf16.mxu0 0
        %1185 = vmatpush1.bf16.msra.mxu0 0
        %1186 = vmatprep.subr.bf16.mxu0 0
        %1187 = vmatpush1.bf16.msra.mxu0 0
        %1188 = vmatprep.subr.bf16.mxu0 0
        %1189 = vmatpush1.bf16.msra.mxu0 0
        %1190 = vmatprep.subr.bf16.mxu0 0
        %1191 = vmatpush1.bf16.msra.mxu0 0
        %1192 = vmatprep.subr.bf16.mxu0 0
        %1193 = vmatpush1.bf16.msra.mxu0 %v1174
        %1194 = vmatprep.subr.bf16.mxu0 0
        %1195 = vmatpush1.bf16.msra.mxu0 %v1173
        %1196 = vmatprep.subr.bf16.mxu0 0
        %1197 = vmatpush2.bf16.msra.mxu0 0
        %1198 = vmatprep.subr.bf16.mxu0 0
        %1199 = vmatpush2.bf16.msra.mxu0 0
        %1200 = vmatprep.subr.bf16.mxu0 0
        %1201 = vmatpush2.bf16.msra.mxu0 0
        %1202 = vmatprep.subr.bf16.mxu0 0
        %1203 = vmatpush2.bf16.msra.mxu0 0
        %1204 = vmatprep.subr.bf16.mxu0 0
        %1205 = vmatpush2.bf16.msra.mxu0 0
        %1206 = vmatprep.subr.bf16.mxu0 0
        %1207 = vmatpush2.bf16.msra.mxu0 0
        %1208 = vmatprep.subr.bf16.mxu0 0
        %1209 = vmatpush2.bf16.msra.mxu0 0
        %1210 = vmatprep.subr.bf16.mxu0 0
        %1211 = vmatpush2.bf16.msra.mxu0 0
        %1212 = vmatprep.mubr.bf16.mxu0 0
        %1213 = vmatmul.mubr.bf16.gmra.mxu0 %v1178
        %v1214 = vpop.f32.mrf.mxu0
        %v1215 = vadd.f32 %v1164, %v1214
        %v1216 = vpop.f32.mrf.mxu0
        %v1217 = vpop.f32.mrf.mxu0
        %v1218 = vpop.f32.mrf.mxu0
        %1219 = vdwg.mxu0
        %v1220 = vmul.f32 %v1215, %v1215
        %v1221 = vmul.f32 %v1215, %v1220
        %v1222 = vmul.f32 %v1221, 0.044715
        %v1223 = vadd.f32 %v1215, %v1222
        %v1224 = vmul.f32 %v1223, 0.7978846
        %v1225 = vtanh.pop %v1224
        %v1226 = vadd.f32 %v1225, 1.0
        %v1227 = vmul.f32 %v1226, 0.5
        %v1228 = vmul.f32 %v1215, %v1227
        %v1229 = vld [vmem:[#allocation7 + $0x30] sm:$0xf]
        %v1230 = vld [vmem:[#allocation7 + $0x34] sm:$0xf]
        %v1231 = vld [vmem:[#allocation7 + $0x38] sm:$0xf]
        %v1232 = vld [vmem:[#allocation7 + $0x3c] sm:$0xf]
        %v1233 = vld [vmem:[#allocation7 + $0x40] sm:$0xf]
        %v1234 = vld [vmem:[#allocation7 + $0x44] sm:$0xf]
        %v1235 = vld [vmem:[#allocation7 + $0x48] sm:$0xf]
        %v1236 = vld [vmem:[#allocation7 + $0x4c] sm:$0xf]
        %v1237 = vpack.c.bf16 %v1228, %v1228
        %v1238 = vld [vmem:[#allocation5 + $0x7] sm:$0x1]
        %v1239 = vlaneseq
        %v1240 = vshrl.u32 %v1239, 7
        %v1241 = vsub.s32 0, %v1240
        %v1242 = vrot.slane %v1238, %v1241
        %v1251 = vunpack.c.l.b16 %v1229
        %v1252 = vunpack.c.l.b16 %v1230
        %v1253 = vunpack.c.l.b16 %v1231
        %v1254 = vunpack.c.l.b16 %v1232
        %v1255 = vunpack.c.l.b16 %v1233
        %v1256 = vunpack.c.l.b16 %v1234
        %v1257 = vunpack.c.l.b16 %v1235
        %v1258 = vunpack.c.l.b16 %v1236
        %v1259 = vpack.c.b16 %v1252, %v1251
        %v1260 = vpack.c.b16 %v1254, %v1253
        %v1261 = vpack.c.b16 %v1256, %v1255
        %v1262 = vpack.c.b16 %v1258, %v1257
        %vm1267 = vcmask 523264
        %v1269 = vsel %vm1267, %v1237, 0
        %1271 = vmatprep.subr.bf16.mxu0 0
        %1272 = vmatpush1.bf16.msra.mxu0 0
        %1273 = vmatprep.subr.bf16.mxu0 0
        %1274 = vmatpush1.bf16.msra.mxu0 0
        %1275 = vmatprep.subr.bf16.mxu0 0
        %1276 = vmatpush1.bf16.msra.mxu0 0
        %1277 = vmatprep.subr.bf16.mxu0 0
        %1278 = vmatpush1.bf16.msra.mxu0 0
        %1279 = vmatprep.subr.bf16.mxu0 0
        %1280 = vmatpush1.bf16.msra.mxu0 %v1262
        %1281 = vmatprep.subr.bf16.mxu0 0
        %1282 = vmatpush1.bf16.msra.mxu0 %v1261
        %1283 = vmatprep.subr.bf16.mxu0 0
        %1284 = vmatpush1.bf16.msra.mxu0 %v1260
        %1285 = vmatprep.subr.bf16.mxu0 0
        %1286 = vmatpush1.bf16.msra.mxu0 %v1259
        %1287 = vmatprep.subr.bf16.mxu0 0
        %1288 = vmatpush2.bf16.msra.mxu0 0
        %1289 = vmatprep.subr.bf16.mxu0 0
        %1290 = vmatpush2.bf16.msra.mxu0 0
        %1291 = vmatprep.subr.bf16.mxu0 0
        %1292 = vmatpush2.bf16.msra.mxu0 0
        %1293 = vmatprep.subr.bf16.mxu0 0
        %1294 = vmatpush2.bf16.msra.mxu0 0
        %1295 = vmatprep.subr.bf16.mxu0 0
        %1296 = vmatpush2.bf16.msra.mxu0 0
        %1297 = vmatprep.subr.bf16.mxu0 0
        %1298 = vmatpush2.bf16.msra.mxu0 0
        %1299 = vmatprep.subr.bf16.mxu0 0
        %1300 = vmatpush2.bf16.msra.mxu0 0
        %1301 = vmatprep.subr.bf16.mxu0 0
        %1302 = vmatpush2.bf16.msra.mxu0 0
        %1303 = vmatprep.mubr.bf16.mxu0 0
        %1304 = vmatmul.mubr.bf16.gmra.mxu0 %v1269
        %v1305 = vpop.f32.mrf.mxu0
        %v1306 = vadd.f32 %v1242, %v1305
        %v1307 = vpop.f32.mrf.mxu0
        %v1308 = vpop.f32.mrf.mxu0
        %v1309 = vpop.f32.mrf.mxu0
        %1310 = vdwg.mxu0
        %v1311 = vadd.f32 %v1306, %v1154
        %v1312 = vld [vmem:[#allocation5 + $0x8] sm:$0x1]
        %v1313 = vld [vmem:[#allocation5 + $0x9] sm:$0x1]
        %v1314 = vsel %vm220, %v1311, 0.0
        %1315 = vadd.xlane.f32.xlu0 %v1314
        %v1316 = vpop.xlane.xlu0 %1315
        %v1317 = vmul.f32 %v1316, %v224
        %v1318 = vsub.f32 %v1311, %v1317
        %v1319 = vmul.f32 %v1318, %v1318
        %v1320 = vsel %vm220, %v1319, 0.0
        %1321 = vadd.xlane.f32.xlu0 %v1320
        %v1322 = vpop.xlane.xlu0 %1321
        %v1323 = vmul.f32 %v1322, %v224
        %v1324 = vadd.f32 %v1323, 1e-12
        %v1325 = vrsqrt.pop %v1324
        %v1326 = vmul.f32 %v1318, %v1325
        %v1327 = vlaneseq
        %v1328 = vshrl.u32 %v1327, 7
        %v1329 = vsub.s32 0, %v1328
        %v1330 = vrot.slane %v1312, %v1329
        %v1331 = vmul.f32 %v1326, %v1330
        %v1332 = vlaneseq
        %v1333 = vshrl.u32 %v1332, 7
        %v1334 = vsub.s32 0, %v1333
        %v1335 = vrot.slane %v1313, %v1334
        %v1336 = vadd.f32 %v1331, %v1335
        %v1337 = vld [vmem:[#allocation7 + $0x50] sm:$0xf]
        %v1338 = vld [vmem:[#allocation7 + $0x54] sm:$0xf]
        %v1339 = vld [vmem:[#allocation7 + $0x58] sm:$0xf]
        %v1340 = vld [vmem:[#allocation7 + $0x5c] sm:$0xf]
        %v1341 = vpack.c.bf16 %v1336, %v1336
        %v1342 = vld [vmem:[#allocation5 + $0xa] sm:$0x1]
        %v1343 = vlaneseq
        %v1344 = vshrl.u32 %v1343, 7
        %v1345 = vsub.s32 0, %v1344
        %v1346 = vrot.slane %v1342, %v1345
        %v1351 = vunpack.c.l.b16 %v1337
        %v1352 = vunpack.c.l.b16 %v1338
        %v1353 = vunpack.c.l.b16 %v1339
        %v1354 = vunpack.c.l.b16 %v1340
        %v1355 = vpack.c.b16 %v1352, %v1351
        %v1356 = vpack.c.b16 %v1354, %v1353
        %v1360 = vsel %vm220, %v1341, 0
        %1362 = vmatprep.subr.bf16.mxu0 0
        %1363 = vmatpush1.bf16.msra.mxu0 0
        %1364 = vmatprep.subr.bf16.mxu0 0
        %1365 = vmatpush1.bf16.msra.mxu0 0
        %1366 = vmatprep.subr.bf16.mxu0 0
        %1367 = vmatpush1.bf16.msra.mxu0 0
        %1368 = vmatprep.subr.bf16.mxu0 0
        %1369 = vmatpush1.bf16.msra.mxu0 0
        %1370 = vmatprep.subr.bf16.mxu0 0
        %1371 = vmatpush1.bf16.msra.mxu0 0
        %1372 = vmatprep.subr.bf16.mxu0 0
        %1373 = vmatpush1.bf16.msra.mxu0 0
        %1374 = vmatprep.subr.bf16.mxu0 0
        %1375 = vmatpush1.bf16.msra.mxu0 %v1356
        %1376 = vmatprep.subr.bf16.mxu0 0
        %1377 = vmatpush1.bf16.msra.mxu0 %v1355
        %1378 = vmatprep.subr.bf16.mxu0 0
        %1379 = vmatpush2.bf16.msra.mxu0 0
        %1380 = vmatprep.subr.bf16.mxu0 0
        %1381 = vmatpush2.bf16.msra.mxu0 0
        %1382 = vmatprep.subr.bf16.mxu0 0
        %1383 = vmatpush2.bf16.msra.mxu0 0
        %1384 = vmatprep.subr.bf16.mxu0 0
        %1385 = vmatpush2.bf16.msra.mxu0 0
        %1386 = vmatprep.subr.bf16.mxu0 0
        %1387 = vmatpush2.bf16.msra.mxu0 0
        %1388 = vmatprep.subr.bf16.mxu0 0
        %1389 = vmatpush2.bf16.msra.mxu0 0
        %1390 = vmatprep.subr.bf16.mxu0 0
        %1391 = vmatpush2.bf16.msra.mxu0 0
        %1392 = vmatprep.subr.bf16.mxu0 0
        %1393 = vmatpush2.bf16.msra.mxu0 0
        %1394 = vmatprep.mubr.bf16.mxu0 0
        %1395 = vmatmul.mubr.bf16.gmra.mxu0 %v1360
        %v1396 = vpop.f32.mrf.mxu0
        %v1397 = vadd.f32 %v1346, %v1396
        %v1398 = vpop.f32.mrf.mxu0
        %v1399 = vpop.f32.mrf.mxu0
        %v1400 = vpop.f32.mrf.mxu0
        %1401 = vdwg.mxu0
        %1402 = vxpose.xlu0.b32.start [1/16] %v1397, 128
        %1403 = vxpose.xlu0.b32.cont [2/16] 0.0, 128
        %1404 = vxpose.xlu0.b32.cont [3/16] 0.0, 128
        %1405 = vxpose.xlu0.b32.cont [4/16] 0.0, 128
        %1406 = vxpose.xlu0.b32.cont [5/16] 0.0, 128
        %1407 = vxpose.xlu0.b32.cont [6/16] 0.0, 128
        %1408 = vxpose.xlu0.b32.cont [7/16] 0.0, 128
        %1409 = vxpose.xlu0.b32.cont [8/16] 0.0, 128
        %1410 = vxpose.xlu0.b32.cont [9/16] 0.0, 128
        %1411 = vxpose.xlu0.b32.cont [10/16] 0.0, 128
        %1412 = vxpose.xlu0.b32.cont [11/16] 0.0, 128
        %1413 = vxpose.xlu0.b32.cont [12/16] 0.0, 128
        %1414 = vxpose.xlu0.b32.cont [13/16] 0.0, 128
        %1415 = vxpose.xlu0.b32.cont [14/16] 0.0, 128
        %1416 = vxpose.xlu0.b32.cont [15/16] 0.0, 128
        %1417 = vxpose.xlu0.b32.end [16/16] 0.0, 128
        %v1418 = vpop.trf.xlu0
        %v1419 = vpop.trf.xlu0
        %v1420 = vpop.trf.xlu0
        %v1421 = vpop.trf.xlu0
        %v1422 = vpop.trf.xlu0
        %v1423 = vpop.trf.xlu0
        %v1424 = vpop.trf.xlu0
        %v1425 = vpop.trf.xlu0
        %v1426 = vpop.trf.xlu0
        %v1427 = vpop.trf.xlu0
        %v1428 = vpop.trf.xlu0
        %v1429 = vpop.trf.xlu0
        %v1430 = vpop.trf.xlu0
        %v1431 = vpop.trf.xlu0
        %v1432 = vpop.trf.xlu0
        %v1433 = vpop.trf.xlu0
        %1434 = vxpose.xlu0.b32.start [1/16] %v1418, 128
        %1435 = vxpose.xlu0.b32.cont [2/16] 0.0, 128
        %1436 = vxpose.xlu0.b32.cont [3/16] 0.0, 128
        %1437 = vxpose.xlu0.b32.cont [4/16] 0.0, 128
        %1438 = vxpose.xlu0.b32.cont [5/16] 0.0, 128
        %1439 = vxpose.xlu0.b32.cont [6/16] 0.0, 128
        %1440 = vxpose.xlu0.b32.cont [7/16] 0.0, 128
        %1441 = vxpose.xlu0.b32.cont [8/16] 0.0, 128
        %1442 = vxpose.xlu0.b32.cont [9/16] 0.0, 128
        %1443 = vxpose.xlu0.b32.cont [10/16] 0.0, 128
        %1444 = vxpose.xlu0.b32.cont [11/16] 0.0, 128
        %1445 = vxpose.xlu0.b32.cont [12/16] 0.0, 128
        %1446 = vxpose.xlu0.b32.cont [13/16] 0.0, 128
        %1447 = vxpose.xlu0.b32.cont [14/16] 0.0, 128
        %1448 = vxpose.xlu0.b32.cont [15/16] 0.0, 128
        %1449 = vxpose.xlu0.b32.end [16/16] 0.0, 128
        %v1450 = vpop.trf.xlu0
        %v1451 = vpop.trf.xlu0
        %v1452 = vpop.trf.xlu0
        %v1453 = vpop.trf.xlu0
        %v1454 = vpop.trf.xlu0
        %v1455 = vpop.trf.xlu0
        %v1456 = vpop.trf.xlu0
        %v1457 = vpop.trf.xlu0
        %v1458 = vpop.trf.xlu0
        %v1459 = vpop.trf.xlu0
        %v1460 = vpop.trf.xlu0
        %v1461 = vpop.trf.xlu0
        %v1462 = vpop.trf.xlu0
        %v1463 = vpop.trf.xlu0
        %v1464 = vpop.trf.xlu0
        %v1465 = vpop.trf.xlu0
        %1466 = vxpose.xlu0.b32.start [1/16] %v1419, 128
        %1467 = vxpose.xlu0.b32.cont [2/16] 0.0, 128
        %1468 = vxpose.xlu0.b32.cont [3/16] 0.0, 128
        %1469 = vxpose.xlu0.b32.cont [4/16] 0.0, 128
        %1470 = vxpose.xlu0.b32.cont [5/16] 0.0, 128
        %1471 = vxpose.xlu0.b32.cont [6/16] 0.0, 128
        %1472 = vxpose.xlu0.b32.cont [7/16] 0.0, 128
        %1473 = vxpose.xlu0.b32.cont [8/16] 0.0, 128
        %1474 = vxpose.xlu0.b32.cont [9/16] 0.0, 128
        %1475 = vxpose.xlu0.b32.cont [10/16] 0.0, 128
        %1476 = vxpose.xlu0.b32.cont [11/16] 0.0, 128
        %1477 = vxpose.xlu0.b32.cont [12/16] 0.0, 128
        %1478 = vxpose.xlu0.b32.cont [13/16] 0.0, 128
        %1479 = vxpose.xlu0.b32.cont [14/16] 0.0, 128
        %1480 = vxpose.xlu0.b32.cont [15/16] 0.0, 128
        %1481 = vxpose.xlu0.b32.end [16/16] 0.0, 128
        %v1482 = vpop.trf.xlu0
        %v1483 = vpop.trf.xlu0
        %v1484 = vpop.trf.xlu0
        %v1485 = vpop.trf.xlu0
        %v1486 = vpop.trf.xlu0
        %v1487 = vpop.trf.xlu0
        %v1488 = vpop.trf.xlu0
        %v1489 = vpop.trf.xlu0
        %v1490 = vpop.trf.xlu0
        %v1491 = vpop.trf.xlu0
        %v1492 = vpop.trf.xlu0
        %v1493 = vpop.trf.xlu0
        %v1494 = vpop.trf.xlu0
        %v1495 = vpop.trf.xlu0
        %v1496 = vpop.trf.xlu0
        %v1497 = vpop.trf.xlu0
        %1498 = vxpose.xlu0.b32.start [1/16] %v1420, 128
        %1499 = vxpose.xlu0.b32.cont [2/16] 0.0, 128
        %1500 = vxpose.xlu0.b32.cont [3/16] 0.0, 128
        %1501 = vxpose.xlu0.b32.cont [4/16] 0.0, 128
        %1502 = vxpose.xlu0.b32.cont [5/16] 0.0, 128
        %1503 = vxpose.xlu0.b32.cont [6/16] 0.0, 128
        %1504 = vxpose.xlu0.b32.cont [7/16] 0.0, 128
        %1505 = vxpose.xlu0.b32.cont [8/16] 0.0, 128
        %1506 = vxpose.xlu0.b32.cont [9/16] 0.0, 128
        %1507 = vxpose.xlu0.b32.cont [10/16] 0.0, 128
        %1508 = vxpose.xlu0.b32.cont [11/16] 0.0, 128
        %1509 = vxpose.xlu0.b32.cont [12/16] 0.0, 128
        %1510 = vxpose.xlu0.b32.cont [13/16] 0.0, 128
        %1511 = vxpose.xlu0.b32.cont [14/16] 0.0, 128
        %1512 = vxpose.xlu0.b32.cont [15/16] 0.0, 128
        %1513 = vxpose.xlu0.b32.end [16/16] 0.0, 128
        %v1514 = vpop.trf.xlu0
        %v1515 = vpop.trf.xlu0
        %v1516 = vpop.trf.xlu0
        %v1517 = vpop.trf.xlu0
        %v1518 = vpop.trf.xlu0
        %v1519 = vpop.trf.xlu0
        %v1520 = vpop.trf.xlu0
        %v1521 = vpop.trf.xlu0
        %v1522 = vpop.trf.xlu0
        %v1523 = vpop.trf.xlu0
        %v1524 = vpop.trf.xlu0
        %v1525 = vpop.trf.xlu0
        %v1526 = vpop.trf.xlu0
        %v1527 = vpop.trf.xlu0
        %v1528 = vpop.trf.xlu0
        %v1529 = vpop.trf.xlu0
        %1530 = vxpose.xlu0.b32.start [1/16] %v1421, 128
        %1531 = vxpose.xlu0.b32.cont [2/16] 0.0, 128
        %1532 = vxpose.xlu0.b32.cont [3/16] 0.0, 128
        %1533 = vxpose.xlu0.b32.cont [4/16] 0.0, 128
        %1534 = vxpose.xlu0.b32.cont [5/16] 0.0, 128
        %1535 = vxpose.xlu0.b32.cont [6/16] 0.0, 128
        %1536 = vxpose.xlu0.b32.cont [7/16] 0.0, 128
        %1537 = vxpose.xlu0.b32.cont [8/16] 0.0, 128
        %1538 = vxpose.xlu0.b32.cont [9/16] 0.0, 128
        %1539 = vxpose.xlu0.b32.cont [10/16] 0.0, 128
        %1540 = vxpose.xlu0.b32.cont [11/16] 0.0, 128
        %1541 = vxpose.xlu0.b32.cont [12/16] 0.0, 128
        %1542 = vxpose.xlu0.b32.cont [13/16] 0.0, 128
        %1543 = vxpose.xlu0.b32.cont [14/16] 0.0, 128
        %1544 = vxpose.xlu0.b32.cont [15/16] 0.0, 128
        %1545 = vxpose.xlu0.b32.end [16/16] 0.0, 128
        %v1546 = vpop.trf.xlu0
        %v1547 = vpop.trf.xlu0
        %v1548 = vpop.trf.xlu0
        %v1549 = vpop.trf.xlu0
        %v1550 = vpop.trf.xlu0
        %v1551 = vpop.trf.xlu0
        %v1552 = vpop.trf.xlu0
        %v1553 = vpop.trf.xlu0
        %v1554 = vpop.trf.xlu0
        %v1555 = vpop.trf.xlu0
        %v1556 = vpop.trf.xlu0
        %v1557 = vpop.trf.xlu0
        %v1558 = vpop.trf.xlu0
        %v1559 = vpop.trf.xlu0
        %v1560 = vpop.trf.xlu0
        %v1561 = vpop.trf.xlu0
        %v1562 = vpack.c.bf16 %v1450, %v1450
        %v1563 = vpack.c.bf16 %v1482, %v1482
        %v1564 = vpack.c.bf16 %v1514, %v1514
        %v1565 = vpack.c.bf16 %v1546, %v1546
        %v1566 = vpack.c.bf16 %v1422, %v1422
        %v1567 = vpack.c.bf16 %v1423, %v1423
        %v1568 = vpack.c.bf16 %v1424, %v1424
        %v1569 = vpack.c.bf16 %v1425, %v1425
        %v1571 = vsel %vm478, %v1562, 0
        %v1574 = vsel %vm482, %v1566, 0
        %1576 = vmatprep.subr.bf16.mxu0 0
        %1577 = vmatpush1.bf16.msra.mxu0 0
        %1578 = vmatprep.subr.bf16.mxu0 0
        %1579 = vmatpush1.bf16.msra.mxu0 0
        %1580 = vmatprep.subr.bf16.mxu0 0
        %1581 = vmatpush1.bf16.msra.mxu0 0
        %1582 = vmatprep.subr.bf16.mxu0 0
        %1583 = vmatpush1.bf16.msra.mxu0 0
        %1584 = vmatprep.subr.bf16.mxu0 0
        %1585 = vmatpush1.bf16.msra.mxu0 0
        %1586 = vmatprep.subr.bf16.mxu0 0
        %1587 = vmatpush1.bf16.msra.mxu0 0
        %1588 = vmatprep.subr.bf16.mxu0 0
        %1589 = vmatpush1.bf16.msra.mxu0 0
        %1590 = vmatprep.subr.bf16.mxu0 0
        %1591 = vmatpush1.bf16.msra.mxu0 %v1574
        %1592 = vmatprep.subr.bf16.mxu0 0
        %1593 = vmatpush2.bf16.msra.mxu0 0
        %1594 = vmatprep.subr.bf16.mxu0 0
        %1595 = vmatpush2.bf16.msra.mxu0 0
        %1596 = vmatprep.subr.bf16.mxu0 0
        %1597 = vmatpush2.bf16.msra.mxu0 0
        %1598 = vmatprep.subr.bf16.mxu0 0
        %1599 = vmatpush2.bf16.msra.mxu0 0
        %1600 = vmatprep.subr.bf16.mxu0 0
        %1601 = vmatpush2.bf16.msra.mxu0 0
        %1602 = vmatprep.subr.bf16.mxu0 0
        %1603 = vmatpush2.bf16.msra.mxu0 0
        %1604 = vmatprep.subr.bf16.mxu0 0
        %1605 = vmatpush2.bf16.msra.mxu0 0
        %1606 = vmatprep.subr.bf16.mxu0 0
        %1607 = vmatpush2.bf16.msra.mxu0 0
        %1608 = vmatprep.mubr.bf16.mxu0 0
        %1609 = vmatmul.mubr.bf16.gmra.mxu0 %v1571
        %v1610 = vpop.f32.mrf.mxu0
        %v1611 = vadd.f32 0.0, %v1610
        %v1612 = vpop.f32.mrf.mxu0
        %v1613 = vpop.f32.mrf.mxu0
        %v1614 = vpop.f32.mrf.mxu0
        %1615 = vdwg.mxu0
        %v1617 = vsel %vm478, %v1563, 0
        %v1620 = vsel %vm482, %v1567, 0
        %1622 = vmatprep.subr.bf16.mxu0 0
        %1623 = vmatpush1.bf16.msra.mxu0 0
        %1624 = vmatprep.subr.bf16.mxu0 0
        %1625 = vmatpush1.bf16.msra.mxu0 0
        %1626 = vmatprep.subr.bf16.mxu0 0
        %1627 = vmatpush1.bf16.msra.mxu0 0
        %1628 = vmatprep.subr.bf16.mxu0 0
        %1629 = vmatpush1.bf16.msra.mxu0 0
        %1630 = vmatprep.subr.bf16.mxu0 0
        %1631 = vmatpush1.bf16.msra.mxu0 0
        %1632 = vmatprep.subr.bf16.mxu0 0
        %1633 = vmatpush1.bf16.msra.mxu0 0
        %1634 = vmatprep.subr.bf16.mxu0 0
        %1635 = vmatpush1.bf16.msra.mxu0 0
        %1636 = vmatprep.subr.bf16.mxu0 0
        %1637 = vmatpush1.bf16.msra.mxu0 %v1620
        %1638 = vmatprep.subr.bf16.mxu0 0
        %1639 = vmatpush2.bf16.msra.mxu0 0
        %1640 = vmatprep.subr.bf16.mxu0 0
        %1641 = vmatpush2.bf16.msra.mxu0 0
        %1642 = vmatprep.subr.bf16.mxu0 0
        %1643 = vmatpush2.bf16.msra.mxu0 0
        %1644 = vmatprep.subr.bf16.mxu0 0
        %1645 = vmatpush2.bf16.msra.mxu0 0
        %1646 = vmatprep.subr.bf16.mxu0 0
        %1647 = vmatpush2.bf16.msra.mxu0 0
        %1648 = vmatprep.subr.bf16.mxu0 0
        %1649 = vmatpush2.bf16.msra.mxu0 0
        %1650 = vmatprep.subr.bf16.mxu0 0
        %1651 = vmatpush2.bf16.msra.mxu0 0
        %1652 = vmatprep.subr.bf16.mxu0 0
        %1653 = vmatpush2.bf16.msra.mxu0 0
        %1654 = vmatprep.mubr.bf16.mxu0 0
        %1655 = vmatmul.mubr.bf16.gmra.mxu0 %v1617
        %v1656 = vpop.f32.mrf.mxu0
        %v1657 = vadd.f32 0.0, %v1656
        %v1658 = vpop.f32.mrf.mxu0
        %v1659 = vpop.f32.mrf.mxu0
        %v1660 = vpop.f32.mrf.mxu0
        %1661 = vdwg.mxu0
        %v1663 = vsel %vm478, %v1564, 0
        %v1666 = vsel %vm482, %v1568, 0
        %1668 = vmatprep.subr.bf16.mxu0 0
        %1669 = vmatpush1.bf16.msra.mxu0 0
        %1670 = vmatprep.subr.bf16.mxu0 0
        %1671 = vmatpush1.bf16.msra.mxu0 0
        %1672 = vmatprep.subr.bf16.mxu0 0
        %1673 = vmatpush1.bf16.msra.mxu0 0
        %1674 = vmatprep.subr.bf16.mxu0 0
        %1675 = vmatpush1.bf16.msra.mxu0 0
        %1676 = vmatprep.subr.bf16.mxu0 0
        %1677 = vmatpush1.bf16.msra.mxu0 0
        %1678 = vmatprep.subr.bf16.mxu0 0
        %1679 = vmatpush1.bf16.msra.mxu0 0
        %1680 = vmatprep.subr.bf16.mxu0 0
        %1681 = vmatpush1.bf16.msra.mxu0 0
        %1682 = vmatprep.subr.bf16.mxu0 0
        %1683 = vmatpush1.bf16.msra.mxu0 %v1666
        %1684 = vmatprep.subr.bf16.mxu0 0
        %1685 = vmatpush2.bf16.msra.mxu0 0
        %1686 = vmatprep.subr.bf16.mxu0 0
        %1687 = vmatpush2.bf16.msra.mxu0 0
        %1688 = vmatprep.subr.bf16.mxu0 0
        %1689 = vmatpush2.bf16.msra.mxu0 0
        %1690 = vmatprep.subr.bf16.mxu0 0
        %1691 = vmatpush2.bf16.msra.mxu0 0
        %1692 = vmatprep.subr.bf16.mxu0 0
        %1693 = vmatpush2.bf16.msra.mxu0 0
        %1694 = vmatprep.subr.bf16.mxu0 0
        %1695 = vmatpush2.bf16.msra.mxu0 0
        %1696 = vmatprep.subr.bf16.mxu0 0
        %1697 = vmatpush2.bf16.msra.mxu0 0
        %1698 = vmatprep.subr.bf16.mxu0 0
        %1699 = vmatpush2.bf16.msra.mxu0 0
        %1700 = vmatprep.mubr.bf16.mxu0 0
        %1701 = vmatmul.mubr.bf16.gmra.mxu0 %v1663
        %v1702 = vpop.f32.mrf.mxu0
        %v1703 = vadd.f32 0.0, %v1702
        %v1704 = vpop.f32.mrf.mxu0
        %v1705 = vpop.f32.mrf.mxu0
        %v1706 = vpop.f32.mrf.mxu0
        %1707 = vdwg.mxu0
        %v1709 = vsel %vm478, %v1565, 0
        %v1712 = vsel %vm482, %v1569, 0
        %1714 = vmatprep.subr.bf16.mxu0 0
        %1715 = vmatpush1.bf16.msra.mxu0 0
        %1716 = vmatprep.subr.bf16.mxu0 0
        %1717 = vmatpush1.bf16.msra.mxu0 0
        %1718 = vmatprep.subr.bf16.mxu0 0
        %1719 = vmatpush1.bf16.msra.mxu0 0
        %1720 = vmatprep.subr.bf16.mxu0 0
        %1721 = vmatpush1.bf16.msra.mxu0 0
        %1722 = vmatprep.subr.bf16.mxu0 0
        %1723 = vmatpush1.bf16.msra.mxu0 0
        %1724 = vmatprep.subr.bf16.mxu0 0
        %1725 = vmatpush1.bf16.msra.mxu0 0
        %1726 = vmatprep.subr.bf16.mxu0 0
        %1727 = vmatpush1.bf16.msra.mxu0 0
        %1728 = vmatprep.subr.bf16.mxu0 0
        %1729 = vmatpush1.bf16.msra.mxu0 %v1712
        %1730 = vmatprep.subr.bf16.mxu0 0
        %1731 = vmatpush2.bf16.msra.mxu0 0
        %1732 = vmatprep.subr.bf16.mxu0 0
        %1733 = vmatpush2.bf16.msra.mxu0 0
        %1734 = vmatprep.subr.bf16.mxu0 0
        %1735 = vmatpush2.bf16.msra.mxu0 0
        %1736 = vmatprep.subr.bf16.mxu0 0
        %1737 = vmatpush2.bf16.msra.mxu0 0
        %1738 = vmatprep.subr.bf16.mxu0 0
        %1739 = vmatpush2.bf16.msra.mxu0 0
        %1740 = vmatprep.subr.bf16.mxu0 0
        %1741 = vmatpush2.bf16.msra.mxu0 0
        %1742 = vmatprep.subr.bf16.mxu0 0
        %1743 = vmatpush2.bf16.msra.mxu0 0
        %1744 = vmatprep.subr.bf16.mxu0 0
        %1745 = vmatpush2.bf16.msra.mxu0 0
        %1746 = vmatprep.mubr.bf16.mxu0 0
        %1747 = vmatmul.mubr.bf16.gmra.mxu0 %v1709
        %v1748 = vpop.f32.mrf.mxu0
        %v1749 = vadd.f32 0.0, %v1748
        %v1750 = vpop.f32.mrf.mxu0
        %v1751 = vpop.f32.mrf.mxu0
        %v1752 = vpop.f32.mrf.mxu0
        %1753 = vdwg.mxu0
        %v1754 = vmul.f32 %v1611, 0.35355338
        %v1755 = vmul.f32 %v1657, 0.35355338
        %v1756 = vmul.f32 %v1703, 0.35355338
        %v1757 = vmul.f32 %v1749, 0.35355338
        %v1758 = vsel %vm478, %v1754, -inf
        %1759 = vmax.xlane.f32.xlu0 %v1758
        %v1760 = vpop.xlane.xlu0 %1759
        %v1761 = vsel %vm478, %v1755, -inf
        %1762 = vmax.xlane.f32.xlu0 %v1761
        %v1763 = vpop.xlane.xlu0 %1762
        %v1764 = vsel %vm478, %v1756, -inf
        %1765 = vmax.xlane.f32.xlu0 %v1764
        %v1766 = vpop.xlane.xlu0 %1765
        %v1767 = vsel %vm478, %v1757, -inf
        %1768 = vmax.xlane.f32.xlu0 %v1767
        %v1769 = vpop.xlane.xlu0 %1768
        %v1770 = vsub.f32 %v1754, %v1760
        %v1771 = vsub.f32 %v1755, %v1763
        %v1772 = vsub.f32 %v1756, %v1766
        %v1773 = vsub.f32 %v1757, %v1769
        %v1774 = vmul.f32 %v1770, 1.442695
        %v1775 = vpow.pop %v1774
        %v1776 = vmul.f32 %v1771, 1.442695
        %v1777 = vpow.pop %v1776
        %v1778 = vmul.f32 %v1772, 1.442695
        %v1779 = vpow.pop %v1778
        %v1780 = vmul.f32 %v1773, 1.442695
        %v1781 = vpow.pop %v1780
        %v1782 = vsel %vm478, %v1775, 0.0
        %1783 = vadd.xlane.f32.xlu0 %v1782
        %v1784 = vpop.xlane.xlu0 %1783
        %v1785 = vsel %vm478, %v1777, 0.0
        %1786 = vadd.xlane.f32.xlu0 %v1785
        %v1787 = vpop.xlane.xlu0 %1786
        %v1788 = vsel %vm478, %v1779, 0.0
        %1789 = vadd.xlane.f32.xlu0 %v1788
        %v1790 = vpop.xlane.xlu0 %1789
        %v1791 = vsel %vm478, %v1781, 0.0
        %1792 = vadd.xlane.f32.xlu0 %v1791
        %v1793 = vpop.xlane.xlu0 %1792
        %v1794 = vrcp.pop %v1784
        %v1795 = vrcp.pop %v1787
        %v1796 = vrcp.pop %v1790
        %v1797 = vrcp.pop %v1793
        %v1798 = vmul.f32 %v1775, %v1794
        %v1799 = vmul.f32 %v1777, %v1795
        %v1800 = vmul.f32 %v1779, %v1796
        %v1801 = vmul.f32 %v1781, %v1797
        %v1802 = vpack.c.bf16 %v1798, %v1798
        %v1803 = vpack.c.bf16 %v1799, %v1799
        %v1804 = vpack.c.bf16 %v1800, %v1800
        %v1805 = vpack.c.bf16 %v1801, %v1801
        %v1806 = vpack.c.bf16 %v1426, %v1426
        %v1807 = vpack.c.bf16 %v1427, %v1427
        %v1808 = vpack.c.bf16 %v1428, %v1428
        %v1809 = vpack.c.bf16 %v1429, %v1429
        %v1811 = vsel %vm478, %v1802, 0
        %v1814 = vsel %vm478, %v1806, 0
        %1816 = vmatprep.subr.bf16.mxu0 0
        %1817 = vmatpush1.bf16.xpose.msra.mxu0 0
        %1818 = vmatprep.subr.bf16.mxu0 0
        %1819 = vmatpush1.bf16.xpose.msra.mxu0 0
        %1820 = vmatprep.subr.bf16.mxu0 0
        %1821 = vmatpush1.bf16.xpose.msra.mxu0 0
        %1822 = vmatprep.subr.bf16.mxu0 0
        %1823 = vmatpush1.bf16.xpose.msra.mxu0 0
        %1824 = vmatprep.subr.bf16.mxu0 0
        %1825 = vmatpush1.bf16.xpose.msra.mxu0 0
        %1826 = vmatprep.subr.bf16.mxu0 0
        %1827 = vmatpush1.bf16.xpose.msra.mxu0 0
        %1828 = vmatprep.subr.bf16.mxu0 0
        %1829 = vmatpush1.bf16.xpose.msra.mxu0 0
        %1830 = vmatprep.subr.bf16.mxu0 0
        %1831 = vmatpush1.bf16.xpose.msra.mxu0 %v1814
        %1832 = vmatprep.subr.bf16.mxu0 0
        %1833 = vmatpush2.bf16.xpose.msra.mxu0 0
        %1834 = vmatprep.subr.bf16.mxu0 0
        %1835 = vmatpush2.bf16.xpose.msra.mxu0 0
        %1836 = vmatprep.subr.bf16.mxu0 0
        %1837 = vmatpush2.bf16.xpose.msra.mxu0 0
        %1838 = vmatprep.subr.bf16.mxu0 0
        %1839 = vmatpush2.bf16.xpose.msra.mxu0 0
        %1840 = vmatprep.subr.bf16.mxu0 0
        %1841 = vmatpush2.bf16.xpose.msra.mxu0 0
        %1842 = vmatprep.subr.bf16.mxu0 0
        %1843 = vmatpush2.bf16.xpose.msra.mxu0 0
        %1844 = vmatprep.subr.bf16.mxu0 0
        %1845 = vmatpush2.bf16.xpose.msra.mxu0 0
        %1846 = vmatprep.subr.bf16.mxu0 0
        %1847 = vmatpush2.bf16.xpose.msra.mxu0 0
        %1848 = vmatprep.mubr.bf16.mxu0 0
        %1849 = vmatmul.mubr.bf16.gmra.mxu0 %v1811
        %v1850 = vpop.f32.mrf.mxu0
        %v1851 = vadd.f32 0.0, %v1850
        %v1852 = vpop.f32.mrf.mxu0
        %v1853 = vpop.f32.mrf.mxu0
        %v1854 = vpop.f32.mrf.mxu0
        %1855 = vdwg.mxu0
        %v1857 = vsel %vm478, %v1803, 0
        %v1860 = vsel %vm478, %v1807, 0
        %1862 = vmatprep.subr.bf16.mxu0 0
        %1863 = vmatpush1.bf16.xpose.msra.mxu0 0
        %1864 = vmatprep.subr.bf16.mxu0 0
        %1865 = vmatpush1.bf16.xpose.msra.mxu0 0
        %1866 = vmatprep.subr.bf16.mxu0 0
        %1867 = vmatpush1.bf16.xpose.msra.mxu0 0
        %1868 = vmatprep.subr.bf16.mxu0 0
        %1869 = vmatpush1.bf16.xpose.msra.mxu0 0
        %1870 = vmatprep.subr.bf16.mxu0 0
        %1871 = vmatpush1.bf16.xpose.msra.mxu0 0
        %1872 = vmatprep.subr.bf16.mxu0 0
        %1873 = vmatpush1.bf16.xpose.msra.mxu0 0
        %1874 = vmatprep.subr.bf16.mxu0 0
        %1875 = vmatpush1.bf16.xpose.msra.mxu0 0
        %1876 = vmatprep.subr.bf16.mxu0 0
        %1877 = vmatpush1.bf16.xpose.msra.mxu0 %v1860
        %1878 = vmatprep.subr.bf16.mxu0 0
        %1879 = vmatpush2.bf16.xpose.msra.mxu0 0
        %1880 = vmatprep.subr.bf16.mxu0 0
        %1881 = vmatpush2.bf16.xpose.msra.mxu0 0
        %1882 = vmatprep.subr.bf16.mxu0 0
        %1883 = vmatpush2.bf16.xpose.msra.mxu0 0
        %1884 = vmatprep.subr.bf16.mxu0 0
        %1885 = vmatpush2.bf16.xpose.msra.mxu0 0
        %1886 = vmatprep.subr.bf16.mxu0 0
        %1887 = vmatpush2.bf16.xpose.msra.mxu0 0
        %1888 = vmatprep.subr.bf16.mxu0 0
        %1889 = vmatpush2.bf16.xpose.msra.mxu0 0
        %1890 = vmatprep.subr.bf16.mxu0 0
        %1891 = vmatpush2.bf16.xpose.msra.mxu0 0
        %1892 = vmatprep.subr.bf16.mxu0 0
        %1893 = vmatpush2.bf16.xpose.msra.mxu0 0
        %1894 = vmatprep.mubr.bf16.mxu0 0
        %1895 = vmatmul.mubr.bf16.gmra.mxu0 %v1857
        %v1896 = vpop.f32.mrf.mxu0
        %v1897 = vadd.f32 0.0, %v1896
        %v1898 = vpop.f32.mrf.mxu0
        %v1899 = vpop.f32.mrf.mxu0
        %v1900 = vpop.f32.mrf.mxu0
        %1901 = vdwg.mxu0
        %v1903 = vsel %vm478, %v1804, 0
        %v1906 = vsel %vm478, %v1808, 0
        %1908 = vmatprep.subr.bf16.mxu0 0
        %1909 = vmatpush1.bf16.xpose.msra.mxu0 0
        %1910 = vmatprep.subr.bf16.mxu0 0
        %1911 = vmatpush1.bf16.xpose.msra.mxu0 0
        %1912 = vmatprep.subr.bf16.mxu0 0
        %1913 = vmatpush1.bf16.xpose.msra.mxu0 0
        %1914 = vmatprep.subr.bf16.mxu0 0
        %1915 = vmatpush1.bf16.xpose.msra.mxu0 0
        %1916 = vmatprep.subr.bf16.mxu0 0
        %1917 = vmatpush1.bf16.xpose.msra.mxu0 0
        %1918 = vmatprep.subr.bf16.mxu0 0
        %1919 = vmatpush1.bf16.xpose.msra.mxu0 0
        %1920 = vmatprep.subr.bf16.mxu0 0
        %1921 = vmatpush1.bf16.xpose.msra.mxu0 0
        %1922 = vmatprep.subr.bf16.mxu0 0
        %1923 = vmatpush1.bf16.xpose.msra.mxu0 %v1906
        %1924 = vmatprep.subr.bf16.mxu0 0
        %1925 = vmatpush2.bf16.xpose.msra.mxu0 0
        %1926 = vmatprep.subr.bf16.mxu0 0
        %1927 = vmatpush2.bf16.xpose.msra.mxu0 0
        %1928 = vmatprep.subr.bf16.mxu0 0
        %1929 = vmatpush2.bf16.xpose.msra.mxu0 0
        %1930 = vmatprep.subr.bf16.mxu0 0
        %1931 = vmatpush2.bf16.xpose.msra.mxu0 0
        %1932 = vmatprep.subr.bf16.mxu0 0
        %1933 = vmatpush2.bf16.xpose.msra.mxu0 0
        %1934 = vmatprep.subr.bf16.mxu0 0
        %1935 = vmatpush2.bf16.xpose.msra.mxu0 0
        %1936 = vmatprep.subr.bf16.mxu0 0
        %1937 = vmatpush2.bf16.xpose.msra.mxu0 0
        %1938 = vmatprep.subr.bf16.mxu0 0
        %1939 = vmatpush2.bf16.xpose.msra.mxu0 0
        %1940 = vmatprep.mubr.bf16.mxu0 0
        %1941 = vmatmul.mubr.bf16.gmra.mxu0 %v1903
        %v1942 = vpop.f32.mrf.mxu0
        %v1943 = vadd.f32 0.0, %v1942
        %v1944 = vpop.f32.mrf.mxu0
        %v1945 = vpop.f32.mrf.mxu0
        %v1946 = vpop.f32.mrf.mxu0
        %1947 = vdwg.mxu0
        %v1949 = vsel %vm478, %v1805, 0
        %v1952 = vsel %vm478, %v1809, 0
        %1954 = vmatprep.subr.bf16.mxu0 0
        %1955 = vmatpush1.bf16.xpose.msra.mxu0 0
        %1956 = vmatprep.subr.bf16.mxu0 0
        %1957 = vmatpush1.bf16.xpose.msra.mxu0 0
        %1958 = vmatprep.subr.bf16.mxu0 0
        %1959 = vmatpush1.bf16.xpose.msra.mxu0 0
        %1960 = vmatprep.subr.bf16.mxu0 0
        %1961 = vmatpush1.bf16.xpose.msra.mxu0 0
        %1962 = vmatprep.subr.bf16.mxu0 0
        %1963 = vmatpush1.bf16.xpose.msra.mxu0 0
        %1964 = vmatprep.subr.bf16.mxu0 0
        %1965 = vmatpush1.bf16.xpose.msra.mxu0 0
        %1966 = vmatprep.subr.bf16.mxu0 0
        %1967 = vmatpush1.bf16.xpose.msra.mxu0 0
        %1968 = vmatprep.subr.bf16.mxu0 0
        %1969 = vmatpush1.bf16.xpose.msra.mxu0 %v1952
        %1970 = vmatprep.subr.bf16.mxu0 0
        %1971 = vmatpush2.bf16.xpose.msra.mxu0 0
        %1972 = vmatprep.subr.bf16.mxu0 0
        %1973 = vmatpush2.bf16.xpose.msra.mxu0 0
        %1974 = vmatprep.subr.bf16.mxu0 0
        %1975 = vmatpush2.bf16.xpose.msra.mxu0 0
        %1976 = vmatprep.subr.bf16.mxu0 0
        %1977 = vmatpush2.bf16.xpose.msra.mxu0 0
        %1978 = vmatprep.subr.bf16.mxu0 0
        %1979 = vmatpush2.bf16.xpose.msra.mxu0 0
        %1980 = vmatprep.subr.bf16.mxu0 0
        %1981 = vmatpush2.bf16.xpose.msra.mxu0 0
        %1982 = vmatprep.subr.bf16.mxu0 0
        %1983 = vmatpush2.bf16.xpose.msra.mxu0 0
        %1984 = vmatprep.subr.bf16.mxu0 0
        %1985 = vmatpush2.bf16.xpose.msra.mxu0 0
        %1986 = vmatprep.mubr.bf16.mxu0 0
        %1987 = vmatmul.mubr.bf16.gmra.mxu0 %v1949
        %v1988 = vpop.f32.mrf.mxu0
        %v1989 = vadd.f32 0.0, %v1988
        %v1990 = vpop.f32.mrf.mxu0
        %v1991 = vpop.f32.mrf.mxu0
        %v1992 = vpop.f32.mrf.mxu0
        %1993 = vdwg.mxu0
        %1994 = vxpose.xlu0.b32.start [1/16] %v1851, 128
        %1995 = vxpose.xlu0.b32.cont [2/16] 0.0, 128
        %1996 = vxpose.xlu0.b32.cont [3/16] 0.0, 128
        %1997 = vxpose.xlu0.b32.cont [4/16] 0.0, 128
        %1998 = vxpose.xlu0.b32.cont [5/16] 0.0, 128
        %1999 = vxpose.xlu0.b32.cont [6/16] 0.0, 128
        %2000 = vxpose.xlu0.b32.cont [7/16] 0.0, 128
        %2001 = vxpose.xlu0.b32.cont [8/16] 0.0, 128
        %2002 = vxpose.xlu0.b32.cont [9/16] 0.0, 128
        %2003 = vxpose.xlu0.b32.cont [10/16] 0.0, 128
        %2004 = vxpose.xlu0.b32.cont [11/16] 0.0, 128
        %2005 = vxpose.xlu0.b32.cont [12/16] 0.0, 128
        %2006 = vxpose.xlu0.b32.cont [13/16] 0.0, 128
        %2007 = vxpose.xlu0.b32.cont [14/16] 0.0, 128
        %2008 = vxpose.xlu0.b32.cont [15/16] 0.0, 128
        %2009 = vxpose.xlu0.b32.end [16/16] 0.0, 128
        %v2010 = vpop.trf.xlu0
        %v2011 = vpop.trf.xlu0
        %v2012 = vpop.trf.xlu0
        %v2013 = vpop.trf.xlu0
        %v2014 = vpop.trf.xlu0
        %v2015 = vpop.trf.xlu0
        %v2016 = vpop.trf.xlu0
        %v2017 = vpop.trf.xlu0
        %v2018 = vpop.trf.xlu0
        %v2019 = vpop.trf.xlu0
        %v2020 = vpop.trf.xlu0
        %v2021 = vpop.trf.xlu0
        %v2022 = vpop.trf.xlu0
        %v2023 = vpop.trf.xlu0
        %v2024 = vpop.trf.xlu0
        %v2025 = vpop.trf.xlu0
        %2026 = vxpose.xlu0.b32.start [1/16] %v1897, 128
        %2027 = vxpose.xlu0.b32.cont [2/16] 0.0, 128
        %2028 = vxpose.xlu0.b32.cont [3/16] 0.0, 128
        %2029 = vxpose.xlu0.b32.cont [4/16] 0.0, 128
        %2030 = vxpose.xlu0.b32.cont [5/16] 0.0, 128
        %2031 = vxpose.xlu0.b32.cont [6/16] 0.0, 128
        %2032 = vxpose.xlu0.b32.cont [7/16] 0.0, 128
        %2033 = vxpose.xlu0.b32.cont [8/16] 0.0, 128
        %2034 = vxpose.xlu0.b32.cont [9/16] 0.0, 128
        %2035 = vxpose.xlu0.b32.cont [10/16] 0.0, 128
        %2036 = vxpose.xlu0.b32.cont [11/16] 0.0, 128
        %2037 = vxpose.xlu0.b32.cont [12/16] 0.0, 128
        %2038 = vxpose.xlu0.b32.cont [13/16] 0.0, 128
        %2039 = vxpose.xlu0.b32.cont [14/16] 0.0, 128
        %2040 = vxpose.xlu0.b32.cont [15/16] 0.0, 128
        %2041 = vxpose.xlu0.b32.end [16/16] 0.0, 128
        %v2042 = vpop.trf.xlu0
        %v2043 = vpop.trf.xlu0
        %v2044 = vpop.trf.xlu0
        %v2045 = vpop.trf.xlu0
        %v2046 = vpop.trf.xlu0
        %v2047 = vpop.trf.xlu0
        %v2048 = vpop.trf.xlu0
        %v2049 = vpop.trf.xlu0
        %v2050 = vpop.trf.xlu0
        %v2051 = vpop.trf.xlu0
        %v2052 = vpop.trf.xlu0
        %v2053 = vpop.trf.xlu0
        %v2054 = vpop.trf.xlu0
        %v2055 = vpop.trf.xlu0
        %v2056 = vpop.trf.xlu0
        %v2057 = vpop.trf.xlu0
        %2058 = vxpose.xlu0.b32.start [1/16] %v1943, 128
        %2059 = vxpose.xlu0.b32.cont [2/16] 0.0, 128
        %2060 = vxpose.xlu0.b32.cont [3/16] 0.0, 128
        %2061 = vxpose.xlu0.b32.cont [4/16] 0.0, 128
        %2062 = vxpose.xlu0.b32.cont [5/16] 0.0, 128
        %2063 = vxpose.xlu0.b32.cont [6/16] 0.0, 128
        %2064 = vxpose.xlu0.b32.cont [7/16] 0.0, 128
        %2065 = vxpose.xlu0.b32.cont [8/16] 0.0, 128
        %2066 = vxpose.xlu0.b32.cont [9/16] 0.0, 128
        %2067 = vxpose.xlu0.b32.cont [10/16] 0.0, 128
        %2068 = vxpose.xlu0.b32.cont [11/16] 0.0, 128
        %2069 = vxpose.xlu0.b32.cont [12/16] 0.0, 128
        %2070 = vxpose.xlu0.b32.cont [13/16] 0.0, 128
        %2071 = vxpose.xlu0.b32.cont [14/16] 0.0, 128
        %2072 = vxpose.xlu0.b32.cont [15/16] 0.0, 128
        %2073 = vxpose.xlu0.b32.end [16/16] 0.0, 128
        %v2074 = vpop.trf.xlu0
        %v2075 = vpop.trf.xlu0
        %v2076 = vpop.trf.xlu0
        %v2077 = vpop.trf.xlu0
        %v2078 = vpop.trf.xlu0
        %v2079 = vpop.trf.xlu0
        %v2080 = vpop.trf.xlu0
        %v2081 = vpop.trf.xlu0
        %v2082 = vpop.trf.xlu0
        %v2083 = vpop.trf.xlu0
        %v2084 = vpop.trf.xlu0
        %v2085 = vpop.trf.xlu0
        %v2086 = vpop.trf.xlu0
        %v2087 = vpop.trf.xlu0
        %v2088 = vpop.trf.xlu0
        %v2089 = vpop.trf.xlu0
        %2090 = vxpose.xlu0.b32.start [1/16] %v1989, 128
        %2091 = vxpose.xlu0.b32.cont [2/16] 0.0, 128
        %2092 = vxpose.xlu0.b32.cont [3/16] 0.0, 128
        %2093 = vxpose.xlu0.b32.cont [4/16] 0.0, 128
        %2094 = vxpose.xlu0.b32.cont [5/16] 0.0, 128
        %2095 = vxpose.xlu0.b32.cont [6/16] 0.0, 128
        %2096 = vxpose.xlu0.b32.cont [7/16] 0.0, 128
        %2097 = vxpose.xlu0.b32.cont [8/16] 0.0, 128
        %2098 = vxpose.xlu0.b32.cont [9/16] 0.0, 128
        %2099 = vxpose.xlu0.b32.cont [10/16] 0.0, 128
        %2100 = vxpose.xlu0.b32.cont [11/16] 0.0, 128
        %2101 = vxpose.xlu0.b32.cont [12/16] 0.0, 128
        %2102 = vxpose.xlu0.b32.cont [13/16] 0.0, 128
        %2103 = vxpose.xlu0.b32.cont [14/16] 0.0, 128
        %2104 = vxpose.xlu0.b32.cont [15/16] 0.0, 128
        %2105 = vxpose.xlu0.b32.end [16/16] 0.0, 128
        %v2106 = vpop.trf.xlu0
        %v2107 = vpop.trf.xlu0
        %v2108 = vpop.trf.xlu0
        %v2109 = vpop.trf.xlu0
        %v2110 = vpop.trf.xlu0
        %v2111 = vpop.trf.xlu0
        %v2112 = vpop.trf.xlu0
        %v2113 = vpop.trf.xlu0
        %v2114 = vpop.trf.xlu0
        %v2115 = vpop.trf.xlu0
        %v2116 = vpop.trf.xlu0
        %v2117 = vpop.trf.xlu0
        %v2118 = vpop.trf.xlu0
        %v2119 = vpop.trf.xlu0
        %v2120 = vpop.trf.xlu0
        %v2121 = vpop.trf.xlu0
        %2122 = vxpose.xlu0.b32.start [1/16] %v2010, 128
        %2123 = vxpose.xlu0.b32.cont [2/16] %v2042, 128
        %2124 = vxpose.xlu0.b32.cont [3/16] %v2074, 128
        %2125 = vxpose.xlu0.b32.cont [4/16] %v2106, 128
        %2126 = vxpose.xlu0.b32.cont [5/16] 0.0, 128
        %2127 = vxpose.xlu0.b32.cont [6/16] 0.0, 128
        %2128 = vxpose.xlu0.b32.cont [7/16] 0.0, 128
        %2129 = vxpose.xlu0.b32.cont [8/16] 0.0, 128
        %2130 = vxpose.xlu0.b32.cont [9/16] 0.0, 128
        %2131 = vxpose.xlu0.b32.cont [10/16] 0.0, 128
        %2132 = vxpose.xlu0.b32.cont [11/16] 0.0, 128
        %2133 = vxpose.xlu0.b32.cont [12/16] 0.0, 128
        %2134 = vxpose.xlu0.b32.cont [13/16] 0.0, 128
        %2135 = vxpose.xlu0.b32.cont [14/16] 0.0, 128
        %2136 = vxpose.xlu0.b32.cont [15/16] 0.0, 128
        %2137 = vxpose.xlu0.b32.end [16/16] 0.0, 128
        %v2138 = vpop.trf.xlu0
        %v2139 = vpop.trf.xlu0
        %v2140 = vpop.trf.xlu0
        %v2141 = vpop.trf.xlu0
        %v2142 = vpop.trf.xlu0
        %v2143 = vpop.trf.xlu0
        %v2144 = vpop.trf.xlu0
        %v2145 = vpop.trf.xlu0
        %v2146 = vpop.trf.xlu0
        %v2147 = vpop.trf.xlu0
        %v2148 = vpop.trf.xlu0
        %v2149 = vpop.trf.xlu0
        %v2150 = vpop.trf.xlu0
        %v2151 = vpop.trf.xlu0
        %v2152 = vpop.trf.xlu0
        %v2153 = vpop.trf.xlu0
        %v2154 = vld [vmem:[#allocation7 + $0x60] sm:$0xf]
        %v2155 = vld [vmem:[#allocation7 + $0x64] sm:$0xf]
        %v2156 = vld [vmem:[#allocation7 + $0x68] sm:$0xf]
        %v2157 = vld [vmem:[#allocation7 + $0x6c] sm:$0xf]
        %v2158 = vpack.c.bf16 %v2138, %v2138
        %v2159 = vld [vmem:[#allocation5 + $0xb] sm:$0x1]
        %v2160 = vlaneseq
        %v2161 = vshrl.u32 %v2160, 7
        %v2162 = vsub.s32 0, %v2161
        %v2163 = vrot.slane %v2159, %v2162
        %v2168 = vunpack.c.l.b16 %v2154
        %v2169 = vunpack.c.l.b16 %v2155
        %v2170 = vunpack.c.l.b16 %v2156
        %v2171 = vunpack.c.l.b16 %v2157
        %v2172 = vpack.c.b16 %v2169, %v2168
        %v2173 = vpack.c.b16 %v2171, %v2170
        %v2177 = vsel %vm220, %v2158, 0
        %2179 = vmatprep.subr.bf16.mxu0 0
        %2180 = vmatpush1.bf16.msra.mxu0 0
        %2181 = vmatprep.subr.bf16.mxu0 0
        %2182 = vmatpush1.bf16.msra.mxu0 0
        %2183 = vmatprep.subr.bf16.mxu0 0
        %2184 = vmatpush1.bf16.msra.mxu0 0
        %2185 = vmatprep.subr.bf16.mxu0 0
        %2186 = vmatpush1.bf16.msra.mxu0 0
        %2187 = vmatprep.subr.bf16.mxu0 0
        %2188 = vmatpush1.bf16.msra.mxu0 0
        %2189 = vmatprep.subr.bf16.mxu0 0
        %2190 = vmatpush1.bf16.msra.mxu0 0
        %2191 = vmatprep.subr.bf16.mxu0 0
        %2192 = vmatpush1.bf16.msra.mxu0 %v2173
        %2193 = vmatprep.subr.bf16.mxu0 0
        %2194 = vmatpush1.bf16.msra.mxu0 %v2172
        %2195 = vmatprep.subr.bf16.mxu0 0
        %2196 = vmatpush2.bf16.msra.mxu0 0
        %2197 = vmatprep.subr.bf16.mxu0 0
        %2198 = vmatpush2.bf16.msra.mxu0 0
        %2199 = vmatprep.subr.bf16.mxu0 0
        %2200 = vmatpush2.bf16.msra.mxu0 0
        %2201 = vmatprep.subr.bf16.mxu0 0
        %2202 = vmatpush2.bf16.msra.mxu0 0
        %2203 = vmatprep.subr.bf16.mxu0 0
        %2204 = vmatpush2.bf16.msra.mxu0 0
        %2205 = vmatprep.subr.bf16.mxu0 0
        %2206 = vmatpush2.bf16.msra.mxu0 0
        %2207 = vmatprep.subr.bf16.mxu0 0
        %2208 = vmatpush2.bf16.msra.mxu0 0
        %2209 = vmatprep.subr.bf16.mxu0 0
        %2210 = vmatpush2.bf16.msra.mxu0 0
        %2211 = vmatprep.mubr.bf16.mxu0 0
        %2212 = vmatmul.mubr.bf16.gmra.mxu0 %v2177
        %v2213 = vpop.f32.mrf.mxu0
        %v2214 = vadd.f32 %v2163, %v2213
        %v2215 = vpop.f32.mrf.mxu0
        %v2216 = vpop.f32.mrf.mxu0
        %v2217 = vpop.f32.mrf.mxu0
        %2218 = vdwg.mxu0
        %v2219 = vadd.f32 %v2214, %v1336
        %v2220 = vld [vmem:[#allocation5 + $0xc] sm:$0x1]
        %v2221 = vld [vmem:[#allocation5 + $0xd] sm:$0x1]
        %v2222 = vsel %vm220, %v2219, 0.0
        %2223 = vadd.xlane.f32.xlu0 %v2222
        %v2224 = vpop.xlane.xlu0 %2223
        %v2225 = vmul.f32 %v2224, %v224
        %v2226 = vsub.f32 %v2219, %v2225
        %v2227 = vmul.f32 %v2226, %v2226
        %v2228 = vsel %vm220, %v2227, 0.0
        %2229 = vadd.xlane.f32.xlu0 %v2228
        %v2230 = vpop.xlane.xlu0 %2229
        %v2231 = vmul.f32 %v2230, %v224
        %v2232 = vadd.f32 %v2231, 1e-12
        %v2233 = vrsqrt.pop %v2232
        %v2234 = vmul.f32 %v2226, %v2233
        %v2235 = vlaneseq
        %v2236 = vshrl.u32 %v2235, 7
        %v2237 = vsub.s32 0, %v2236
        %v2238 = vrot.slane %v2220, %v2237
        %v2239 = vmul.f32 %v2234, %v2238
        %v2240 = vlaneseq
        %v2241 = vshrl.u32 %v2240, 7
        %v2242 = vsub.s32 0, %v2241
        %v2243 = vrot.slane %v2221, %v2242
        %v2244 = vadd.f32 %v2239, %v2243
        %v2245 = vld [vmem:[#allocation7 + $0x70] sm:$0xf]
        %v2246 = vld [vmem:[#allocation7 + $0x74] sm:$0xf]
        %v2247 = vld [vmem:[#allocation7 + $0x78] sm:$0xf]
        %v2248 = vld [vmem:[#allocation7 + $0x7c] sm:$0xf]
        %v2249 = vpack.c.bf16 %v2244, %v2244
        %v2250 = vld [vmem:[#allocation5 + $0xe] sm:$0x1]
        %v2251 = vlaneseq
        %v2252 = vshrl.u32 %v2251, 7
        %v2253 = vsub.s32 0, %v2252
        %v2254 = vrot.slane %v2250, %v2253
        %v2259 = vunpack.c.l.b16 %v2245
        %v2260 = vunpack.c.l.b16 %v2246
        %v2261 = vunpack.c.l.b16 %v2247
        %v2262 = vunpack.c.l.b16 %v2248
        %v2263 = vpack.c.b16 %v2260, %v2259
        %v2264 = vpack.c.b16 %v2262, %v2261
        %v2268 = vsel %vm220, %v2249, 0
        %2270 = vmatprep.subr.bf16.mxu0 0
        %2271 = vmatpush1.bf16.msra.mxu0 0
        %2272 = vmatprep.subr.bf16.mxu0 0
        %2273 = vmatpush1.bf16.msra.mxu0 0
        %2274 = vmatprep.subr.bf16.mxu0 0
        %2275 = vmatpush1.bf16.msra.mxu0 0
        %2276 = vmatprep.subr.bf16.mxu0 0
        %2277 = vmatpush1.bf16.msra.mxu0 0
        %2278 = vmatprep.subr.bf16.mxu0 0
        %2279 = vmatpush1.bf16.msra.mxu0 0
        %2280 = vmatprep.subr.bf16.mxu0 0
        %2281 = vmatpush1.bf16.msra.mxu0 0
        %2282 = vmatprep.subr.bf16.mxu0 0
        %2283 = vmatpush1.bf16.msra.mxu0 %v2264
        %2284 = vmatprep.subr.bf16.mxu0 0
        %2285 = vmatpush1.bf16.msra.mxu0 %v2263
        %2286 = vmatprep.subr.bf16.mxu0 0
        %2287 = vmatpush2.bf16.msra.mxu0 0
        %2288 = vmatprep.subr.bf16.mxu0 0
        %2289 = vmatpush2.bf16.msra.mxu0 0
        %2290 = vmatprep.subr.bf16.mxu0 0
        %2291 = vmatpush2.bf16.msra.mxu0 0
        %2292 = vmatprep.subr.bf16.mxu0 0
        %2293 = vmatpush2.bf16.msra.mxu0 0
        %2294 = vmatprep.subr.bf16.mxu0 0
        %2295 = vmatpush2.bf16.msra.mxu0 0
        %2296 = vmatprep.subr.bf16.mxu0 0
        %2297 = vmatpush2.bf16.msra.mxu0 0
        %2298 = vmatprep.subr.bf16.mxu0 0
        %2299 = vmatpush2.bf16.msra.mxu0 0
        %2300 = vmatprep.subr.bf16.mxu0 0
        %2301 = vmatpush2.bf16.msra.mxu0 0
        %2302 = vmatprep.mubr.bf16.mxu0 0
        %2303 = vmatmul.mubr.bf16.gmra.mxu0 %v2268
        %v2304 = vpop.f32.mrf.mxu0
        %v2305 = vadd.f32 %v2254, %v2304
        %v2306 = vpop.f32.mrf.mxu0
        %v2307 = vpop.f32.mrf.mxu0
        %v2308 = vpop.f32.mrf.mxu0
        %2309 = vdwg.mxu0
        %v2310 = vmul.f32 %v2305, %v2305
        %v2311 = vmul.f32 %v2305, %v2310
        %v2312 = vmul.f32 %v2311, 0.044715
        %v2313 = vadd.f32 %v2305, %v2312
        %v2314 = vmul.f32 %v2313, 0.7978846
        %v2315 = vtanh.pop %v2314
        %v2316 = vadd.f32 %v2315, 1.0
        %v2317 = vmul.f32 %v2316, 0.5
        %v2318 = vmul.f32 %v2305, %v2317
        %v2319 = vld [vmem:[#allocation7 + $0x80] sm:$0xf]
        %v2320 = vld [vmem:[#allocation7 + $0x84] sm:$0xf]
        %v2321 = vld [vmem:[#allocation7 + $0x88] sm:$0xf]
        %v2322 = vld [vmem:[#allocation7 + $0x8c] sm:$0xf]
        %v2323 = vld [vmem:[#allocation7 + $0x90] sm:$0xf]
        %v2324 = vld [vmem:[#allocation7 + $0x94] sm:$0xf]
        %v2325 = vld [vmem:[#allocation7 + $0x98] sm:$0xf]
        %v2326 = vld [vmem:[#allocation7 + $0x9c] sm:$0xf]
        %v2327 = vpack.c.bf16 %v2318, %v2318
        %v2328 = vld [vmem:[#allocation5 + $0xf] sm:$0x1]
        %v2329 = vlaneseq
        %v2330 = vshrl.u32 %v2329, 7
        %v2331 = vsub.s32 0, %v2330
        %v2332 = vrot.slane %v2328, %v2331
        %v2341 = vunpack.c.l.b16 %v2319
        %v2342 = vunpack.c.l.b16 %v2320
        %v2343 = vunpack.c.l.b16 %v2321
        %v2344 = vunpack.c.l.b16 %v2322
        %v2345 = vunpack.c.l.b16 %v2323
        %v2346 = vunpack.c.l.b16 %v2324
        %v2347 = vunpack.c.l.b16 %v2325
        %v2348 = vunpack.c.l.b16 %v2326
        %v2349 = vpack.c.b16 %v2342, %v2341
        %v2350 = vpack.c.b16 %v2344, %v2343
        %v2351 = vpack.c.b16 %v2346, %v2345
        %v2352 = vpack.c.b16 %v2348, %v2347
        %v2358 = vsel %vm1267, %v2327, 0
        %2360 = vmatprep.subr.bf16.mxu0 0
        %2361 = vmatpush1.bf16.msra.mxu0 0
        %2362 = vmatprep.subr.bf16.mxu0 0
        %2363 = vmatpush1.bf16.msra.mxu0 0
        %2364 = vmatprep.subr.bf16.mxu0 0
        %2365 = vmatpush1.bf16.msra.mxu0 0
        %2366 = vmatprep.subr.bf16.mxu0 0
        %2367 = vmatpush1.bf16.msra.mxu0 0
        %2368 = vmatprep.subr.bf16.mxu0 0
        %2369 = vmatpush1.bf16.msra.mxu0 %v2352
        %2370 = vmatprep.subr.bf16.mxu0 0
        %2371 = vmatpush1.bf16.msra.mxu0 %v2351
        %2372 = vmatprep.subr.bf16.mxu0 0
        %2373 = vmatpush1.bf16.msra.mxu0 %v2350
        %2374 = vmatprep.subr.bf16.mxu0 0
        %2375 = vmatpush1.bf16.msra.mxu0 %v2349
        %2376 = vmatprep.subr.bf16.mxu0 0
        %2377 = vmatpush2.bf16.msra.mxu0 0
        %2378 = vmatprep.subr.bf16.mxu0 0
        %2379 = vmatpush2.bf16.msra.mxu0 0
        %2380 = vmatprep.subr.bf16.mxu0 0
        %2381 = vmatpush2.bf16.msra.mxu0 0
        %2382 = vmatprep.subr.bf16.mxu0 0
        %2383 = vmatpush2.bf16.msra.mxu0 0
        %2384 = vmatprep.subr.bf16.mxu0 0
        %2385 = vmatpush2.bf16.msra.mxu0 0
        %2386 = vmatprep.subr.bf16.mxu0 0
        %2387 = vmatpush2.bf16.msra.mxu0 0
        %2388 = vmatprep.subr.bf16.mxu0 0
        %2389 = vmatpush2.bf16.msra.mxu0 0
        %2390 = vmatprep.subr.bf16.mxu0 0
        %2391 = vmatpush2.bf16.msra.mxu0 0
        %2392 = vmatprep.mubr.bf16.mxu0 0
        %2393 = vmatmul.mubr.bf16.gmra.mxu0 %v2358
        %v2394 = vpop.f32.mrf.mxu0
        %v2395 = vadd.f32 %v2332, %v2394
        %v2396 = vpop.f32.mrf.mxu0
        %v2397 = vpop.f32.mrf.mxu0
        %v2398 = vpop.f32.mrf.mxu0
        %2399 = vdwg.mxu0
        %v2400 = vadd.f32 %v2395, %v2244
        %v2401 = vld [vmem:[#allocation5 + $0x10] sm:$0x1]
        %v2402 = vld [vmem:[#allocation5 + $0x11] sm:$0x1]
        %v2403 = vsel %vm220, %v2400, 0.0
        %2404 = vadd.xlane.f32.xlu0 %v2403
        %v2405 = vpop.xlane.xlu0 %2404
        %v2406 = vmul.f32 %v2405, %v224
        %v2407 = vsub.f32 %v2400, %v2406
        %v2408 = vmul.f32 %v2407, %v2407
        %v2409 = vsel %vm220, %v2408, 0.0
        %2410 = vadd.xlane.f32.xlu0 %v2409
        %v2411 = vpop.xlane.xlu0 %2410
        %v2412 = vmul.f32 %v2411, %v224
        %v2413 = vadd.f32 %v2412, 1e-12
        %v2414 = vrsqrt.pop %v2413
        %v2415 = vmul.f32 %v2407, %v2414
        %v2416 = vlaneseq
        %v2417 = vshrl.u32 %v2416, 7
        %v2418 = vsub.s32 0, %v2417
        %v2419 = vrot.slane %v2401, %v2418
        %v2420 = vmul.f32 %v2415, %v2419
        %v2421 = vlaneseq
        %v2422 = vshrl.u32 %v2421, 7
        %v2423 = vsub.s32 0, %v2422
        %v2424 = vrot.slane %v2402, %v2423
        %v2425 = vadd.f32 %v2420, %v2424
        %v2426 = vld [vmem:[#allocation7 + $0xa0] sm:$0xf]
        %v2427 = vld [vmem:[#allocation7 + $0xa4] sm:$0xf]
        %v2428 = vld [vmem:[#allocation7 + $0xa8] sm:$0xf]
        %v2429 = vld [vmem:[#allocation7 + $0xac] sm:$0xf]
        %v2430 = vpack.c.bf16 %v2425, %v2425
        %v2431 = vld [vmem:[#allocation5 + $0x12] sm:$0x1]
        %v2432 = vlaneseq
        %v2433 = vshrl.u32 %v2432, 7
        %v2434 = vsub.s32 0, %v2433
        %v2435 = vrot.slane %v2431, %v2434
        %v2440 = vunpack.c.l.b16 %v2426
        %v2441 = vunpack.c.l.b16 %v2427
        %v2442 = vunpack.c.l.b16 %v2428
        %v2443 = vunpack.c.l.b16 %v2429
        %v2444 = vpack.c.b16 %v2441, %v2440
        %v2445 = vpack.c.b16 %v2443, %v2442
        %v2449 = vsel %vm220, %v2430, 0
        %2451 = vmatprep.subr.bf16.mxu0 0
        %2452 = vmatpush1.bf16.msra.mxu0 0
        %2453 = vmatprep.subr.bf16.mxu0 0
        %2454 = vmatpush1.bf16.msra.mxu0 0
        %2455 = vmatprep.subr.bf16.mxu0 0
        %2456 = vmatpush1.bf16.msra.mxu0 0
        %2457 = vmatprep.subr.bf16.mxu0 0
        %2458 = vmatpush1.bf16.msra.mxu0 0
        %2459 = vmatprep.subr.bf16.mxu0 0
        %2460 = vmatpush1.bf16.msra.mxu0 0
        %2461 = vmatprep.subr.bf16.mxu0 0
        %2462 = vmatpush1.bf16.msra.mxu0 0
        %2463 = vmatprep.subr.bf16.mxu0 0
        %2464 = vmatpush1.bf16.msra.mxu0 %v2445
        %2465 = vmatprep.subr.bf16.mxu0 0
        %2466 = vmatpush1.bf16.msra.mxu0 %v2444
        %2467 = vmatprep.subr.bf16.mxu0 0
        %2468 = vmatpush2.bf16.msra.mxu0 0
        %2469 = vmatprep.subr.bf16.mxu0 0
        %2470 = vmatpush2.bf16.msra.mxu0 0
        %2471 = vmatprep.subr.bf16.mxu0 0
        %2472 = vmatpush2.bf16.msra.mxu0 0
        %2473 = vmatprep.subr.bf16.mxu0 0
        %2474 = vmatpush2.bf16.msra.mxu0 0
        %2475 = vmatprep.subr.bf16.mxu0 0
        %2476 = vmatpush2.bf16.msra.mxu0 0
        %2477 = vmatprep.subr.bf16.mxu0 0
        %2478 = vmatpush2.bf16.msra.mxu0 0
        %2479 = vmatprep.subr.bf16.mxu0 0
        %2480 = vmatpush2.bf16.msra.mxu0 0
        %2481 = vmatprep.subr.bf16.mxu0 0
        %2482 = vmatpush2.bf16.msra.mxu0 0
        %2483 = vmatprep.mubr.bf16.mxu0 0
        %2484 = vmatmul.mubr.bf16.gmra.mxu0 %v2449
        %v2485 = vpop.f32.mrf.mxu0
        %v2486 = vadd.f32 %v2435, %v2485
        %v2487 = vpop.f32.mrf.mxu0
        %v2488 = vpop.f32.mrf.mxu0
        %v2489 = vpop.f32.mrf.mxu0
        %2490 = vdwg.mxu0
        %2491 = vmax.xlane.f32.xlu0 %v2486
        %v2492 = vpop.xlane.xlu0 %2491
        %v2493 = vsub.f32 %v2486, %v2492
        %v2494 = vmul.f32 %v2493, 1.442695
        %v2495 = vpow.pop %v2494
        %2496 = vadd.xlane.f32.xlu0 %v2495
        %v2497 = vpop.xlane.xlu0 %2496
        %v2498 = vrcp.pop %v2497
        %v2499 = vmul.f32 %v2495, %v2498
        %2500 = vst [vmem:[%s214] sm:$0xff] %v2499
        %s2501 = sand.u32 %s97, 1
        %s2502 = scalar_lea.sflag [#allocation4], %s2501
        %s2503 = sand.u32 %s97, 1
        %s2504 = smul.addr %s2503, 8
        %s2505 = scalar_lea.vmem [#allocation8], %s2504
        // Predicated region
        $region45: #{tpu_custom_call.1} parent=31 // pred_check
          %p2506 = pneg %p107
        $region46: #{tpu_custom_call.1} parent=31 // pred_check_branch
          %2508 = sbr.rel (%p2506) target = $region48
        $region47: #{tpu_custom_call.1} parent=31 // pred_region
          %s2510 = ssub.s32 128, 128
          %2511 = vsyncadd %s2502, %s2510
          %s2512 = smul.addr %s21, 128
          %s2513 = scalar_lea.hbm %s3, %s2512
          %s2515 = sshll.u32 %s2505, 4
          %s2516 = int_to_ptr.vmem [resolvable:$true] %s2515
          %2518 = dma.vmem_to_hbm [thread:$0]  %s2516, 128, %s2513, %s2502
        $region48: #{tpu_custom_call.1} parent=31 // pred_fallthru
          _
      $region32: #{tpu_custom_call.1} parent=5 // pred_fallthru
        _
      %p2519 = scmp.le.s32.totalorder 2, %s16
      // Predicated region
      $region49: #{tpu_custom_call.1} parent=5 // pred_check
        %p2520 = pneg %p2519
      $region50: #{tpu_custom_call.1} parent=5 // pred_check_branch
        %2522 = sbr.rel (%p2520) target = $region52
      $region51: #{tpu_custom_call.1} parent=5 // pred_region
        %s2523 = ssub.s32 %s16, 2
        // Predicated region
        $region53: #{tpu_custom_call.1} parent=51 // pred_check
          %p2524 = pneg %p113
        $region54: #{tpu_custom_call.1} parent=51 // pred_check_branch
          %2526 = sbr.rel (%p2524) target = $region56
        $region55: #{tpu_custom_call.1} parent=51 // pred_region
          %s2527 = sand.u32 %s98, 1
          %s2528 = scalar_lea.sflag [#allocation4], %s2527
          %s2529 = sand.u32 %s98, 1
          %s2530 = smul.addr %s2529, 8
          %s2531 = scalar_lea.vmem [#allocation8], %s2530
          %2532 = dma.done %s2528, 128
        $region56: #{tpu_custom_call.1} parent=51 // pred_fallthru
          _
      $region52: #{tpu_custom_call.1} parent=5 // pred_fallthru
        _
    $region6: #{tpu_custom_call.1} parent=1 // loop_footer
      %s20 = sadd.s32 1, %s16
    $region7: #{tpu_custom_call.1} parent=1 // loop_footer_branch
      %15 = sbr.rel target = $region3
    $region8: #{tpu_custom_call.1} parent=1 // loop_exit
      _
    %2533 = vsyncpa [#allocation3], 1
    %s2534 = scalar_lea.sflag [#allocation3], 1
    %2535 = vsyncpa %s2534, 1
    %2536 = vsyncpa [#allocation6], 1
    %2537 = vsyncpa [#allocation4], 1
    %s2538 = scalar_lea.sflag [#allocation4], 1
    %2539 = vsyncpa %s2538, 1

</llo_original>
